<compile_context>
chip_gen: v7x
topology: tpu7x:2x2x1
jax: 0.10.0
libtpu: 0.0.40
codegen_flags: <defaults>
</compile_context>

<pallas_src>
import functools

import numpy as np
import jax
import jax.numpy as jnp
from jax import lax
from jax.experimental import pallas as pl
from jax.experimental.pallas import tpu as pltpu

_EPS = 1e-5
_LANE = 128


# ------------------------------ kernel ------------------------------

def dpcnn_kernel(x_ref, rw_ref, rb_ref,
                 c1s_ref, c1t_ref, c1w_ref, c1b_ref,
                 c2s_ref, c2t_ref, c2w_ref, c2b_ref,
                 r1s_ref, r1t_ref, r1w_ref, r1b_ref,
                 r2s_ref, r2t_ref, r2w_ref, r2b_ref,
                 fw_ref, fb_ref, fs_ref, ft_ref,
                 o_ref, buf_ref, *, cp, n_res, final_l):
    zrow = jnp.zeros((1, cp), jnp.float32)

    def conv3(x, w, b):
        # zero-padded k=3 conv as one fused-tap matmul: [x(l-1)|x(l)|x(l+1)] @ (3*cp, cp)
        n = x.shape[0]
        buf_ref[pl.ds(7, 1), :] = zrow            # left zero pad row
        buf_ref[pl.ds(8, n), :] = x               # x at aligned offset 8
        buf_ref[pl.ds(8 + n, 1), :] = zrow        # right zero pad row
        xl = buf_ref[pl.ds(7, n), :]              # row l -> x[l-1]
        xr = buf_ref[pl.ds(9, n), :]              # row l -> x[l+1]
        xc = jnp.concatenate([xl, x, xr], axis=1)  # (n, 3*cp), lane-aligned concat
        return jnp.dot(xc, w, preferred_element_type=jnp.float32) + b

    def maxpool(x):
        # ConstantPad1d((0,1), 0) + MaxPool1d(k=3, stride=2)
        n = x.shape[0]
        h = n // 2
        buf_ref[pl.ds(0, n), :] = x
        buf_ref[pl.ds(n, 1), :] = zrow            # right zero pad
        a = buf_ref[pl.ds(0, h, stride=2), :]     # x[2i]
        b = buf_ref[pl.ds(1, h, stride=2), :]     # x[2i+1]
        c = buf_ref[pl.ds(2, h, stride=2), :]     # x[2i+2] (zero past the end)
        return jnp.maximum(jnp.maximum(a, b), c)

    x = x_ref[0]                                  # (L, cp)

    # region embedding: Conv1d (eval BN folded into weights) -> ReLU
    x = jnp.maximum(conv3(x, rw_ref[...], rb_ref[...]), 0.0)

    # conv_block: BN -> ReLU -> Conv -> BN -> ReLU -> Conv
    z = jnp.maximum(x * c1s_ref[...] + c1t_ref[...], 0.0)
    h = conv3(z, c1w_ref[...], c1b_ref[...])
    z = jnp.maximum(h * c2s_ref[...] + c2t_ref[...], 0.0)
    x = conv3(z, c2w_ref[...], c2b_ref[...])

    # resnet tower (fully fused; activations halve each block and stay in VMEM)
    for i in range(n_res):
        sc = maxpool(x)
        z = jnp.maximum(sc * r1s_ref[i] + r1t_ref[i], 0.0)
        h = conv3(z, r1w_ref[i], r1b_ref[i])
        z = jnp.maximum(h * r2s_ref[i] + r2t_ref[i], 0.0)
        h = conv3(z, r2w_ref[i], r2b_ref[i])
        x = h + sc

    # fc1 (Linear over the (final_l, C) flatten) -> BN(scale/shift) -> ReLU
    y = fb_ref[...]
    for l in range(final_l):
        y = y + jnp.dot(x[l:l + 1, :], fw_ref[l], preferred_element_type=jnp.float32)
    o_ref[0] = jnp.maximum(y * fs_ref[...] + ft_ref[...], 0.0)


# --------------------------- param packing ---------------------------

def _pad_vec(v, n):
    out = jnp.zeros((1, n), jnp.float32)
    return out.at[:, :v.shape[0]].set(v.astype(jnp.float32)[None, :])


def _bn_scale_shift(p, n):
    scale = p['gamma'] / jnp.sqrt(p['var'] + _EPS)
    shift = p['beta'] - p['mean'] * scale
    return _pad_vec(scale, n), _pad_vec(shift, n)


def _fused_conv(p, cp):
    # torch Conv1d weight (Cout, Cin, 3) -> fused-tap, lane-padded (3*cp, cp)
    w = p['w'].astype(jnp.float32)
    cout, cin, _ = w.shape
    taps = [jnp.zeros((cp, cp), jnp.float32).at[:cin, :cout].set(w[:, :, k].T)
            for k in range(3)]
    return jnp.concatenate(taps, axis=0), _pad_vec(p['b'], cp)


# --------------------------- call wrapper ----------------------------

def dpcnn_forward(tokens, params):
    x = jnp.take(params['embedding'], tokens, axis=0)        # glue: embedding gather (B,L,C)
    B, L, C = x.shape
    n_res = len(params['resnet'])
    assert n_res >= 1 and L % (1 << n_res) == 0
    final_l = L >> n_res
    cp = max(_LANE, pl.cdiv(C, _LANE) * _LANE)                # lane-pad channels to 128
    xp = jnp.pad(x.astype(jnp.float32), ((0, 0), (0, 0), (0, cp - C)))

    # region: fold eval-mode BN into the conv weights/bias exactly
    rw, rb = _fused_conv(params['region']['conv'], cp)
    rs, rt = _bn_scale_shift(params['region']['bn'], cp)
    rw = rw * rs
    rb = rb * rs + rt

    cb = params['conv_block']
    c1s, c1t = _bn_scale_shift(cb['bn1'], cp)
    c1w, c1b = _fused_conv(cb['conv1'], cp)
    c2s, c2t = _bn_scale_shift(cb['bn2'], cp)
    c2w, c2b = _fused_conv(cb['conv2'], cp)

    per = [[] for _ in range(8)]
    for bp in params['resnet']:
        vals = (_bn_scale_shift(bp['bn1'], cp) + _fused_conv(bp['conv1'], cp)
                + _bn_scale_shift(bp['bn2'], cp) + _fused_conv(bp['conv2'], cp))
        for lst, v in zip(per, vals):
            lst.append(v)
    r1s, r1t, r1w, r1b, r2s, r2t, r2w, r2b = [jnp.stack(lst) for lst in per]

    fp = params['fc1']
    H = fp['b'].shape[0]
    hp = cp                                                   # hidden == channel size in DPCNN
    Wfc = fp['w'].astype(jnp.float32)                         # (H, C*final_l), NLC flatten order
    fw = jnp.stack([jnp.zeros((cp, hp), jnp.float32)
                    .at[:C, :H].set(Wfc[:, l * C:(l + 1) * C].T)
                    for l in range(final_l)])
    fb = _pad_vec(fp['b'], hp)
    fs, ft = _bn_scale_shift(fp['bn'], hp)

    args = (xp, rw, rb, c1s, c1t, c1w, c1b, c2s, c2t, c2w, c2b,
            r1s, r1t, r1w, r1b, r2s, r2t, r2w, r2b, fw, fb, fs, ft)

    def full_spec(a):
        nd = a.ndim
        return pl.BlockSpec(a.shape, lambda b, _nd=nd: (0,) * _nd)

    in_specs = ([pl.BlockSpec((1, L, cp), lambda b: (b, 0, 0))]
                + [full_spec(a) for a in args[1:]])

    out = pl.pallas_call(
        functools.partial(dpcnn_kernel, cp=cp, n_res=n_res, final_l=final_l),
        grid=(B,),
        out_shape=jax.ShapeDtypeStruct((B, 1, hp), jnp.float32),
        in_specs=in_specs,
        out_specs=pl.BlockSpec((1, 1, hp), lambda b: (b, 0, 0)),
        scratch_shapes=[pltpu.VMEM((L + 16, cp), jnp.float32)],
        compiler_params=pltpu.CompilerParams(
            dimension_semantics=("parallel",),
            vmem_limit_bytes=32 * 1024 * 1024),
    )(*args)
    return out.reshape(B, hp)[:, :H]


# ------------------------ deterministic params ------------------------

def init_params(key, vocab, hidden, seq_len):
    keys = iter(jax.random.split(key, 128))

    def nrm(shape, scale=0.1):
        return scale * jax.random.normal(next(keys), shape, jnp.float32)

    def bn():
        return dict(gamma=1.0 + 0.1 * jax.random.normal(next(keys), (hidden,), jnp.float32),
                    beta=0.1 * jax.random.normal(next(keys), (hidden,), jnp.float32),
                    mean=0.1 * jax.random.normal(next(keys), (hidden,), jnp.float32),
                    var=0.5 + jax.random.uniform(next(keys), (hidden,), jnp.float32))

    def conv():
        return dict(w=nrm((hidden, hidden, 3)), b=nrm((hidden,)))

    def block():
        return dict(bn1=bn(), conv1=conv(), bn2=bn(), conv2=conv())

    params = dict(
        embedding=nrm((vocab, hidden), 0.5),
        region=dict(conv=conv(), bn=bn()),
        conv_block=block(),
    )
    resnet = []
    num_seq = seq_len
    while num_seq > 2:           # mirrors DPCNN.__init__
        resnet.append(block())
        num_seq //= 2
    params['resnet'] = resnet
    params['fc1'] = dict(w=nrm((hidden, hidden * num_seq)), b=nrm((hidden,)), bn=bn())
    return params


# ------------------------- pure-JAX reference -------------------------

def ref_conv1d(x, w, b):
    B, L, _ = x.shape
    xp = jnp.pad(x, ((0, 0), (1, 1), (0, 0)))
    acc = jnp.zeros((B, L, w.shape[0]), jnp.float32)
    for k in range(3):
        acc = acc + jnp.einsum('blc,oc->blo', xp[:, k:k + L, :], w[:, :, k],
                               precision=lax.Precision.HIGHEST)
    return acc + b


def ref_bn(x, p):
    return (x - p['mean']) / jnp.sqrt(p['var'] + _EPS) * p['gamma'] + p['beta']


def ref_maxpool(x):
    _, L, _ = x.shape
    xp = jnp.pad(x, ((0, 0), (0, 1), (0, 0)))
    t0 = xp[:, 0:L:2, :]
    t1 = xp[:, 1:L:2, :]
    t2 = xp[:, 2:L + 1:2, :]
    return jnp.maximum(jnp.maximum(t0, t1), t2)


def ref_block_conv(x, p):
    z = jax.nn.relu(ref_bn(x, p['bn1']))
    h = ref_conv1d(z, p['conv1']['w'], p['conv1']['b'])
    z = jax.nn.relu(ref_bn(h, p['bn2']))
    return ref_conv1d(z, p['conv2']['w'], p['conv2']['b'])


def ref_forward(tokens, P):
    x = jnp.take(P['embedding'], tokens, axis=0)
    r = P['region']
    x = jax.nn.relu(ref_bn(ref_conv1d(x, r['conv']['w'], r['conv']['b']), r['bn']))
    x = ref_block_conv(x, P['conv_block'])
    for bp in P['resnet']:
        s = ref_maxpool(x)
        x = ref_block_conv(s, bp) + s
    B = x.shape[0]
    x = x.reshape(B, -1)
    f = P['fc1']
    y = jnp.dot(x, f['w'].T, precision=lax.Precision.HIGHEST) + f['b']
    return jax.nn.relu(ref_bn(y, f['bn']))


# -------------------------------- main --------------------------------

if __name__ == "__main__":
    B, L, H, V = 2, 16, 32, 100     # batch, max_seq_length, hidden_size, vocab
    key = jax.random.PRNGKey(0)
    pkey, tkey = jax.random.split(key)
    params = init_params(pkey, V, H, L)
    tokens = jax.random.randint(tkey, (B, L), 0, V, dtype=jnp.int32)

    fwd = jax.jit(dpcnn_forward)
    out = fwd(tokens, params)
    out = jax.block_until_ready(out)

    ref = ref_forward(tokens, params)
    np.testing.assert_allclose(np.asarray(out), np.asarray(ref), rtol=2e-2, atol=2e-2)
    print("KERNEL_OK")
</pallas_src>

<mosaic_0001>
module attributes {stable_mosaic.version = 11 : i64} {
  func.func @dpcnn_kernel(%arg0: i32, %arg1: memref<1x16x128xf32, #tpu.memory_space<vmem>>, %arg2: memref<384x128xf32, #tpu.memory_space<vmem>>, %arg3: memref<1x128xf32, #tpu.memory_space<vmem>>, %arg4: memref<1x128xf32, #tpu.memory_space<vmem>>, %arg5: memref<1x128xf32, #tpu.memory_space<vmem>>, %arg6: memref<384x128xf32, #tpu.memory_space<vmem>>, %arg7: memref<1x128xf32, #tpu.memory_space<vmem>>, %arg8: memref<1x128xf32, #tpu.memory_space<vmem>>, %arg9: memref<1x128xf32, #tpu.memory_space<vmem>>, %arg10: memref<384x128xf32, #tpu.memory_space<vmem>>, %arg11: memref<1x128xf32, #tpu.memory_space<vmem>>, %arg12: memref<3x1x128xf32, #tpu.memory_space<vmem>>, %arg13: memref<3x1x128xf32, #tpu.memory_space<vmem>>, %arg14: memref<3x384x128xf32, #tpu.memory_space<vmem>>, %arg15: memref<3x1x128xf32, #tpu.memory_space<vmem>>, %arg16: memref<3x1x128xf32, #tpu.memory_space<vmem>>, %arg17: memref<3x1x128xf32, #tpu.memory_space<vmem>>, %arg18: memref<3x384x128xf32, #tpu.memory_space<vmem>>, %arg19: memref<3x1x128xf32, #tpu.memory_space<vmem>>, %arg20: memref<2x128x128xf32, #tpu.memory_space<vmem>>, %arg21: memref<1x128xf32, #tpu.memory_space<vmem>>, %arg22: memref<1x128xf32, #tpu.memory_space<vmem>>, %arg23: memref<1x128xf32, #tpu.memory_space<vmem>>, %arg24: memref<1x1x128xf32, #tpu.memory_space<vmem>>, %arg25: memref<32x128xf32, #tpu.memory_space<vmem>>) attributes {dimension_semantics = [#tpu.dimension_semantics<parallel>], iteration_bounds = array<i64: 2>, scalar_prefetch = 0 : i64, scratch_operands = 1 : i64, tpu.core_type = #tpu.core_type<tc>, window_params = [{transform_indices = @transform_0, window_bounds = array<i64: 1, 16, 128>}, {pipeline_mode = #tpu.pipeline_mode<synchronous>, transform_indices = @transform_1, window_bounds = array<i64: 384, 128>}, {pipeline_mode = #tpu.pipeline_mode<synchronous>, transform_indices = @transform_2, window_bounds = array<i64: 1, 128>}, {pipeline_mode = #tpu.pipeline_mode<synchronous>, transform_indices = @transform_3, window_bounds = array<i64: 1, 128>}, {pipeline_mode = #tpu.pipeline_mode<synchronous>, transform_indices = @transform_4, window_bounds = array<i64: 1, 128>}, {pipeline_mode = #tpu.pipeline_mode<synchronous>, transform_indices = @transform_5, window_bounds = array<i64: 384, 128>}, {pipeline_mode = #tpu.pipeline_mode<synchronous>, transform_indices = @transform_6, window_bounds = array<i64: 1, 128>}, {pipeline_mode = #tpu.pipeline_mode<synchronous>, transform_indices = @transform_7, window_bounds = array<i64: 1, 128>}, {pipeline_mode = #tpu.pipeline_mode<synchronous>, transform_indices = @transform_8, window_bounds = array<i64: 1, 128>}, {pipeline_mode = #tpu.pipeline_mode<synchronous>, transform_indices = @transform_9, window_bounds = array<i64: 384, 128>}, {pipeline_mode = #tpu.pipeline_mode<synchronous>, transform_indices = @transform_10, window_bounds = array<i64: 1, 128>}, {pipeline_mode = #tpu.pipeline_mode<synchronous>, transform_indices = @transform_11, window_bounds = array<i64: 3, 1, 128>}, {pipeline_mode = #tpu.pipeline_mode<synchronous>, transform_indices = @transform_12, window_bounds = array<i64: 3, 1, 128>}, {pipeline_mode = #tpu.pipeline_mode<synchronous>, transform_indices = @transform_13, window_bounds = array<i64: 3, 384, 128>}, {pipeline_mode = #tpu.pipeline_mode<synchronous>, transform_indices = @transform_14, window_bounds = array<i64: 3, 1, 128>}, {pipeline_mode = #tpu.pipeline_mode<synchronous>, transform_indices = @transform_15, window_bounds = array<i64: 3, 1, 128>}, {pipeline_mode = #tpu.pipeline_mode<synchronous>, transform_indices = @transform_16, window_bounds = array<i64: 3, 1, 128>}, {pipeline_mode = #tpu.pipeline_mode<synchronous>, transform_indices = @transform_17, window_bounds = array<i64: 3, 384, 128>}, {pipeline_mode = #tpu.pipeline_mode<synchronous>, transform_indices = @transform_18, window_bounds = array<i64: 3, 1, 128>}, {pipeline_mode = #tpu.pipeline_mode<synchronous>, transform_indices = @transform_19, window_bounds = array<i64: 2, 128, 128>}, {pipeline_mode = #tpu.pipeline_mode<synchronous>, transform_indices = @transform_20, window_bounds = array<i64: 1, 128>}, {pipeline_mode = #tpu.pipeline_mode<synchronous>, transform_indices = @transform_21, window_bounds = array<i64: 1, 128>}, {pipeline_mode = #tpu.pipeline_mode<synchronous>, transform_indices = @transform_22, window_bounds = array<i64: 1, 128>}, {transform_indices = @transform_23, window_bounds = array<i64: 1, 1, 128>}]} {
    %cst = arith.constant 0.000000e+00 : f32
    %0 = vector.broadcast %cst : f32 to vector<1x128xf32>
    %c0 = arith.constant 0 : index
    %c0_0 = arith.constant 0 : index
    %c0_1 = arith.constant 0 : index
    %1 = vector.load %arg1[%c0, %c0_0, %c0_1] : memref<1x16x128xf32, #tpu.memory_space<vmem>>, vector<1x16x128xf32>
    %2 = vector.shape_cast %1 : vector<1x16x128xf32> to vector<16x128xf32>
    %c0_2 = arith.constant 0 : index
    %c0_3 = arith.constant 0 : index
    %3 = vector.load %arg2[%c0_2, %c0_3] : memref<384x128xf32, #tpu.memory_space<vmem>>, vector<384x128xf32>
    %c0_4 = arith.constant 0 : index
    %c0_5 = arith.constant 0 : index
    %4 = vector.load %arg3[%c0_4, %c0_5] : memref<1x128xf32, #tpu.memory_space<vmem>>, vector<1x128xf32>
    %c7 = arith.constant 7 : index
    %c0_6 = arith.constant 0 : index
    %5 = vector.load %arg25[%c7, %c0_6] : memref<32x128xf32, #tpu.memory_space<vmem>>, vector<1x128xf32>
    tpu.vector_store %arg25[%c7, %c0_6], %0 {strides = array<i32>} : memref<32x128xf32, #tpu.memory_space<vmem>>, vector<1x128xf32>,
    %c8 = arith.constant 8 : index
    %c0_7 = arith.constant 0 : index
    %6 = vector.load %arg25[%c8, %c0_7] : memref<32x128xf32, #tpu.memory_space<vmem>>, vector<16x128xf32>
    tpu.vector_store %arg25[%c8, %c0_7], %2 {strides = array<i32>} : memref<32x128xf32, #tpu.memory_space<vmem>>, vector<16x128xf32>,
    %c24 = arith.constant 24 : index
    %c0_8 = arith.constant 0 : index
    %7 = vector.load %arg25[%c24, %c0_8] : memref<32x128xf32, #tpu.memory_space<vmem>>, vector<1x128xf32>
    tpu.vector_store %arg25[%c24, %c0_8], %0 {strides = array<i32>} : memref<32x128xf32, #tpu.memory_space<vmem>>, vector<1x128xf32>,
    %c7_9 = arith.constant 7 : index
    %c0_10 = arith.constant 0 : index
    %8 = vector.load %arg25[%c7_9, %c0_10] : memref<32x128xf32, #tpu.memory_space<vmem>>, vector<16x128xf32>
    %c9 = arith.constant 9 : index
    %c0_11 = arith.constant 0 : index
    %9 = vector.load %arg25[%c9, %c0_11] : memref<32x128xf32, #tpu.memory_space<vmem>>, vector<16x128xf32>
    %10 = tpu.concatenate %8, %2, %9 in 1 : vector<16x128xf32>, vector<16x128xf32>, vector<16x128xf32> -> vector<16x384xf32>
    %cst_12 = arith.constant dense<0.000000e+00> : vector<16x128xf32>
    %11 = tpu.matmul %10, %3, %cst_12 {dimension_numbers = #tpu.dot_dimension_numbers<[1], [0], [0], [1], [0, 0, 1, 1], [], []>} : vector<16x384xf32>, vector<384x128xf32>, vector<16x128xf32> -> vector<16x128xf32>
    %12 = vector.broadcast %4 : vector<1x128xf32> to vector<16x128xf32>
    %13 = arith.addf %11, %12 : vector<16x128xf32>
    %cst_13 = arith.constant 0.000000e+00 : f32
    %14 = vector.broadcast %cst_13 : f32 to vector<16x128xf32>
    %15 = arith.maximumf %13, %14 : vector<16x128xf32>
    %c0_14 = arith.constant 0 : index
    %c0_15 = arith.constant 0 : index
    %16 = vector.load %arg4[%c0_14, %c0_15] : memref<1x128xf32, #tpu.memory_space<vmem>>, vector<1x128xf32>
    %17 = vector.broadcast %16 : vector<1x128xf32> to vector<16x128xf32>
    %18 = arith.mulf %15, %17 : vector<16x128xf32>
    %c0_16 = arith.constant 0 : index
    %c0_17 = arith.constant 0 : index
    %19 = vector.load %arg5[%c0_16, %c0_17] : memref<1x128xf32, #tpu.memory_space<vmem>>, vector<1x128xf32>
    %20 = vector.broadcast %19 : vector<1x128xf32> to vector<16x128xf32>
    %21 = arith.addf %18, %20 : vector<16x128xf32>
    %cst_18 = arith.constant 0.000000e+00 : f32
    %22 = vector.broadcast %cst_18 : f32 to vector<16x128xf32>
    %23 = arith.maximumf %21, %22 : vector<16x128xf32>
    %c0_19 = arith.constant 0 : index
    %c0_20 = arith.constant 0 : index
    %24 = vector.load %arg6[%c0_19, %c0_20] : memref<384x128xf32, #tpu.memory_space<vmem>>, vector<384x128xf32>
    %c0_21 = arith.constant 0 : index
    %c0_22 = arith.constant 0 : index
    %25 = vector.load %arg7[%c0_21, %c0_22] : memref<1x128xf32, #tpu.memory_space<vmem>>, vector<1x128xf32>
    %c7_23 = arith.constant 7 : index
    %c0_24 = arith.constant 0 : index
    %26 = vector.load %arg25[%c7_23, %c0_24] : memref<32x128xf32, #tpu.memory_space<vmem>>, vector<1x128xf32>
    tpu.vector_store %arg25[%c7_23, %c0_24], %0 {strides = array<i32>} : memref<32x128xf32, #tpu.memory_space<vmem>>, vector<1x128xf32>,
    %c8_25 = arith.constant 8 : index
    %c0_26 = arith.constant 0 : index
    %27 = vector.load %arg25[%c8_25, %c0_26] : memref<32x128xf32, #tpu.memory_space<vmem>>, vector<16x128xf32>
    tpu.vector_store %arg25[%c8_25, %c0_26], %23 {strides = array<i32>} : memref<32x128xf32, #tpu.memory_space<vmem>>, vector<16x128xf32>,
    %c24_27 = arith.constant 24 : index
    %c0_28 = arith.constant 0 : index
    %28 = vector.load %arg25[%c24_27, %c0_28] : memref<32x128xf32, #tpu.memory_space<vmem>>, vector<1x128xf32>
    tpu.vector_store %arg25[%c24_27, %c0_28], %0 {strides = array<i32>} : memref<32x128xf32, #tpu.memory_space<vmem>>, vector<1x128xf32>,
    %c7_29 = arith.constant 7 : index
    %c0_30 = arith.constant 0 : index
    %29 = vector.load %arg25[%c7_29, %c0_30] : memref<32x128xf32, #tpu.memory_space<vmem>>, vector<16x128xf32>
    %c9_31 = arith.constant 9 : index
    %c0_32 = arith.constant 0 : index
    %30 = vector.load %arg25[%c9_31, %c0_32] : memref<32x128xf32, #tpu.memory_space<vmem>>, vector<16x128xf32>
    %31 = tpu.concatenate %29, %23, %30 in 1 : vector<16x128xf32>, vector<16x128xf32>, vector<16x128xf32> -> vector<16x384xf32>
    %cst_33 = arith.constant dense<0.000000e+00> : vector<16x128xf32>
    %32 = tpu.matmul %31, %24, %cst_33 {dimension_numbers = #tpu.dot_dimension_numbers<[1], [0], [0], [1], [0, 0, 1, 1], [], []>} : vector<16x384xf32>, vector<384x128xf32>, vector<16x128xf32> -> vector<16x128xf32>
    %33 = vector.broadcast %25 : vector<1x128xf32> to vector<16x128xf32>
    %34 = arith.addf %32, %33 : vector<16x128xf32>
    %c0_34 = arith.constant 0 : index
    %c0_35 = arith.constant 0 : index
    %35 = vector.load %arg8[%c0_34, %c0_35] : memref<1x128xf32, #tpu.memory_space<vmem>>, vector<1x128xf32>
    %36 = vector.broadcast %35 : vector<1x128xf32> to vector<16x128xf32>
    %37 = arith.mulf %34, %36 : vector<16x128xf32>
    %c0_36 = arith.constant 0 : index
    %c0_37 = arith.constant 0 : index
    %38 = vector.load %arg9[%c0_36, %c0_37] : memref<1x128xf32, #tpu.memory_space<vmem>>, vector<1x128xf32>
    %39 = vector.broadcast %38 : vector<1x128xf32> to vector<16x128xf32>
    %40 = arith.addf %37, %39 : vector<16x128xf32>
    %cst_38 = arith.constant 0.000000e+00 : f32
    %41 = vector.broadcast %cst_38 : f32 to vector<16x128xf32>
    %42 = arith.maximumf %40, %41 : vector<16x128xf32>
    %c0_39 = arith.constant 0 : index
    %c0_40 = arith.constant 0 : index
    %43 = vector.load %arg10[%c0_39, %c0_40] : memref<384x128xf32, #tpu.memory_space<vmem>>, vector<384x128xf32>
    %c0_41 = arith.constant 0 : index
    %c0_42 = arith.constant 0 : index
    %44 = vector.load %arg11[%c0_41, %c0_42] : memref<1x128xf32, #tpu.memory_space<vmem>>, vector<1x128xf32>
    %c7_43 = arith.constant 7 : index
    %c0_44 = arith.constant 0 : index
    %45 = vector.load %arg25[%c7_43, %c0_44] : memref<32x128xf32, #tpu.memory_space<vmem>>, vector<1x128xf32>
    tpu.vector_store %arg25[%c7_43, %c0_44], %0 {strides = array<i32>} : memref<32x128xf32, #tpu.memory_space<vmem>>, vector<1x128xf32>,
    %c8_45 = arith.constant 8 : index
    %c0_46 = arith.constant 0 : index
    %46 = vector.load %arg25[%c8_45, %c0_46] : memref<32x128xf32, #tpu.memory_space<vmem>>, vector<16x128xf32>
    tpu.vector_store %arg25[%c8_45, %c0_46], %42 {strides = array<i32>} : memref<32x128xf32, #tpu.memory_space<vmem>>, vector<16x128xf32>,
    %c24_47 = arith.constant 24 : index
    %c0_48 = arith.constant 0 : index
    %47 = vector.load %arg25[%c24_47, %c0_48] : memref<32x128xf32, #tpu.memory_space<vmem>>, vector<1x128xf32>
    tpu.vector_store %arg25[%c24_47, %c0_48], %0 {strides = array<i32>} : memref<32x128xf32, #tpu.memory_space<vmem>>, vector<1x128xf32>,
    %c7_49 = arith.constant 7 : index
    %c0_50 = arith.constant 0 : index
    %48 = vector.load %arg25[%c7_49, %c0_50] : memref<32x128xf32, #tpu.memory_space<vmem>>, vector<16x128xf32>
    %c9_51 = arith.constant 9 : index
    %c0_52 = arith.constant 0 : index
    %49 = vector.load %arg25[%c9_51, %c0_52] : memref<32x128xf32, #tpu.memory_space<vmem>>, vector<16x128xf32>
    %50 = tpu.concatenate %48, %42, %49 in 1 : vector<16x128xf32>, vector<16x128xf32>, vector<16x128xf32> -> vector<16x384xf32>
    %cst_53 = arith.constant dense<0.000000e+00> : vector<16x128xf32>
    %51 = tpu.matmul %50, %43, %cst_53 {dimension_numbers = #tpu.dot_dimension_numbers<[1], [0], [0], [1], [0, 0, 1, 1], [], []>} : vector<16x384xf32>, vector<384x128xf32>, vector<16x128xf32> -> vector<16x128xf32>
    %52 = vector.broadcast %44 : vector<1x128xf32> to vector<16x128xf32>
    %53 = arith.addf %51, %52 : vector<16x128xf32>
    %c0_54 = arith.constant 0 : index
    %c0_55 = arith.constant 0 : index
    %54 = vector.load %arg25[%c0_54, %c0_55] : memref<32x128xf32, #tpu.memory_space<vmem>>, vector<16x128xf32>
    tpu.vector_store %arg25[%c0_54, %c0_55], %53 {strides = array<i32>} : memref<32x128xf32, #tpu.memory_space<vmem>>, vector<16x128xf32>,
    %c16 = arith.constant 16 : index
    %c0_56 = arith.constant 0 : index
    %55 = vector.load %arg25[%c16, %c0_56] : memref<32x128xf32, #tpu.memory_space<vmem>>, vector<1x128xf32>
    tpu.vector_store %arg25[%c16, %c0_56], %0 {strides = array<i32>} : memref<32x128xf32, #tpu.memory_space<vmem>>, vector<1x128xf32>,
    %c0_57 = arith.constant 0 : index
    %c0_58 = arith.constant 0 : index
    %56 = tpu.strided_load %arg25[%c0_57, %c0_58] {strides = array<i32: 2, 1>} : memref<32x128xf32, #tpu.memory_space<vmem>>, vector<8x128xf32>
    %c1 = arith.constant 1 : index
    %c0_59 = arith.constant 0 : index
    %57 = tpu.strided_load %arg25[%c1, %c0_59] {strides = array<i32: 2, 1>} : memref<32x128xf32, #tpu.memory_space<vmem>>, vector<8x128xf32>
    %c2 = arith.constant 2 : index
    %c0_60 = arith.constant 0 : index
    %58 = tpu.strided_load %arg25[%c2, %c0_60] {strides = array<i32: 2, 1>} : memref<32x128xf32, #tpu.memory_space<vmem>>, vector<8x128xf32>
    %59 = arith.maximumf %56, %57 : vector<8x128xf32>
    %60 = arith.maximumf %59, %58 : vector<8x128xf32>
    %c0_61 = arith.constant 0 : index
    %c0_62 = arith.constant 0 : index
    %c0_63 = arith.constant 0 : index
    %61 = vector.load %arg12[%c0_61, %c0_62, %c0_63] : memref<3x1x128xf32, #tpu.memory_space<vmem>>, vector<1x1x128xf32>
    %62 = vector.shape_cast %61 : vector<1x1x128xf32> to vector<1x128xf32>
    %63 = vector.broadcast %62 : vector<1x128xf32> to vector<8x128xf32>
    %64 = arith.mulf %60, %63 : vector<8x128xf32>
    %c0_64 = arith.constant 0 : index
    %c0_65 = arith.constant 0 : index
    %c0_66 = arith.constant 0 : index
    %65 = vector.load %arg13[%c0_64, %c0_65, %c0_66] : memref<3x1x128xf32, #tpu.memory_space<vmem>>, vector<1x1x128xf32>
    %66 = vector.shape_cast %65 : vector<1x1x128xf32> to vector<1x128xf32>
    %67 = vector.broadcast %66 : vector<1x128xf32> to vector<8x128xf32>
    %68 = arith.addf %64, %67 : vector<8x128xf32>
    %cst_67 = arith.constant 0.000000e+00 : f32
    %69 = vector.broadcast %cst_67 : f32 to vector<8x128xf32>
    %70 = arith.maximumf %68, %69 : vector<8x128xf32>
    %c0_68 = arith.constant 0 : index
    %c0_69 = arith.constant 0 : index
    %c0_70 = arith.constant 0 : index
    %71 = vector.load %arg14[%c0_68, %c0_69, %c0_70] : memref<3x384x128xf32, #tpu.memory_space<vmem>>, vector<1x384x128xf32>
    %72 = vector.shape_cast %71 : vector<1x384x128xf32> to vector<384x128xf32>
    %c0_71 = arith.constant 0 : index
    %c0_72 = arith.constant 0 : index
    %c0_73 = arith.constant 0 : index
    %73 = vector.load %arg15[%c0_71, %c0_72, %c0_73] : memref<3x1x128xf32, #tpu.memory_space<vmem>>, vector<1x1x128xf32>
    %74 = vector.shape_cast %73 : vector<1x1x128xf32> to vector<1x128xf32>
    %c7_74 = arith.constant 7 : index
    %c0_75 = arith.constant 0 : index
    %75 = vector.load %arg25[%c7_74, %c0_75] : memref<32x128xf32, #tpu.memory_space<vmem>>, vector<1x128xf32>
    tpu.vector_store %arg25[%c7_74, %c0_75], %0 {strides = array<i32>} : memref<32x128xf32, #tpu.memory_space<vmem>>, vector<1x128xf32>,
    %c8_76 = arith.constant 8 : index
    %c0_77 = arith.constant 0 : index
    %76 = vector.load %arg25[%c8_76, %c0_77] : memref<32x128xf32, #tpu.memory_space<vmem>>, vector<8x128xf32>
    tpu.vector_store %arg25[%c8_76, %c0_77], %70 {strides = array<i32>} : memref<32x128xf32, #tpu.memory_space<vmem>>, vector<8x128xf32>,
    %c16_78 = arith.constant 16 : index
    %c0_79 = arith.constant 0 : index
    %77 = vector.load %arg25[%c16_78, %c0_79] : memref<32x128xf32, #tpu.memory_space<vmem>>, vector<1x128xf32>
    tpu.vector_store %arg25[%c16_78, %c0_79], %0 {strides = array<i32>} : memref<32x128xf32, #tpu.memory_space<vmem>>, vector<1x128xf32>,
    %c7_80 = arith.constant 7 : index
    %c0_81 = arith.constant 0 : index
    %78 = vector.load %arg25[%c7_80, %c0_81] : memref<32x128xf32, #tpu.memory_space<vmem>>, vector<8x128xf32>
    %c9_82 = arith.constant 9 : index
    %c0_83 = arith.constant 0 : index
    %79 = vector.load %arg25[%c9_82, %c0_83] : memref<32x128xf32, #tpu.memory_space<vmem>>, vector<8x128xf32>
    %80 = tpu.concatenate %78, %70, %79 in 1 : vector<8x128xf32>, vector<8x128xf32>, vector<8x128xf32> -> vector<8x384xf32>
    %cst_84 = arith.constant dense<0.000000e+00> : vector<8x128xf32>
    %81 = tpu.matmul %80, %72, %cst_84 {dimension_numbers = #tpu.dot_dimension_numbers<[1], [0], [0], [1], [0, 0, 1, 1], [], []>} : vector<8x384xf32>, vector<384x128xf32>, vector<8x128xf32> -> vector<8x128xf32>
    %82 = vector.broadcast %74 : vector<1x128xf32> to vector<8x128xf32>
    %83 = arith.addf %81, %82 : vector<8x128xf32>
    %c0_85 = arith.constant 0 : index
    %c0_86 = arith.constant 0 : index
    %c0_87 = arith.constant 0 : index
    %84 = vector.load %arg16[%c0_85, %c0_86, %c0_87] : memref<3x1x128xf32, #tpu.memory_space<vmem>>, vector<1x1x128xf32>
    %85 = vector.shape_cast %84 : vector<1x1x128xf32> to vector<1x128xf32>
    %86 = vector.broadcast %85 : vector<1x128xf32> to vector<8x128xf32>
    %87 = arith.mulf %83, %86 : vector<8x128xf32>
    %c0_88 = arith.constant 0 : index
    %c0_89 = arith.constant 0 : index
    %c0_90 = arith.constant 0 : index
    %88 = vector.load %arg17[%c0_88, %c0_89, %c0_90] : memref<3x1x128xf32, #tpu.memory_space<vmem>>, vector<1x1x128xf32>
    %89 = vector.shape_cast %88 : vector<1x1x128xf32> to vector<1x128xf32>
    %90 = vector.broadcast %89 : vector<1x128xf32> to vector<8x128xf32>
    %91 = arith.addf %87, %90 : vector<8x128xf32>
    %cst_91 = arith.constant 0.000000e+00 : f32
    %92 = vector.broadcast %cst_91 : f32 to vector<8x128xf32>
    %93 = arith.maximumf %91, %92 : vector<8x128xf32>
    %c0_92 = arith.constant 0 : index
    %c0_93 = arith.constant 0 : index
    %c0_94 = arith.constant 0 : index
    %94 = vector.load %arg18[%c0_92, %c0_93, %c0_94] : memref<3x384x128xf32, #tpu.memory_space<vmem>>, vector<1x384x128xf32>
    %95 = vector.shape_cast %94 : vector<1x384x128xf32> to vector<384x128xf32>
    %c0_95 = arith.constant 0 : index
    %c0_96 = arith.constant 0 : index
    %c0_97 = arith.constant 0 : index
    %96 = vector.load %arg19[%c0_95, %c0_96, %c0_97] : memref<3x1x128xf32, #tpu.memory_space<vmem>>, vector<1x1x128xf32>
    %97 = vector.shape_cast %96 : vector<1x1x128xf32> to vector<1x128xf32>
    %c7_98 = arith.constant 7 : index
    %c0_99 = arith.constant 0 : index
    %98 = vector.load %arg25[%c7_98, %c0_99] : memref<32x128xf32, #tpu.memory_space<vmem>>, vector<1x128xf32>
    tpu.vector_store %arg25[%c7_98, %c0_99], %0 {strides = array<i32>} : memref<32x128xf32, #tpu.memory_space<vmem>>, vector<1x128xf32>,
    %c8_100 = arith.constant 8 : index
    %c0_101 = arith.constant 0 : index
    %99 = vector.load %arg25[%c8_100, %c0_101] : memref<32x128xf32, #tpu.memory_space<vmem>>, vector<8x128xf32>
    tpu.vector_store %arg25[%c8_100, %c0_101], %93 {strides = array<i32>} : memref<32x128xf32, #tpu.memory_space<vmem>>, vector<8x128xf32>,
    %c16_102 = arith.constant 16 : index
    %c0_103 = arith.constant 0 : index
    %100 = vector.load %arg25[%c16_102, %c0_103] : memref<32x128xf32, #tpu.memory_space<vmem>>, vector<1x128xf32>
    tpu.vector_store %arg25[%c16_102, %c0_103], %0 {strides = array<i32>} : memref<32x128xf32, #tpu.memory_space<vmem>>, vector<1x128xf32>,
    %c7_104 = arith.constant 7 : index
    %c0_105 = arith.constant 0 : index
    %101 = vector.load %arg25[%c7_104, %c0_105] : memref<32x128xf32, #tpu.memory_space<vmem>>, vector<8x128xf32>
    %c9_106 = arith.constant 9 : index
    %c0_107 = arith.constant 0 : index
    %102 = vector.load %arg25[%c9_106, %c0_107] : memref<32x128xf32, #tpu.memory_space<vmem>>, vector<8x128xf32>
    %103 = tpu.concatenate %101, %93, %102 in 1 : vector<8x128xf32>, vector<8x128xf32>, vector<8x128xf32> -> vector<8x384xf32>
    %cst_108 = arith.constant dense<0.000000e+00> : vector<8x128xf32>
    %104 = tpu.matmul %103, %95, %cst_108 {dimension_numbers = #tpu.dot_dimension_numbers<[1], [0], [0], [1], [0, 0, 1, 1], [], []>} : vector<8x384xf32>, vector<384x128xf32>, vector<8x128xf32> -> vector<8x128xf32>
    %105 = vector.broadcast %97 : vector<1x128xf32> to vector<8x128xf32>
    %106 = arith.addf %104, %105 : vector<8x128xf32>
    %107 = arith.addf %106, %60 : vector<8x128xf32>
    %c0_109 = arith.constant 0 : index
    %c0_110 = arith.constant 0 : index
    %108 = vector.load %arg25[%c0_109, %c0_110] : memref<32x128xf32, #tpu.memory_space<vmem>>, vector<8x128xf32>
    tpu.vector_store %arg25[%c0_109, %c0_110], %107 {strides = array<i32>} : memref<32x128xf32, #tpu.memory_space<vmem>>, vector<8x128xf32>,
    %c8_111 = arith.constant 8 : index
    %c0_112 = arith.constant 0 : index
    %109 = vector.load %arg25[%c8_111, %c0_112] : memref<32x128xf32, #tpu.memory_space<vmem>>, vector<1x128xf32>
    tpu.vector_store %arg25[%c8_111, %c0_112], %0 {strides = array<i32>} : memref<32x128xf32, #tpu.memory_space<vmem>>, vector<1x128xf32>,
    %c0_113 = arith.constant 0 : index
    %c0_114 = arith.constant 0 : index
    %110 = tpu.strided_load %arg25[%c0_113, %c0_114] {strides = array<i32: 2, 1>} : memref<32x128xf32, #tpu.memory_space<vmem>>, vector<4x128xf32>
    %c1_115 = arith.constant 1 : index
    %c0_116 = arith.constant 0 : index
    %111 = tpu.strided_load %arg25[%c1_115, %c0_116] {strides = array<i32: 2, 1>} : memref<32x128xf32, #tpu.memory_space<vmem>>, vector<4x128xf32>
    %c2_117 = arith.constant 2 : index
    %c0_118 = arith.constant 0 : index
    %112 = tpu.strided_load %arg25[%c2_117, %c0_118] {strides = array<i32: 2, 1>} : memref<32x128xf32, #tpu.memory_space<vmem>>, vector<4x128xf32>
    %113 = arith.maximumf %110, %111 : vector<4x128xf32>
    %114 = arith.maximumf %113, %112 : vector<4x128xf32>
    %c1_119 = arith.constant 1 : index
    %c0_120 = arith.constant 0 : index
    %c0_121 = arith.constant 0 : index
    %115 = vector.load %arg12[%c1_119, %c0_120, %c0_121] : memref<3x1x128xf32, #tpu.memory_space<vmem>>, vector<1x1x128xf32>
    %116 = vector.shape_cast %115 : vector<1x1x128xf32> to vector<1x128xf32>
    %117 = vector.broadcast %116 : vector<1x128xf32> to vector<4x128xf32>
    %118 = arith.mulf %114, %117 : vector<4x128xf32>
    %c1_122 = arith.constant 1 : index
    %c0_123 = arith.constant 0 : index
    %c0_124 = arith.constant 0 : index
    %119 = vector.load %arg13[%c1_122, %c0_123, %c0_124] : memref<3x1x128xf32, #tpu.memory_space<vmem>>, vector<1x1x128xf32>
    %120 = vector.shape_cast %119 : vector<1x1x128xf32> to vector<1x128xf32>
    %121 = vector.broadcast %120 : vector<1x128xf32> to vector<4x128xf32>
    %122 = arith.addf %118, %121 : vector<4x128xf32>
    %cst_125 = arith.constant 0.000000e+00 : f32
    %123 = vector.broadcast %cst_125 : f32 to vector<4x128xf32>
    %124 = arith.maximumf %122, %123 : vector<4x128xf32>
    %c1_126 = arith.constant 1 : index
    %c0_127 = arith.constant 0 : index
    %c0_128 = arith.constant 0 : index
    %125 = vector.load %arg14[%c1_126, %c0_127, %c0_128] : memref<3x384x128xf32, #tpu.memory_space<vmem>>, vector<1x384x128xf32>
    %126 = vector.shape_cast %125 : vector<1x384x128xf32> to vector<384x128xf32>
    %c1_129 = arith.constant 1 : index
    %c0_130 = arith.constant 0 : index
    %c0_131 = arith.constant 0 : index
    %127 = vector.load %arg15[%c1_129, %c0_130, %c0_131] : memref<3x1x128xf32, #tpu.memory_space<vmem>>, vector<1x1x128xf32>
    %128 = vector.shape_cast %127 : vector<1x1x128xf32> to vector<1x128xf32>
    %c7_132 = arith.constant 7 : index
    %c0_133 = arith.constant 0 : index
    %129 = vector.load %arg25[%c7_132, %c0_133] : memref<32x128xf32, #tpu.memory_space<vmem>>, vector<1x128xf32>
    tpu.vector_store %arg25[%c7_132, %c0_133], %0 {strides = array<i32>} : memref<32x128xf32, #tpu.memory_space<vmem>>, vector<1x128xf32>,
    %c8_134 = arith.constant 8 : index
    %c0_135 = arith.constant 0 : index
    %130 = vector.load %arg25[%c8_134, %c0_135] : memref<32x128xf32, #tpu.memory_space<vmem>>, vector<4x128xf32>
    tpu.vector_store %arg25[%c8_134, %c0_135], %124 {strides = array<i32>} : memref<32x128xf32, #tpu.memory_space<vmem>>, vector<4x128xf32>,
    %c12 = arith.constant 12 : index
    %c0_136 = arith.constant 0 : index
    %131 = vector.load %arg25[%c12, %c0_136] : memref<32x128xf32, #tpu.memory_space<vmem>>, vector<1x128xf32>
    tpu.vector_store %arg25[%c12, %c0_136], %0 {strides = array<i32>} : memref<32x128xf32, #tpu.memory_space<vmem>>, vector<1x128xf32>,
    %c7_137 = arith.constant 7 : index
    %c0_138 = arith.constant 0 : index
    %132 = vector.load %arg25[%c7_137, %c0_138] : memref<32x128xf32, #tpu.memory_space<vmem>>, vector<4x128xf32>
    %c9_139 = arith.constant 9 : index
    %c0_140 = arith.constant 0 : index
    %133 = vector.load %arg25[%c9_139, %c0_140] : memref<32x128xf32, #tpu.memory_space<vmem>>, vector<4x128xf32>
    %134 = tpu.concatenate %132, %124, %133 in 1 : vector<4x128xf32>, vector<4x128xf32>, vector<4x128xf32> -> vector<4x384xf32>
    %cst_141 = arith.constant dense<0.000000e+00> : vector<4x128xf32>
    %135 = tpu.matmul %134, %126, %cst_141 {dimension_numbers = #tpu.dot_dimension_numbers<[1], [0], [0], [1], [0, 0, 1, 1], [], []>} : vector<4x384xf32>, vector<384x128xf32>, vector<4x128xf32> -> vector<4x128xf32>
    %136 = vector.broadcast %128 : vector<1x128xf32> to vector<4x128xf32>
    %137 = arith.addf %135, %136 : vector<4x128xf32>
    %c1_142 = arith.constant 1 : index
    %c0_143 = arith.constant 0 : index
    %c0_144 = arith.constant 0 : index
    %138 = vector.load %arg16[%c1_142, %c0_143, %c0_144] : memref<3x1x128xf32, #tpu.memory_space<vmem>>, vector<1x1x128xf32>
    %139 = vector.shape_cast %138 : vector<1x1x128xf32> to vector<1x128xf32>
    %140 = vector.broadcast %139 : vector<1x128xf32> to vector<4x128xf32>
    %141 = arith.mulf %137, %140 : vector<4x128xf32>
    %c1_145 = arith.constant 1 : index
    %c0_146 = arith.constant 0 : index
    %c0_147 = arith.constant 0 : index
    %142 = vector.load %arg17[%c1_145, %c0_146, %c0_147] : memref<3x1x128xf32, #tpu.memory_space<vmem>>, vector<1x1x128xf32>
    %143 = vector.shape_cast %142 : vector<1x1x128xf32> to vector<1x128xf32>
    %144 = vector.broadcast %143 : vector<1x128xf32> to vector<4x128xf32>
    %145 = arith.addf %141, %144 : vector<4x128xf32>
    %cst_148 = arith.constant 0.000000e+00 : f32
    %146 = vector.broadcast %cst_148 : f32 to vector<4x128xf32>
    %147 = arith.maximumf %145, %146 : vector<4x128xf32>
    %c1_149 = arith.constant 1 : index
    %c0_150 = arith.constant 0 : index
    %c0_151 = arith.constant 0 : index
    %148 = vector.load %arg18[%c1_149, %c0_150, %c0_151] : memref<3x384x128xf32, #tpu.memory_space<vmem>>, vector<1x384x128xf32>
    %149 = vector.shape_cast %148 : vector<1x384x128xf32> to vector<384x128xf32>
    %c1_152 = arith.constant 1 : index
    %c0_153 = arith.constant 0 : index
    %c0_154 = arith.constant 0 : index
    %150 = vector.load %arg19[%c1_152, %c0_153, %c0_154] : memref<3x1x128xf32, #tpu.memory_space<vmem>>, vector<1x1x128xf32>
    %151 = vector.shape_cast %150 : vector<1x1x128xf32> to vector<1x128xf32>
    %c7_155 = arith.constant 7 : index
    %c0_156 = arith.constant 0 : index
    %152 = vector.load %arg25[%c7_155, %c0_156] : memref<32x128xf32, #tpu.memory_space<vmem>>, vector<1x128xf32>
    tpu.vector_store %arg25[%c7_155, %c0_156], %0 {strides = array<i32>} : memref<32x128xf32, #tpu.memory_space<vmem>>, vector<1x128xf32>,
    %c8_157 = arith.constant 8 : index
    %c0_158 = arith.constant 0 : index
    %153 = vector.load %arg25[%c8_157, %c0_158] : memref<32x128xf32, #tpu.memory_space<vmem>>, vector<4x128xf32>
    tpu.vector_store %arg25[%c8_157, %c0_158], %147 {strides = array<i32>} : memref<32x128xf32, #tpu.memory_space<vmem>>, vector<4x128xf32>,
    %c12_159 = arith.constant 12 : index
    %c0_160 = arith.constant 0 : index
    %154 = vector.load %arg25[%c12_159, %c0_160] : memref<32x128xf32, #tpu.memory_space<vmem>>, vector<1x128xf32>
    tpu.vector_store %arg25[%c12_159, %c0_160], %0 {strides = array<i32>} : memref<32x128xf32, #tpu.memory_space<vmem>>, vector<1x128xf32>,
    %c7_161 = arith.constant 7 : index
    %c0_162 = arith.constant 0 : index
    %155 = vector.load %arg25[%c7_161, %c0_162] : memref<32x128xf32, #tpu.memory_space<vmem>>, vector<4x128xf32>
    %c9_163 = arith.constant 9 : index
    %c0_164 = arith.constant 0 : index
    %156 = vector.load %arg25[%c9_163, %c0_164] : memref<32x128xf32, #tpu.memory_space<vmem>>, vector<4x128xf32>
    %157 = tpu.concatenate %155, %147, %156 in 1 : vector<4x128xf32>, vector<4x128xf32>, vector<4x128xf32> -> vector<4x384xf32>
    %cst_165 = arith.constant dense<0.000000e+00> : vector<4x128xf32>
    %158 = tpu.matmul %157, %149, %cst_165 {dimension_numbers = #tpu.dot_dimension_numbers<[1], [0], [0], [1], [0, 0, 1, 1], [], []>} : vector<4x384xf32>, vector<384x128xf32>, vector<4x128xf32> -> vector<4x128xf32>
    %159 = vector.broadcast %151 : vector<1x128xf32> to vector<4x128xf32>
    %160 = arith.addf %158, %159 : vector<4x128xf32>
    %161 = arith.addf %160, %114 : vector<4x128xf32>
    %c0_166 = arith.constant 0 : index
    %c0_167 = arith.constant 0 : index
    %162 = vector.load %arg25[%c0_166, %c0_167] : memref<32x128xf32, #tpu.memory_space<vmem>>, vector<4x128xf32>
    tpu.vector_store %arg25[%c0_166, %c0_167], %161 {strides = array<i32>} : memref<32x128xf32, #tpu.memory_space<vmem>>, vector<4x128xf32>,
    %c4 = arith.constant 4 : index
    %c0_168 = arith.constant 0 : index
    %163 = vector.load %arg25[%c4, %c0_168] : memref<32x128xf32, #tpu.memory_space<vmem>>, vector<1x128xf32>
    tpu.vector_store %arg25[%c4, %c0_168], %0 {strides = array<i32>} : memref<32x128xf32, #tpu.memory_space<vmem>>, vector<1x128xf32>,
    %c0_169 = arith.constant 0 : index
    %c0_170 = arith.constant 0 : index
    %164 = tpu.strided_load %arg25[%c0_169, %c0_170] {strides = array<i32: 2, 1>} : memref<32x128xf32, #tpu.memory_space<vmem>>, vector<2x128xf32>
    %c1_171 = arith.constant 1 : index
    %c0_172 = arith.constant 0 : index
    %165 = tpu.strided_load %arg25[%c1_171, %c0_172] {strides = array<i32: 2, 1>} : memref<32x128xf32, #tpu.memory_space<vmem>>, vector<2x128xf32>
    %c2_173 = arith.constant 2 : index
    %c0_174 = arith.constant 0 : index
    %166 = tpu.strided_load %arg25[%c2_173, %c0_174] {strides = array<i32: 2, 1>} : memref<32x128xf32, #tpu.memory_space<vmem>>, vector<2x128xf32>
    %167 = arith.maximumf %164, %165 : vector<2x128xf32>
    %168 = arith.maximumf %167, %166 : vector<2x128xf32>
    %c2_175 = arith.constant 2 : index
    %c0_176 = arith.constant 0 : index
    %c0_177 = arith.constant 0 : index
    %169 = vector.load %arg12[%c2_175, %c0_176, %c0_177] : memref<3x1x128xf32, #tpu.memory_space<vmem>>, vector<1x1x128xf32>
    %170 = vector.shape_cast %169 : vector<1x1x128xf32> to vector<1x128xf32>
    %171 = vector.broadcast %170 : vector<1x128xf32> to vector<2x128xf32>
    %172 = arith.mulf %168, %171 : vector<2x128xf32>
    %c2_178 = arith.constant 2 : index
    %c0_179 = arith.constant 0 : index
    %c0_180 = arith.constant 0 : index
    %173 = vector.load %arg13[%c2_178, %c0_179, %c0_180] : memref<3x1x128xf32, #tpu.memory_space<vmem>>, vector<1x1x128xf32>
    %174 = vector.shape_cast %173 : vector<1x1x128xf32> to vector<1x128xf32>
    %175 = vector.broadcast %174 : vector<1x128xf32> to vector<2x128xf32>
    %176 = arith.addf %172, %175 : vector<2x128xf32>
    %cst_181 = arith.constant 0.000000e+00 : f32
    %177 = vector.broadcast %cst_181 : f32 to vector<2x128xf32>
    %178 = arith.maximumf %176, %177 : vector<2x128xf32>
    %c2_182 = arith.constant 2 : index
    %c0_183 = arith.constant 0 : index
    %c0_184 = arith.constant 0 : index
    %179 = vector.load %arg14[%c2_182, %c0_183, %c0_184] : memref<3x384x128xf32, #tpu.memory_space<vmem>>, vector<1x384x128xf32>
    %180 = vector.shape_cast %179 : vector<1x384x128xf32> to vector<384x128xf32>
    %c2_185 = arith.constant 2 : index
    %c0_186 = arith.constant 0 : index
    %c0_187 = arith.constant 0 : index
    %181 = vector.load %arg15[%c2_185, %c0_186, %c0_187] : memref<3x1x128xf32, #tpu.memory_space<vmem>>, vector<1x1x128xf32>
    %182 = vector.shape_cast %181 : vector<1x1x128xf32> to vector<1x128xf32>
    %c7_188 = arith.constant 7 : index
    %c0_189 = arith.constant 0 : index
    %183 = vector.load %arg25[%c7_188, %c0_189] : memref<32x128xf32, #tpu.memory_space<vmem>>, vector<1x128xf32>
    tpu.vector_store %arg25[%c7_188, %c0_189], %0 {strides = array<i32>} : memref<32x128xf32, #tpu.memory_space<vmem>>, vector<1x128xf32>,
    %c8_190 = arith.constant 8 : index
    %c0_191 = arith.constant 0 : index
    %184 = vector.load %arg25[%c8_190, %c0_191] : memref<32x128xf32, #tpu.memory_space<vmem>>, vector<2x128xf32>
    tpu.vector_store %arg25[%c8_190, %c0_191], %178 {strides = array<i32>} : memref<32x128xf32, #tpu.memory_space<vmem>>, vector<2x128xf32>,
    %c10 = arith.constant 10 : index
    %c0_192 = arith.constant 0 : index
    %185 = vector.load %arg25[%c10, %c0_192] : memref<32x128xf32, #tpu.memory_space<vmem>>, vector<1x128xf32>
    tpu.vector_store %arg25[%c10, %c0_192], %0 {strides = array<i32>} : memref<32x128xf32, #tpu.memory_space<vmem>>, vector<1x128xf32>,
    %c7_193 = arith.constant 7 : index
    %c0_194 = arith.constant 0 : index
    %186 = vector.load %arg25[%c7_193, %c0_194] : memref<32x128xf32, #tpu.memory_space<vmem>>, vector<2x128xf32>
    %c9_195 = arith.constant 9 : index
    %c0_196 = arith.constant 0 : index
    %187 = vector.load %arg25[%c9_195, %c0_196] : memref<32x128xf32, #tpu.memory_space<vmem>>, vector<2x128xf32>
    %188 = tpu.concatenate %186, %178, %187 in 1 : vector<2x128xf32>, vector<2x128xf32>, vector<2x128xf32> -> vector<2x384xf32>
    %cst_197 = arith.constant dense<0.000000e+00> : vector<2x128xf32>
    %189 = tpu.matmul %188, %180, %cst_197 {dimension_numbers = #tpu.dot_dimension_numbers<[1], [0], [0], [1], [0, 0, 1, 1], [], []>} : vector<2x384xf32>, vector<384x128xf32>, vector<2x128xf32> -> vector<2x128xf32>
    %190 = vector.broadcast %182 : vector<1x128xf32> to vector<2x128xf32>
    %191 = arith.addf %189, %190 : vector<2x128xf32>
    %c2_198 = arith.constant 2 : index
    %c0_199 = arith.constant 0 : index
    %c0_200 = arith.constant 0 : index
    %192 = vector.load %arg16[%c2_198, %c0_199, %c0_200] : memref<3x1x128xf32, #tpu.memory_space<vmem>>, vector<1x1x128xf32>
    %193 = vector.shape_cast %192 : vector<1x1x128xf32> to vector<1x128xf32>
    %194 = vector.broadcast %193 : vector<1x128xf32> to vector<2x128xf32>
    %195 = arith.mulf %191, %194 : vector<2x128xf32>
    %c2_201 = arith.constant 2 : index
    %c0_202 = arith.constant 0 : index
    %c0_203 = arith.constant 0 : index
    %196 = vector.load %arg17[%c2_201, %c0_202, %c0_203] : memref<3x1x128xf32, #tpu.memory_space<vmem>>, vector<1x1x128xf32>
    %197 = vector.shape_cast %196 : vector<1x1x128xf32> to vector<1x128xf32>
    %198 = vector.broadcast %197 : vector<1x128xf32> to vector<2x128xf32>
    %199 = arith.addf %195, %198 : vector<2x128xf32>
    %cst_204 = arith.constant 0.000000e+00 : f32
    %200 = vector.broadcast %cst_204 : f32 to vector<2x128xf32>
    %201 = arith.maximumf %199, %200 : vector<2x128xf32>
    %c2_205 = arith.constant 2 : index
    %c0_206 = arith.constant 0 : index
    %c0_207 = arith.constant 0 : index
    %202 = vector.load %arg18[%c2_205, %c0_206, %c0_207] : memref<3x384x128xf32, #tpu.memory_space<vmem>>, vector<1x384x128xf32>
    %203 = vector.shape_cast %202 : vector<1x384x128xf32> to vector<384x128xf32>
    %c2_208 = arith.constant 2 : index
    %c0_209 = arith.constant 0 : index
    %c0_210 = arith.constant 0 : index
    %204 = vector.load %arg19[%c2_208, %c0_209, %c0_210] : memref<3x1x128xf32, #tpu.memory_space<vmem>>, vector<1x1x128xf32>
    %205 = vector.shape_cast %204 : vector<1x1x128xf32> to vector<1x128xf32>
    %c7_211 = arith.constant 7 : index
    %c0_212 = arith.constant 0 : index
    %206 = vector.load %arg25[%c7_211, %c0_212] : memref<32x128xf32, #tpu.memory_space<vmem>>, vector<1x128xf32>
    tpu.vector_store %arg25[%c7_211, %c0_212], %0 {strides = array<i32>} : memref<32x128xf32, #tpu.memory_space<vmem>>, vector<1x128xf32>,
    %c8_213 = arith.constant 8 : index
    %c0_214 = arith.constant 0 : index
    %207 = vector.load %arg25[%c8_213, %c0_214] : memref<32x128xf32, #tpu.memory_space<vmem>>, vector<2x128xf32>
    tpu.vector_store %arg25[%c8_213, %c0_214], %201 {strides = array<i32>} : memref<32x128xf32, #tpu.memory_space<vmem>>, vector<2x128xf32>,
    %c10_215 = arith.constant 10 : index
    %c0_216 = arith.constant 0 : index
    %208 = vector.load %arg25[%c10_215, %c0_216] : memref<32x128xf32, #tpu.memory_space<vmem>>, vector<1x128xf32>
    tpu.vector_store %arg25[%c10_215, %c0_216], %0 {strides = array<i32>} : memref<32x128xf32, #tpu.memory_space<vmem>>, vector<1x128xf32>,
    %c7_217 = arith.constant 7 : index
    %c0_218 = arith.constant 0 : index
    %209 = vector.load %arg25[%c7_217, %c0_218] : memref<32x128xf32, #tpu.memory_space<vmem>>, vector<2x128xf32>
    %c9_219 = arith.constant 9 : index
    %c0_220 = arith.constant 0 : index
    %210 = vector.load %arg25[%c9_219, %c0_220] : memref<32x128xf32, #tpu.memory_space<vmem>>, vector<2x128xf32>
    %211 = tpu.concatenate %209, %201, %210 in 1 : vector<2x128xf32>, vector<2x128xf32>, vector<2x128xf32> -> vector<2x384xf32>
    %cst_221 = arith.constant dense<0.000000e+00> : vector<2x128xf32>
    %212 = tpu.matmul %211, %203, %cst_221 {dimension_numbers = #tpu.dot_dimension_numbers<[1], [0], [0], [1], [0, 0, 1, 1], [], []>} : vector<2x384xf32>, vector<384x128xf32>, vector<2x128xf32> -> vector<2x128xf32>
    %213 = vector.broadcast %205 : vector<1x128xf32> to vector<2x128xf32>
    %214 = arith.addf %212, %213 : vector<2x128xf32>
    %215 = arith.addf %214, %168 : vector<2x128xf32>
    %c0_222 = arith.constant 0 : index
    %c0_223 = arith.constant 0 : index
    %216 = vector.load %arg21[%c0_222, %c0_223] : memref<1x128xf32, #tpu.memory_space<vmem>>, vector<1x128xf32>
    %217 = vector.extract_strided_slice %215 {offsets = [0, 0], sizes = [1, 128], strides = [1, 1]} : vector<2x128xf32> to vector<1x128xf32>
    %c0_224 = arith.constant 0 : index
    %c0_225 = arith.constant 0 : index
    %c0_226 = arith.constant 0 : index
    %218 = vector.load %arg20[%c0_224, %c0_225, %c0_226] : memref<2x128x128xf32, #tpu.memory_space<vmem>>, vector<1x128x128xf32>
    %219 = vector.shape_cast %218 : vector<1x128x128xf32> to vector<128x128xf32>
    %cst_227 = arith.constant dense<0.000000e+00> : vector<1x128xf32>
    %220 = tpu.matmul %217, %219, %cst_227 {dimension_numbers = #tpu.dot_dimension_numbers<[1], [0], [0], [1], [0, 0, 1, 1], [], []>} : vector<1x128xf32>, vector<128x128xf32>, vector<1x128xf32> -> vector<1x128xf32>
    %221 = arith.addf %216, %220 : vector<1x128xf32>
    %222 = vector.extract_strided_slice %215 {offsets = [1, 0], sizes = [1, 128], strides = [1, 1]} : vector<2x128xf32> to vector<1x128xf32>
    %c1_228 = arith.constant 1 : index
    %c0_229 = arith.constant 0 : index
    %c0_230 = arith.constant 0 : index
    %223 = vector.load %arg20[%c1_228, %c0_229, %c0_230] : memref<2x128x128xf32, #tpu.memory_space<vmem>>, vector<1x128x128xf32>
    %224 = vector.shape_cast %223 : vector<1x128x128xf32> to vector<128x128xf32>
    %cst_231 = arith.constant dense<0.000000e+00> : vector<1x128xf32>
    %225 = tpu.matmul %222, %224, %cst_231 {dimension_numbers = #tpu.dot_dimension_numbers<[1], [0], [0], [1], [0, 0, 1, 1], [], []>} : vector<1x128xf32>, vector<128x128xf32>, vector<1x128xf32> -> vector<1x128xf32>
    %226 = arith.addf %221, %225 : vector<1x128xf32>
    %c0_232 = arith.constant 0 : index
    %c0_233 = arith.constant 0 : index
    %227 = vector.load %arg22[%c0_232, %c0_233] : memref<1x128xf32, #tpu.memory_space<vmem>>, vector<1x128xf32>
    %228 = arith.mulf %226, %227 : vector<1x128xf32>
    %c0_234 = arith.constant 0 : index
    %c0_235 = arith.constant 0 : index
    %229 = vector.load %arg23[%c0_234, %c0_235] : memref<1x128xf32, #tpu.memory_space<vmem>>, vector<1x128xf32>
    %230 = arith.addf %228, %229 : vector<1x128xf32>
    %cst_236 = arith.constant 0.000000e+00 : f32
    %231 = vector.broadcast %cst_236 : f32 to vector<1x128xf32>
    %232 = arith.maximumf %230, %231 : vector<1x128xf32>
    %c0_237 = arith.constant 0 : index
    %c0_238 = arith.constant 0 : index
    %c0_239 = arith.constant 0 : index
    %233 = vector.load %arg24[%c0_237, %c0_238, %c0_239] : memref<1x1x128xf32, #tpu.memory_space<vmem>>, vector<1x1x128xf32>
    %234 = vector.shape_cast %233 : vector<1x1x128xf32> to vector<1x128xf32>
    %235 = vector.shape_cast %232 : vector<1x128xf32> to vector<1x1x128xf32>
    tpu.vector_store %arg24[%c0_237, %c0_238, %c0_239], %235 {strides = array<i32>} : memref<1x1x128xf32, #tpu.memory_space<vmem>>, vector<1x1x128xf32>,
    return
  }
  func.func @transform_0(%arg0: i32) -> (i32, i32, i32) {
    %c0_i32 = arith.constant 0 : i32
    %c0_i32_0 = arith.constant 0 : i32
    %c0_i32_1 = arith.constant 0 : i32
    return %arg0, %c0_i32, %c0_i32_0 : i32, i32, i32
  }
  func.func @transform_1(%arg0: i32) -> (i32, i32) {
    %c0_i32 = arith.constant 0 : i32
    %c0_i32_0 = arith.constant 0 : i32
    %c0_i32_1 = arith.constant 0 : i32
    return %c0_i32, %c0_i32_0 : i32, i32
  }
  func.func @transform_2(%arg0: i32) -> (i32, i32) {
    %c0_i32 = arith.constant 0 : i32
    %c0_i32_0 = arith.constant 0 : i32
    %c0_i32_1 = arith.constant 0 : i32
    return %c0_i32, %c0_i32_0 : i32, i32
  }
  func.func @transform_3(%arg0: i32) -> (i32, i32) {
    %c0_i32 = arith.constant 0 : i32
    %c0_i32_0 = arith.constant 0 : i32
    %c0_i32_1 = arith.constant 0 : i32
    return %c0_i32, %c0_i32_0 : i32, i32
  }
  func.func @transform_4(%arg0: i32) -> (i32, i32) {
    %c0_i32 = arith.constant 0 : i32
    %c0_i32_0 = arith.constant 0 : i32
    %c0_i32_1 = arith.constant 0 : i32
    return %c0_i32, %c0_i32_0 : i32, i32
  }
  func.func @transform_5(%arg0: i32) -> (i32, i32) {
    %c0_i32 = arith.constant 0 : i32
    %c0_i32_0 = arith.constant 0 : i32
    %c0_i32_1 = arith.constant 0 : i32
    return %c0_i32, %c0_i32_0 : i32, i32
  }
  func.func @transform_6(%arg0: i32) -> (i32, i32) {
    %c0_i32 = arith.constant 0 : i32
    %c0_i32_0 = arith.constant 0 : i32
    %c0_i32_1 = arith.constant 0 : i32
    return %c0_i32, %c0_i32_0 : i32, i32
  }
  func.func @transform_7(%arg0: i32) -> (i32, i32) {
    %c0_i32 = arith.constant 0 : i32
    %c0_i32_0 = arith.constant 0 : i32
    %c0_i32_1 = arith.constant 0 : i32
    return %c0_i32, %c0_i32_0 : i32, i32
  }
  func.func @transform_8(%arg0: i32) -> (i32, i32) {
    %c0_i32 = arith.constant 0 : i32
    %c0_i32_0 = arith.constant 0 : i32
    %c0_i32_1 = arith.constant 0 : i32
    return %c0_i32, %c0_i32_0 : i32, i32
  }
  func.func @transform_9(%arg0: i32) -> (i32, i32) {
    %c0_i32 = arith.constant 0 : i32
    %c0_i32_0 = arith.constant 0 : i32
    %c0_i32_1 = arith.constant 0 : i32
    return %c0_i32, %c0_i32_0 : i32, i32
  }
  func.func @transform_10(%arg0: i32) -> (i32, i32) {
    %c0_i32 = arith.constant 0 : i32
    %c0_i32_0 = arith.constant 0 : i32
    %c0_i32_1 = arith.constant 0 : i32
    return %c0_i32, %c0_i32_0 : i32, i32
  }
  func.func @transform_11(%arg0: i32) -> (i32, i32, i32) {
    %c0_i32 = arith.constant 0 : i32
    %c0_i32_0 = arith.constant 0 : i32
    %c0_i32_1 = arith.constant 0 : i32
    %c0_i32_2 = arith.constant 0 : i32
    return %c0_i32, %c0_i32_0, %c0_i32_1 : i32, i32, i32
  }
  func.func @transform_12(%arg0: i32) -> (i32, i32, i32) {
    %c0_i32 = arith.constant 0 : i32
    %c0_i32_0 = arith.constant 0 : i32
    %c0_i32_1 = arith.constant 0 : i32
    %c0_i32_2 = arith.constant 0 : i32
    return %c0_i32, %c0_i32_0, %c0_i32_1 : i32, i32, i32
  }
  func.func @transform_13(%arg0: i32) -> (i32, i32, i32) {
    %c0_i32 = arith.constant 0 : i32
    %c0_i32_0 = arith.constant 0 : i32
    %c0_i32_1 = arith.constant 0 : i32
    %c0_i32_2 = arith.constant 0 : i32
    return %c0_i32, %c0_i32_0, %c0_i32_1 : i32, i32, i32
  }
  func.func @transform_14(%arg0: i32) -> (i32, i32, i32) {
    %c0_i32 = arith.constant 0 : i32
    %c0_i32_0 = arith.constant 0 : i32
    %c0_i32_1 = arith.constant 0 : i32
    %c0_i32_2 = arith.constant 0 : i32
    return %c0_i32, %c0_i32_0, %c0_i32_1 : i32, i32, i32
  }
  func.func @transform_15(%arg0: i32) -> (i32, i32, i32) {
    %c0_i32 = arith.constant 0 : i32
    %c0_i32_0 = arith.constant 0 : i32
    %c0_i32_1 = arith.constant 0 : i32
    %c0_i32_2 = arith.constant 0 : i32
    return %c0_i32, %c0_i32_0, %c0_i32_1 : i32, i32, i32
  }
  func.func @transform_16(%arg0: i32) -> (i32, i32, i32) {
    %c0_i32 = arith.constant 0 : i32
    %c0_i32_0 = arith.constant 0 : i32
    %c0_i32_1 = arith.constant 0 : i32
    %c0_i32_2 = arith.constant 0 : i32
    return %c0_i32, %c0_i32_0, %c0_i32_1 : i32, i32, i32
  }
  func.func @transform_17(%arg0: i32) -> (i32, i32, i32) {
    %c0_i32 = arith.constant 0 : i32
    %c0_i32_0 = arith.constant 0 : i32
    %c0_i32_1 = arith.constant 0 : i32
    %c0_i32_2 = arith.constant 0 : i32
    return %c0_i32, %c0_i32_0, %c0_i32_1 : i32, i32, i32
  }
  func.func @transform_18(%arg0: i32) -> (i32, i32, i32) {
    %c0_i32 = arith.constant 0 : i32
    %c0_i32_0 = arith.constant 0 : i32
    %c0_i32_1 = arith.constant 0 : i32
    %c0_i32_2 = arith.constant 0 : i32
    return %c0_i32, %c0_i32_0, %c0_i32_1 : i32, i32, i32
  }
  func.func @transform_19(%arg0: i32) -> (i32, i32, i32) {
    %c0_i32 = arith.constant 0 : i32
    %c0_i32_0 = arith.constant 0 : i32
    %c0_i32_1 = arith.constant 0 : i32
    %c0_i32_2 = arith.constant 0 : i32
    return %c0_i32, %c0_i32_0, %c0_i32_1 : i32, i32, i32
  }
  func.func @transform_20(%arg0: i32) -> (i32, i32) {
    %c0_i32 = arith.constant 0 : i32
    %c0_i32_0 = arith.constant 0 : i32
    %c0_i32_1 = arith.constant 0 : i32
    return %c0_i32, %c0_i32_0 : i32, i32
  }
  func.func @transform_21(%arg0: i32) -> (i32, i32) {
    %c0_i32 = arith.constant 0 : i32
    %c0_i32_0 = arith.constant 0 : i32
    %c0_i32_1 = arith.constant 0 : i32
    return %c0_i32, %c0_i32_0 : i32, i32
  }
  func.func @transform_22(%arg0: i32) -> (i32, i32) {
    %c0_i32 = arith.constant 0 : i32
    %c0_i32_0 = arith.constant 0 : i32
    %c0_i32_1 = arith.constant 0 : i32
    return %c0_i32, %c0_i32_0 : i32, i32
  }
  func.func @transform_23(%arg0: i32) -> (i32, i32, i32) {
    %c0_i32 = arith.constant 0 : i32
    %c0_i32_0 = arith.constant 0 : i32
    %c0_i32_1 = arith.constant 0 : i32
    return %arg0, %c0_i32, %c0_i32_0 : i32, i32, i32
  }
}

</mosaic_0001>

<llo_original>
// kernel: dpcnn_forward.1
$region0: #{dpcnn_forward.1}
  #allocation0 [shape = 'u32[]', space=smem, size = 0x4, offset = 0x4, fixed_abs, tag = 'smem constant byte address 0x4 - core index']
  #allocation1 [shape = 'u32[144,128]{1,0:T(1,128)}', space=vmem, size = 0x12000, scoped, tag = 'internal scratch']
  #allocation2 [shape = 'f32[32,128]{1,0:T(8,128)}', space=vmem, size = 0x4000, scoped, tag = 'scratch operand']
  %s0 = inlined_call_operand.vmem [shape: f32[2,16,128], index: 0, kind: input, shape index: {}]
  %s1 = inlined_call_operand.vmem [shape: f32[384,128], index: 1, kind: input, shape index: {}]
  %s2 = inlined_call_operand.vmem [shape: f32[1,128], index: 2, kind: input, shape index: {}]
  %s3 = inlined_call_operand.vmem [shape: f32[1,128], index: 3, kind: input, shape index: {}]
  %s4 = inlined_call_operand.vmem [shape: f32[1,128], index: 4, kind: input, shape index: {}]
  %s5 = inlined_call_operand.vmem [shape: f32[384,128], index: 5, kind: input, shape index: {}]
  %s6 = inlined_call_operand.vmem [shape: f32[1,128], index: 6, kind: input, shape index: {}]
  %s7 = inlined_call_operand.vmem [shape: f32[1,128], index: 7, kind: input, shape index: {}]
  %s8 = inlined_call_operand.vmem [shape: f32[1,128], index: 8, kind: input, shape index: {}]
  %s9 = inlined_call_operand.vmem [shape: f32[384,128], index: 9, kind: input, shape index: {}]
  %s10 = inlined_call_operand.vmem [shape: f32[1,128], index: 10, kind: input, shape index: {}]
  %s11 = inlined_call_operand.vmem [shape: f32[3,1,128], index: 11, kind: input, shape index: {}]
  %s12 = inlined_call_operand.vmem [shape: f32[3,1,128], index: 12, kind: input, shape index: {}]
  %s13 = inlined_call_operand.vmem [shape: f32[3,384,128], index: 13, kind: input, shape index: {}]
  %s14 = inlined_call_operand.vmem [shape: f32[3,1,128], index: 14, kind: input, shape index: {}]
  %s15 = inlined_call_operand.vmem [shape: f32[3,1,128], index: 15, kind: input, shape index: {}]
  %s16 = inlined_call_operand.vmem [shape: f32[3,1,128], index: 16, kind: input, shape index: {}]
  %s17 = inlined_call_operand.vmem [shape: f32[3,384,128], index: 17, kind: input, shape index: {}]
  %s18 = inlined_call_operand.vmem [shape: f32[3,1,128], index: 18, kind: input, shape index: {}]
  %s19 = inlined_call_operand.vmem [shape: f32[2,128,128], index: 19, kind: input, shape index: {}]
  %s20 = inlined_call_operand.vmem [shape: f32[1,128], index: 20, kind: input, shape index: {}]
  %s21 = inlined_call_operand.vmem [shape: f32[1,128], index: 21, kind: input, shape index: {}]
  %s22 = inlined_call_operand.vmem [shape: f32[1,128], index: 22, kind: input, shape index: {}]
  %s23 = inlined_call_operand.hbm [shape: f32[2,1,128], index: 23, kind: output, shape index: {}]
  %s24 = sld [smem:[#allocation0]]
  $region125: #{dpcnn_forward.1} parent=0
    _
  %s26 = ssub.s32 1, %s24
  %s27 = scalar_select 0, %s26, %s24
  $region1: #{dpcnn_forward.1} parent=0
    #allocation3 [shape = 'u8[1024]{0}', space=vmem, size = 0x400, scoped, tag = 'output window, operand 0']
    #allocation4 [shape = 's32[2]{0}', space=sflag, size = 0x8, scoped, tag = 'scoped memory for dpcnn_forward.1']
    %28 = vsyncpa [#allocation4], 0
    %s29 = scalar_lea.sflag [#allocation4], 1
    %30 = vsyncpa %s29, 0
    loop: start=0, step=1, limit=4
    $region2: #{dpcnn_forward.1} parent=1 // loop_pre_header
      _
    $region3: #{dpcnn_forward.1} parent=1 // loop_header
      %s32 = sphi 0, %s36
      %p33 = scmp.ge.s32.totalorder %s32, 4
      %s42 = sphi 0, %s44
      %s45 = sphi 0, %s42
      %s46 = sphi 0, %s45
      %s62 = sphi 0, %s46
      %s66 = sphi 0, %s66
      %s68 = sphi 0, %s66
      %s69 = sphi 0, %s68
      %s83 = sphi 0, %s69
      %s87 = sphi 0, %s87
      %s89 = sphi 0, %s87
      %s90 = sphi 0, %s89
      %s104 = sphi 0, %s90
      %s108 = sphi 0, %s108
      %s110 = sphi 0, %s108
      %s111 = sphi 0, %s110
      %s125 = sphi 0, %s111
      %s129 = sphi 0, %s129
      %s131 = sphi 0, %s129
      %s132 = sphi 0, %s131
      %s146 = sphi 0, %s132
      %s150 = sphi 0, %s150
      %s152 = sphi 0, %s150
      %s153 = sphi 0, %s152
      %s167 = sphi 0, %s153
      %s171 = sphi 0, %s171
      %s173 = sphi 0, %s171
      %s174 = sphi 0, %s173
      %s188 = sphi 0, %s174
      %s192 = sphi 0, %s192
      %s194 = sphi 0, %s192
      %s195 = sphi 0, %s194
      %s209 = sphi 0, %s195
      %s213 = sphi 0, %s213
      %s215 = sphi 0, %s213
      %s216 = sphi 0, %s215
      %s230 = sphi 0, %s216
      %s234 = sphi 0, %s234
      %s236 = sphi 0, %s234
      %s237 = sphi 0, %s236
      %s251 = sphi 0, %s237
      %s255 = sphi 0, %s255
      %s257 = sphi 0, %s255
      %s258 = sphi 0, %s257
      %s272 = sphi 0, %s258
      %s276 = sphi 0, %s276
      %s278 = sphi 0, %s276
      %s279 = sphi 0, %s278
      %s293 = sphi 0, %s279
      %s297 = sphi 0, %s297
      %s299 = sphi 0, %s297
      %s300 = sphi 0, %s299
      %s314 = sphi 0, %s300
      %s318 = sphi 0, %s318
      %s320 = sphi 0, %s318
      %s321 = sphi 0, %s320
      %s335 = sphi 0, %s321
      %s339 = sphi 0, %s339
      %s341 = sphi 0, %s339
      %s342 = sphi 0, %s341
      %s356 = sphi 0, %s342
      %s360 = sphi 0, %s360
      %s362 = sphi 0, %s360
      %s363 = sphi 0, %s362
      %s377 = sphi 0, %s363
      %s381 = sphi 0, %s381
      %s383 = sphi 0, %s381
      %s384 = sphi 0, %s383
      %s398 = sphi 0, %s384
      %s402 = sphi 0, %s402
      %s404 = sphi 0, %s402
      %s405 = sphi 0, %s404
      %s419 = sphi 0, %s405
      %s423 = sphi 0, %s423
      %s425 = sphi 0, %s423
      %s426 = sphi 0, %s425
      %s440 = sphi 0, %s426
      %s444 = sphi 0, %s444
      %s446 = sphi 0, %s444
      %s447 = sphi 0, %s446
      %s461 = sphi 0, %s447
      %s465 = sphi 0, %s465
      %s467 = sphi 0, %s465
      %s468 = sphi 0, %s467
      %s482 = sphi 0, %s468
      %s486 = sphi 0, %s486
      %s488 = sphi 0, %s486
      %s489 = sphi 0, %s488
      %s503 = sphi 0, %s489
      %s507 = sphi 0, %s507
      %s509 = sphi 0, %s507
      %s510 = sphi 0, %s509
      %s524 = sphi 0, %s510
      %s530 = sphi 0, %s532
      %s533 = sphi 0, %s530
      %s534 = sphi 0, %s533
      %s550 = sphi 0, %s534
    $region4: #{dpcnn_forward.1} parent=1 // loop_header_branch
      %35 = sbr.rel (%p33) target = $region8
    $region5: #{dpcnn_forward.1} parent=1 // loop_body
      %s37 = ssub.s32 %s32, 1
      %s38 = ssub.s32 %s32, 2
      %s39 = sadd.s32 %s32, 1
      %s40 = ssub.s32 %s32, %s39
      %p41 = scmp.eq.s32.totalorder %s40, 0
      %s43 = sadd.s32 %s42, 1
      %s44 = scalar_select %p41, %s42, %s43
      %p47 = pneg %p41
      %p48 = scmp.eq.s32.totalorder %s32, 1
      %p49 = por %p47, %p48
      %p50 = scmp.ne.s32.totalorder %s42, %s45
      %p51 = scmp.eq.s32.totalorder %s32, 0
      %p52 = por %p50, %p51
      %p53 = scmp.ne.s32.totalorder %s42, %s45
      %p54 = scmp.eq.s32.totalorder %s37, 1
      %p55 = por %p53, %p54
      %p56 = scmp.ne.s32.totalorder %s45, %s46
      %p57 = scmp.eq.s32.totalorder %s37, 0
      %p58 = por %p56, %p57
      %p59 = scmp.ne.s32.totalorder %s45, %s46
      %p60 = scmp.eq.s32.totalorder %s38, 1
      %p61 = por %p59, %p60
      %p63 = scmp.ne.s32.totalorder %s46, %s62
      %p64 = scmp.eq.s32.totalorder %s38, 0
      %p65 = por %p63, %p64
      %s67 = sadd.s32 %s66, 1
      %p70 = scmp.eq.s32.totalorder %s32, 1
      %p71 = scmp.ne.s32.totalorder %s66, %s68
      %p72 = scmp.eq.s32.totalorder %s32, 0
      %p73 = por %p71, %p72
      %p74 = scmp.ne.s32.totalorder %s66, %s68
      %p75 = scmp.eq.s32.totalorder %s37, 1
      %p76 = por %p74, %p75
      %p77 = scmp.ne.s32.totalorder %s68, %s69
      %p78 = scmp.eq.s32.totalorder %s37, 0
      %p79 = por %p77, %p78
      %p80 = scmp.ne.s32.totalorder %s68, %s69
      %p81 = scmp.eq.s32.totalorder %s38, 1
      %p82 = por %p80, %p81
      %p84 = scmp.ne.s32.totalorder %s69, %s83
      %p85 = scmp.eq.s32.totalorder %s38, 0
      %p86 = por %p84, %p85
      %s88 = sadd.s32 %s87, 1
      %p91 = scmp.eq.s32.totalorder %s32, 1
      %p92 = scmp.ne.s32.totalorder %s87, %s89
      %p93 = scmp.eq.s32.totalorder %s32, 0
      %p94 = por %p92, %p93
      %p95 = scmp.ne.s32.totalorder %s87, %s89
      %p96 = scmp.eq.s32.totalorder %s37, 1
      %p97 = por %p95, %p96
      %p98 = scmp.ne.s32.totalorder %s89, %s90
      %p99 = scmp.eq.s32.totalorder %s37, 0
      %p100 = por %p98, %p99
      %p101 = scmp.ne.s32.totalorder %s89, %s90
      %p102 = scmp.eq.s32.totalorder %s38, 1
      %p103 = por %p101, %p102
      %p105 = scmp.ne.s32.totalorder %s90, %s104
      %p106 = scmp.eq.s32.totalorder %s38, 0
      %p107 = por %p105, %p106
      %s109 = sadd.s32 %s108, 1
      %p112 = scmp.eq.s32.totalorder %s32, 1
      %p113 = scmp.ne.s32.totalorder %s108, %s110
      %p114 = scmp.eq.s32.totalorder %s32, 0
      %p115 = por %p113, %p114
      %p116 = scmp.ne.s32.totalorder %s108, %s110
      %p117 = scmp.eq.s32.totalorder %s37, 1
      %p118 = por %p116, %p117
      %p119 = scmp.ne.s32.totalorder %s110, %s111
      %p120 = scmp.eq.s32.totalorder %s37, 0
      %p121 = por %p119, %p120
      %p122 = scmp.ne.s32.totalorder %s110, %s111
      %p123 = scmp.eq.s32.totalorder %s38, 1
      %p124 = por %p122, %p123
      %p126 = scmp.ne.s32.totalorder %s111, %s125
      %p127 = scmp.eq.s32.totalorder %s38, 0
      %p128 = por %p126, %p127
      %s130 = sadd.s32 %s129, 1
      %p133 = scmp.eq.s32.totalorder %s32, 1
      %p134 = scmp.ne.s32.totalorder %s129, %s131
      %p135 = scmp.eq.s32.totalorder %s32, 0
      %p136 = por %p134, %p135
      %p137 = scmp.ne.s32.totalorder %s129, %s131
      %p138 = scmp.eq.s32.totalorder %s37, 1
      %p139 = por %p137, %p138
      %p140 = scmp.ne.s32.totalorder %s131, %s132
      %p141 = scmp.eq.s32.totalorder %s37, 0
      %p142 = por %p140, %p141
      %p143 = scmp.ne.s32.totalorder %s131, %s132
      %p144 = scmp.eq.s32.totalorder %s38, 1
      %p145 = por %p143, %p144
      %p147 = scmp.ne.s32.totalorder %s132, %s146
      %p148 = scmp.eq.s32.totalorder %s38, 0
      %p149 = por %p147, %p148
      %s151 = sadd.s32 %s150, 1
      %p154 = scmp.eq.s32.totalorder %s32, 1
      %p155 = scmp.ne.s32.totalorder %s150, %s152
      %p156 = scmp.eq.s32.totalorder %s32, 0
      %p157 = por %p155, %p156
      %p158 = scmp.ne.s32.totalorder %s150, %s152
      %p159 = scmp.eq.s32.totalorder %s37, 1
      %p160 = por %p158, %p159
      %p161 = scmp.ne.s32.totalorder %s152, %s153
      %p162 = scmp.eq.s32.totalorder %s37, 0
      %p163 = por %p161, %p162
      %p164 = scmp.ne.s32.totalorder %s152, %s153
      %p165 = scmp.eq.s32.totalorder %s38, 1
      %p166 = por %p164, %p165
      %p168 = scmp.ne.s32.totalorder %s153, %s167
      %p169 = scmp.eq.s32.totalorder %s38, 0
      %p170 = por %p168, %p169
      %s172 = sadd.s32 %s171, 1
      %p175 = scmp.eq.s32.totalorder %s32, 1
      %p176 = scmp.ne.s32.totalorder %s171, %s173
      %p177 = scmp.eq.s32.totalorder %s32, 0
      %p178 = por %p176, %p177
      %p179 = scmp.ne.s32.totalorder %s171, %s173
      %p180 = scmp.eq.s32.totalorder %s37, 1
      %p181 = por %p179, %p180
      %p182 = scmp.ne.s32.totalorder %s173, %s174
      %p183 = scmp.eq.s32.totalorder %s37, 0
      %p184 = por %p182, %p183
      %p185 = scmp.ne.s32.totalorder %s173, %s174
      %p186 = scmp.eq.s32.totalorder %s38, 1
      %p187 = por %p185, %p186
      %p189 = scmp.ne.s32.totalorder %s174, %s188
      %p190 = scmp.eq.s32.totalorder %s38, 0
      %p191 = por %p189, %p190
      %s193 = sadd.s32 %s192, 1
      %p196 = scmp.eq.s32.totalorder %s32, 1
      %p197 = scmp.ne.s32.totalorder %s192, %s194
      %p198 = scmp.eq.s32.totalorder %s32, 0
      %p199 = por %p197, %p198
      %p200 = scmp.ne.s32.totalorder %s192, %s194
      %p201 = scmp.eq.s32.totalorder %s37, 1
      %p202 = por %p200, %p201
      %p203 = scmp.ne.s32.totalorder %s194, %s195
      %p204 = scmp.eq.s32.totalorder %s37, 0
      %p205 = por %p203, %p204
      %p206 = scmp.ne.s32.totalorder %s194, %s195
      %p207 = scmp.eq.s32.totalorder %s38, 1
      %p208 = por %p206, %p207
      %p210 = scmp.ne.s32.totalorder %s195, %s209
      %p211 = scmp.eq.s32.totalorder %s38, 0
      %p212 = por %p210, %p211
      %s214 = sadd.s32 %s213, 1
      %p217 = scmp.eq.s32.totalorder %s32, 1
      %p218 = scmp.ne.s32.totalorder %s213, %s215
      %p219 = scmp.eq.s32.totalorder %s32, 0
      %p220 = por %p218, %p219
      %p221 = scmp.ne.s32.totalorder %s213, %s215
      %p222 = scmp.eq.s32.totalorder %s37, 1
      %p223 = por %p221, %p222
      %p224 = scmp.ne.s32.totalorder %s215, %s216
      %p225 = scmp.eq.s32.totalorder %s37, 0
      %p226 = por %p224, %p225
      %p227 = scmp.ne.s32.totalorder %s215, %s216
      %p228 = scmp.eq.s32.totalorder %s38, 1
      %p229 = por %p227, %p228
      %p231 = scmp.ne.s32.totalorder %s216, %s230
      %p232 = scmp.eq.s32.totalorder %s38, 0
      %p233 = por %p231, %p232
      %s235 = sadd.s32 %s234, 1
      %p238 = scmp.eq.s32.totalorder %s32, 1
      %p239 = scmp.ne.s32.totalorder %s234, %s236
      %p240 = scmp.eq.s32.totalorder %s32, 0
      %p241 = por %p239, %p240
      %p242 = scmp.ne.s32.totalorder %s234, %s236
      %p243 = scmp.eq.s32.totalorder %s37, 1
      %p244 = por %p242, %p243
      %p245 = scmp.ne.s32.totalorder %s236, %s237
      %p246 = scmp.eq.s32.totalorder %s37, 0
      %p247 = por %p245, %p246
      %p248 = scmp.ne.s32.totalorder %s236, %s237
      %p249 = scmp.eq.s32.totalorder %s38, 1
      %p250 = por %p248, %p249
      %p252 = scmp.ne.s32.totalorder %s237, %s251
      %p253 = scmp.eq.s32.totalorder %s38, 0
      %p254 = por %p252, %p253
      %s256 = sadd.s32 %s255, 1
      %p259 = scmp.eq.s32.totalorder %s32, 1
      %p260 = scmp.ne.s32.totalorder %s255, %s257
      %p261 = scmp.eq.s32.totalorder %s32, 0
      %p262 = por %p260, %p261
      %p263 = scmp.ne.s32.totalorder %s255, %s257
      %p264 = scmp.eq.s32.totalorder %s37, 1
      %p265 = por %p263, %p264
      %p266 = scmp.ne.s32.totalorder %s257, %s258
      %p267 = scmp.eq.s32.totalorder %s37, 0
      %p268 = por %p266, %p267
      %p269 = scmp.ne.s32.totalorder %s257, %s258
      %p270 = scmp.eq.s32.totalorder %s38, 1
      %p271 = por %p269, %p270
      %p273 = scmp.ne.s32.totalorder %s258, %s272
      %p274 = scmp.eq.s32.totalorder %s38, 0
      %p275 = por %p273, %p274
      %s277 = sadd.s32 %s276, 1
      %p280 = scmp.eq.s32.totalorder %s32, 1
      %p281 = scmp.ne.s32.totalorder %s276, %s278
      %p282 = scmp.eq.s32.totalorder %s32, 0
      %p283 = por %p281, %p282
      %p284 = scmp.ne.s32.totalorder %s276, %s278
      %p285 = scmp.eq.s32.totalorder %s37, 1
      %p286 = por %p284, %p285
      %p287 = scmp.ne.s32.totalorder %s278, %s279
      %p288 = scmp.eq.s32.totalorder %s37, 0
      %p289 = por %p287, %p288
      %p290 = scmp.ne.s32.totalorder %s278, %s279
      %p291 = scmp.eq.s32.totalorder %s38, 1
      %p292 = por %p290, %p291
      %p294 = scmp.ne.s32.totalorder %s279, %s293
      %p295 = scmp.eq.s32.totalorder %s38, 0
      %p296 = por %p294, %p295
      %s298 = sadd.s32 %s297, 1
      %p301 = scmp.eq.s32.totalorder %s32, 1
      %p302 = scmp.ne.s32.totalorder %s297, %s299
      %p303 = scmp.eq.s32.totalorder %s32, 0
      %p304 = por %p302, %p303
      %p305 = scmp.ne.s32.totalorder %s297, %s299
      %p306 = scmp.eq.s32.totalorder %s37, 1
      %p307 = por %p305, %p306
      %p308 = scmp.ne.s32.totalorder %s299, %s300
      %p309 = scmp.eq.s32.totalorder %s37, 0
      %p310 = por %p308, %p309
      %p311 = scmp.ne.s32.totalorder %s299, %s300
      %p312 = scmp.eq.s32.totalorder %s38, 1
      %p313 = por %p311, %p312
      %p315 = scmp.ne.s32.totalorder %s300, %s314
      %p316 = scmp.eq.s32.totalorder %s38, 0
      %p317 = por %p315, %p316
      %s319 = sadd.s32 %s318, 1
      %p322 = scmp.eq.s32.totalorder %s32, 1
      %p323 = scmp.ne.s32.totalorder %s318, %s320
      %p324 = scmp.eq.s32.totalorder %s32, 0
      %p325 = por %p323, %p324
      %p326 = scmp.ne.s32.totalorder %s318, %s320
      %p327 = scmp.eq.s32.totalorder %s37, 1
      %p328 = por %p326, %p327
      %p329 = scmp.ne.s32.totalorder %s320, %s321
      %p330 = scmp.eq.s32.totalorder %s37, 0
      %p331 = por %p329, %p330
      %p332 = scmp.ne.s32.totalorder %s320, %s321
      %p333 = scmp.eq.s32.totalorder %s38, 1
      %p334 = por %p332, %p333
      %p336 = scmp.ne.s32.totalorder %s321, %s335
      %p337 = scmp.eq.s32.totalorder %s38, 0
      %p338 = por %p336, %p337
      %s340 = sadd.s32 %s339, 1
      %p343 = scmp.eq.s32.totalorder %s32, 1
      %p344 = scmp.ne.s32.totalorder %s339, %s341
      %p345 = scmp.eq.s32.totalorder %s32, 0
      %p346 = por %p344, %p345
      %p347 = scmp.ne.s32.totalorder %s339, %s341
      %p348 = scmp.eq.s32.totalorder %s37, 1
      %p349 = por %p347, %p348
      %p350 = scmp.ne.s32.totalorder %s341, %s342
      %p351 = scmp.eq.s32.totalorder %s37, 0
      %p352 = por %p350, %p351
      %p353 = scmp.ne.s32.totalorder %s341, %s342
      %p354 = scmp.eq.s32.totalorder %s38, 1
      %p355 = por %p353, %p354
      %p357 = scmp.ne.s32.totalorder %s342, %s356
      %p358 = scmp.eq.s32.totalorder %s38, 0
      %p359 = por %p357, %p358
      %s361 = sadd.s32 %s360, 1
      %p364 = scmp.eq.s32.totalorder %s32, 1
      %p365 = scmp.ne.s32.totalorder %s360, %s362
      %p366 = scmp.eq.s32.totalorder %s32, 0
      %p367 = por %p365, %p366
      %p368 = scmp.ne.s32.totalorder %s360, %s362
      %p369 = scmp.eq.s32.totalorder %s37, 1
      %p370 = por %p368, %p369
      %p371 = scmp.ne.s32.totalorder %s362, %s363
      %p372 = scmp.eq.s32.totalorder %s37, 0
      %p373 = por %p371, %p372
      %p374 = scmp.ne.s32.totalorder %s362, %s363
      %p375 = scmp.eq.s32.totalorder %s38, 1
      %p376 = por %p374, %p375
      %p378 = scmp.ne.s32.totalorder %s363, %s377
      %p379 = scmp.eq.s32.totalorder %s38, 0
      %p380 = por %p378, %p379
      %s382 = sadd.s32 %s381, 1
      %p385 = scmp.eq.s32.totalorder %s32, 1
      %p386 = scmp.ne.s32.totalorder %s381, %s383
      %p387 = scmp.eq.s32.totalorder %s32, 0
      %p388 = por %p386, %p387
      %p389 = scmp.ne.s32.totalorder %s381, %s383
      %p390 = scmp.eq.s32.totalorder %s37, 1
      %p391 = por %p389, %p390
      %p392 = scmp.ne.s32.totalorder %s383, %s384
      %p393 = scmp.eq.s32.totalorder %s37, 0
      %p394 = por %p392, %p393
      %p395 = scmp.ne.s32.totalorder %s383, %s384
      %p396 = scmp.eq.s32.totalorder %s38, 1
      %p397 = por %p395, %p396
      %p399 = scmp.ne.s32.totalorder %s384, %s398
      %p400 = scmp.eq.s32.totalorder %s38, 0
      %p401 = por %p399, %p400
      %s403 = sadd.s32 %s402, 1
      %p406 = scmp.eq.s32.totalorder %s32, 1
      %p407 = scmp.ne.s32.totalorder %s402, %s404
      %p408 = scmp.eq.s32.totalorder %s32, 0
      %p409 = por %p407, %p408
      %p410 = scmp.ne.s32.totalorder %s402, %s404
      %p411 = scmp.eq.s32.totalorder %s37, 1
      %p412 = por %p410, %p411
      %p413 = scmp.ne.s32.totalorder %s404, %s405
      %p414 = scmp.eq.s32.totalorder %s37, 0
      %p415 = por %p413, %p414
      %p416 = scmp.ne.s32.totalorder %s404, %s405
      %p417 = scmp.eq.s32.totalorder %s38, 1
      %p418 = por %p416, %p417
      %p420 = scmp.ne.s32.totalorder %s405, %s419
      %p421 = scmp.eq.s32.totalorder %s38, 0
      %p422 = por %p420, %p421
      %s424 = sadd.s32 %s423, 1
      %p427 = scmp.eq.s32.totalorder %s32, 1
      %p428 = scmp.ne.s32.totalorder %s423, %s425
      %p429 = scmp.eq.s32.totalorder %s32, 0
      %p430 = por %p428, %p429
      %p431 = scmp.ne.s32.totalorder %s423, %s425
      %p432 = scmp.eq.s32.totalorder %s37, 1
      %p433 = por %p431, %p432
      %p434 = scmp.ne.s32.totalorder %s425, %s426
      %p435 = scmp.eq.s32.totalorder %s37, 0
      %p436 = por %p434, %p435
      %p437 = scmp.ne.s32.totalorder %s425, %s426
      %p438 = scmp.eq.s32.totalorder %s38, 1
      %p439 = por %p437, %p438
      %p441 = scmp.ne.s32.totalorder %s426, %s440
      %p442 = scmp.eq.s32.totalorder %s38, 0
      %p443 = por %p441, %p442
      %s445 = sadd.s32 %s444, 1
      %p448 = scmp.eq.s32.totalorder %s32, 1
      %p449 = scmp.ne.s32.totalorder %s444, %s446
      %p450 = scmp.eq.s32.totalorder %s32, 0
      %p451 = por %p449, %p450
      %p452 = scmp.ne.s32.totalorder %s444, %s446
      %p453 = scmp.eq.s32.totalorder %s37, 1
      %p454 = por %p452, %p453
      %p455 = scmp.ne.s32.totalorder %s446, %s447
      %p456 = scmp.eq.s32.totalorder %s37, 0
      %p457 = por %p455, %p456
      %p458 = scmp.ne.s32.totalorder %s446, %s447
      %p459 = scmp.eq.s32.totalorder %s38, 1
      %p460 = por %p458, %p459
      %p462 = scmp.ne.s32.totalorder %s447, %s461
      %p463 = scmp.eq.s32.totalorder %s38, 0
      %p464 = por %p462, %p463
      %s466 = sadd.s32 %s465, 1
      %p469 = scmp.eq.s32.totalorder %s32, 1
      %p470 = scmp.ne.s32.totalorder %s465, %s467
      %p471 = scmp.eq.s32.totalorder %s32, 0
      %p472 = por %p470, %p471
      %p473 = scmp.ne.s32.totalorder %s465, %s467
      %p474 = scmp.eq.s32.totalorder %s37, 1
      %p475 = por %p473, %p474
      %p476 = scmp.ne.s32.totalorder %s467, %s468
      %p477 = scmp.eq.s32.totalorder %s37, 0
      %p478 = por %p476, %p477
      %p479 = scmp.ne.s32.totalorder %s467, %s468
      %p480 = scmp.eq.s32.totalorder %s38, 1
      %p481 = por %p479, %p480
      %p483 = scmp.ne.s32.totalorder %s468, %s482
      %p484 = scmp.eq.s32.totalorder %s38, 0
      %p485 = por %p483, %p484
      %s487 = sadd.s32 %s486, 1
      %p490 = scmp.eq.s32.totalorder %s32, 1
      %p491 = scmp.ne.s32.totalorder %s486, %s488
      %p492 = scmp.eq.s32.totalorder %s32, 0
      %p493 = por %p491, %p492
      %p494 = scmp.ne.s32.totalorder %s486, %s488
      %p495 = scmp.eq.s32.totalorder %s37, 1
      %p496 = por %p494, %p495
      %p497 = scmp.ne.s32.totalorder %s488, %s489
      %p498 = scmp.eq.s32.totalorder %s37, 0
      %p499 = por %p497, %p498
      %p500 = scmp.ne.s32.totalorder %s488, %s489
      %p501 = scmp.eq.s32.totalorder %s38, 1
      %p502 = por %p500, %p501
      %p504 = scmp.ne.s32.totalorder %s489, %s503
      %p505 = scmp.eq.s32.totalorder %s38, 0
      %p506 = por %p504, %p505
      %s508 = sadd.s32 %s507, 1
      %p511 = scmp.eq.s32.totalorder %s32, 1
      %p512 = scmp.ne.s32.totalorder %s507, %s509
      %p513 = scmp.eq.s32.totalorder %s32, 0
      %p514 = por %p512, %p513
      %p515 = scmp.ne.s32.totalorder %s507, %s509
      %p516 = scmp.eq.s32.totalorder %s37, 1
      %p517 = por %p515, %p516
      %p518 = scmp.ne.s32.totalorder %s509, %s510
      %p519 = scmp.eq.s32.totalorder %s37, 0
      %p520 = por %p518, %p519
      %p521 = scmp.ne.s32.totalorder %s509, %s510
      %p522 = scmp.eq.s32.totalorder %s38, 1
      %p523 = por %p521, %p522
      %p525 = scmp.ne.s32.totalorder %s510, %s524
      %p526 = scmp.eq.s32.totalorder %s38, 0
      %p527 = por %p525, %p526
      %s528 = ssub.s32 %s32, %s39
      %p529 = scmp.eq.s32.totalorder %s528, 0
      %s531 = sadd.s32 %s530, 1
      %s532 = scalar_select %p529, %s530, %s531
      %p535 = pneg %p529
      %p536 = scmp.eq.s32.totalorder %s32, 1
      %p537 = por %p535, %p536
      %p538 = scmp.ne.s32.totalorder %s530, %s533
      %p539 = scmp.eq.s32.totalorder %s32, 0
      %p540 = por %p538, %p539
      %p541 = scmp.ne.s32.totalorder %s530, %s533
      %p542 = scmp.eq.s32.totalorder %s37, 1
      %p543 = por %p541, %p542
      %p544 = scmp.ne.s32.totalorder %s533, %s534
      %p545 = scmp.eq.s32.totalorder %s37, 0
      %p546 = por %p544, %p545
      %p547 = scmp.ne.s32.totalorder %s533, %s534
      %p548 = scmp.eq.s32.totalorder %s38, 1
      %p549 = por %p547, %p548
      %p551 = scmp.ne.s32.totalorder %s534, %s550
      %p552 = scmp.eq.s32.totalorder %s38, 0
      %p553 = por %p551, %p552
      %p554 = scmp.le.s32.totalorder 1, %s32
      %p555 = scmp.lt.s32.totalorder %s32, 3
      %p556 = pnand %p554, %p555
      %p557 = pneg %p556
      // Predicated region
      $region9: #{dpcnn_forward.1} parent=5 // pred_check
        _
      $region10: #{dpcnn_forward.1} parent=5 // pred_check_branch
        %559 = sbr.rel (%p556) target = $region12
      $region11: #{dpcnn_forward.1} parent=5 // pred_region
        %s560 = ssub.s32 %s32, 1
        // Predicated region
        $region13: #{dpcnn_forward.1} parent=11 // pred_check
          %p561 = pneg %p79
        $region14: #{dpcnn_forward.1} parent=11 // pred_check_branch
          %563 = sbr.rel (%p561) target = $region16
        $region15: #{dpcnn_forward.1} parent=11 // pred_region
          _
        $region16: #{dpcnn_forward.1} parent=11 // pred_fallthru
          _
        // Predicated region
        $region17: #{dpcnn_forward.1} parent=11 // pred_check
          %p564 = pneg %p100
        $region18: #{dpcnn_forward.1} parent=11 // pred_check_branch
          %566 = sbr.rel (%p564) target = $region20
        $region19: #{dpcnn_forward.1} parent=11 // pred_region
          _
        $region20: #{dpcnn_forward.1} parent=11 // pred_fallthru
          _
        // Predicated region
        $region21: #{dpcnn_forward.1} parent=11 // pred_check
          %p567 = pneg %p121
        $region22: #{dpcnn_forward.1} parent=11 // pred_check_branch
          %569 = sbr.rel (%p567) target = $region24
        $region23: #{dpcnn_forward.1} parent=11 // pred_region
          _
        $region24: #{dpcnn_forward.1} parent=11 // pred_fallthru
          _
        // Predicated region
        $region25: #{dpcnn_forward.1} parent=11 // pred_check
          %p570 = pneg %p142
        $region26: #{dpcnn_forward.1} parent=11 // pred_check_branch
          %572 = sbr.rel (%p570) target = $region28
        $region27: #{dpcnn_forward.1} parent=11 // pred_region
          _
        $region28: #{dpcnn_forward.1} parent=11 // pred_fallthru
          _
        // Predicated region
        $region29: #{dpcnn_forward.1} parent=11 // pred_check
          %p573 = pneg %p163
        $region30: #{dpcnn_forward.1} parent=11 // pred_check_branch
          %575 = sbr.rel (%p573) target = $region32
        $region31: #{dpcnn_forward.1} parent=11 // pred_region
          _
        $region32: #{dpcnn_forward.1} parent=11 // pred_fallthru
          _
        // Predicated region
        $region33: #{dpcnn_forward.1} parent=11 // pred_check
          %p576 = pneg %p184
        $region34: #{dpcnn_forward.1} parent=11 // pred_check_branch
          %578 = sbr.rel (%p576) target = $region36
        $region35: #{dpcnn_forward.1} parent=11 // pred_region
          _
        $region36: #{dpcnn_forward.1} parent=11 // pred_fallthru
          _
        // Predicated region
        $region37: #{dpcnn_forward.1} parent=11 // pred_check
          %p579 = pneg %p205
        $region38: #{dpcnn_forward.1} parent=11 // pred_check_branch
          %581 = sbr.rel (%p579) target = $region40
        $region39: #{dpcnn_forward.1} parent=11 // pred_region
          _
        $region40: #{dpcnn_forward.1} parent=11 // pred_fallthru
          _
        // Predicated region
        $region41: #{dpcnn_forward.1} parent=11 // pred_check
          %p582 = pneg %p226
        $region42: #{dpcnn_forward.1} parent=11 // pred_check_branch
          %584 = sbr.rel (%p582) target = $region44
        $region43: #{dpcnn_forward.1} parent=11 // pred_region
          _
        $region44: #{dpcnn_forward.1} parent=11 // pred_fallthru
          _
        // Predicated region
        $region45: #{dpcnn_forward.1} parent=11 // pred_check
          %p585 = pneg %p247
        $region46: #{dpcnn_forward.1} parent=11 // pred_check_branch
          %587 = sbr.rel (%p585) target = $region48
        $region47: #{dpcnn_forward.1} parent=11 // pred_region
          _
        $region48: #{dpcnn_forward.1} parent=11 // pred_fallthru
          _
        // Predicated region
        $region49: #{dpcnn_forward.1} parent=11 // pred_check
          %p588 = pneg %p268
        $region50: #{dpcnn_forward.1} parent=11 // pred_check_branch
          %590 = sbr.rel (%p588) target = $region52
        $region51: #{dpcnn_forward.1} parent=11 // pred_region
          _
        $region52: #{dpcnn_forward.1} parent=11 // pred_fallthru
          _
        // Predicated region
        $region53: #{dpcnn_forward.1} parent=11 // pred_check
          %p591 = pneg %p289
        $region54: #{dpcnn_forward.1} parent=11 // pred_check_branch
          %593 = sbr.rel (%p591) target = $region56
        $region55: #{dpcnn_forward.1} parent=11 // pred_region
          _
        $region56: #{dpcnn_forward.1} parent=11 // pred_fallthru
          _
        // Predicated region
        $region57: #{dpcnn_forward.1} parent=11 // pred_check
          %p594 = pneg %p310
        $region58: #{dpcnn_forward.1} parent=11 // pred_check_branch
          %596 = sbr.rel (%p594) target = $region60
        $region59: #{dpcnn_forward.1} parent=11 // pred_region
          _
        $region60: #{dpcnn_forward.1} parent=11 // pred_fallthru
          _
        // Predicated region
        $region61: #{dpcnn_forward.1} parent=11 // pred_check
          %p597 = pneg %p331
        $region62: #{dpcnn_forward.1} parent=11 // pred_check_branch
          %599 = sbr.rel (%p597) target = $region64
        $region63: #{dpcnn_forward.1} parent=11 // pred_region
          _
        $region64: #{dpcnn_forward.1} parent=11 // pred_fallthru
          _
        // Predicated region
        $region65: #{dpcnn_forward.1} parent=11 // pred_check
          %p600 = pneg %p352
        $region66: #{dpcnn_forward.1} parent=11 // pred_check_branch
          %602 = sbr.rel (%p600) target = $region68
        $region67: #{dpcnn_forward.1} parent=11 // pred_region
          _
        $region68: #{dpcnn_forward.1} parent=11 // pred_fallthru
          _
        // Predicated region
        $region69: #{dpcnn_forward.1} parent=11 // pred_check
          %p603 = pneg %p373
        $region70: #{dpcnn_forward.1} parent=11 // pred_check_branch
          %605 = sbr.rel (%p603) target = $region72
        $region71: #{dpcnn_forward.1} parent=11 // pred_region
          _
        $region72: #{dpcnn_forward.1} parent=11 // pred_fallthru
          _
        // Predicated region
        $region73: #{dpcnn_forward.1} parent=11 // pred_check
          %p606 = pneg %p394
        $region74: #{dpcnn_forward.1} parent=11 // pred_check_branch
          %608 = sbr.rel (%p606) target = $region76
        $region75: #{dpcnn_forward.1} parent=11 // pred_region
          _
        $region76: #{dpcnn_forward.1} parent=11 // pred_fallthru
          _
        // Predicated region
        $region77: #{dpcnn_forward.1} parent=11 // pred_check
          %p609 = pneg %p415
        $region78: #{dpcnn_forward.1} parent=11 // pred_check_branch
          %611 = sbr.rel (%p609) target = $region80
        $region79: #{dpcnn_forward.1} parent=11 // pred_region
          _
        $region80: #{dpcnn_forward.1} parent=11 // pred_fallthru
          _
        // Predicated region
        $region81: #{dpcnn_forward.1} parent=11 // pred_check
          %p612 = pneg %p436
        $region82: #{dpcnn_forward.1} parent=11 // pred_check_branch
          %614 = sbr.rel (%p612) target = $region84
        $region83: #{dpcnn_forward.1} parent=11 // pred_region
          _
        $region84: #{dpcnn_forward.1} parent=11 // pred_fallthru
          _
        // Predicated region
        $region85: #{dpcnn_forward.1} parent=11 // pred_check
          %p615 = pneg %p457
        $region86: #{dpcnn_forward.1} parent=11 // pred_check_branch
          %617 = sbr.rel (%p615) target = $region88
        $region87: #{dpcnn_forward.1} parent=11 // pred_region
          _
        $region88: #{dpcnn_forward.1} parent=11 // pred_fallthru
          _
        // Predicated region
        $region89: #{dpcnn_forward.1} parent=11 // pred_check
          %p618 = pneg %p478
        $region90: #{dpcnn_forward.1} parent=11 // pred_check_branch
          %620 = sbr.rel (%p618) target = $region92
        $region91: #{dpcnn_forward.1} parent=11 // pred_region
          _
        $region92: #{dpcnn_forward.1} parent=11 // pred_fallthru
          _
        // Predicated region
        $region93: #{dpcnn_forward.1} parent=11 // pred_check
          %p621 = pneg %p499
        $region94: #{dpcnn_forward.1} parent=11 // pred_check_branch
          %623 = sbr.rel (%p621) target = $region96
        $region95: #{dpcnn_forward.1} parent=11 // pred_region
          _
        $region96: #{dpcnn_forward.1} parent=11 // pred_fallthru
          _
        // Predicated region
        $region97: #{dpcnn_forward.1} parent=11 // pred_check
          %p624 = pneg %p520
        $region98: #{dpcnn_forward.1} parent=11 // pred_check_branch
          %626 = sbr.rel (%p624) target = $region100
        $region99: #{dpcnn_forward.1} parent=11 // pred_region
          _
        $region100: #{dpcnn_forward.1} parent=11 // pred_fallthru
          _
      $region12: #{dpcnn_forward.1} parent=5 // pred_fallthru
        _
      %p627 = scmp.lt.s32.totalorder %s32, 2
      // Predicated region
      $region101: #{dpcnn_forward.1} parent=5 // pred_check
        %p628 = pneg %p627
      $region102: #{dpcnn_forward.1} parent=5 // pred_check_branch
        %630 = sbr.rel (%p628) target = $region104
      $region103: #{dpcnn_forward.1} parent=5 // pred_region
        // Predicated region
        $region105: #{dpcnn_forward.1} parent=103 // pred_check
          %p631 = pneg %p52
        $region106: #{dpcnn_forward.1} parent=103 // pred_check_branch
          %633 = sbr.rel (%p631) target = $region108
        $region107: #{dpcnn_forward.1} parent=103 // pred_region
          %p634 = scmp.lt.s32.totalorder %s32, 1
          %s635 = scalar_select %p634, %s32, 1
          %s636 = smul.addr %s635, 2
          %s637 = smul.addr %s636, 8
          %s638 = scalar_lea.vmem %s0, %s637
        $region108: #{dpcnn_forward.1} parent=103 // pred_fallthru
          _
      $region104: #{dpcnn_forward.1} parent=5 // pred_fallthru
        _
      %p639 = scmp.le.s32.totalorder 1, %s32
      %p640 = scmp.lt.s32.totalorder %s32, 3
      %p641 = pnand %p639, %p640
      %p642 = pneg %p641
      // Predicated region
      $region109: #{dpcnn_forward.1} parent=5 // pred_check
        _
      $region110: #{dpcnn_forward.1} parent=5 // pred_check_branch
        %644 = sbr.rel (%p641) target = $region112
      $region111: #{dpcnn_forward.1} parent=5 // pred_region
        %s645 = ssub.s32 %s32, 1
        %p646 = scmp.lt.s32.totalorder %s37, 1
        %s647 = scalar_select %p646, %s37, 1
        %s648 = smul.addr %s647, 2
        %s649 = smul.addr %s648, 8
        %s650 = scalar_lea.vmem %s0, %s649
        %p651 = pneg %p58
        %p652 = pneg %p55
        %p653 = pneg %p79
        %p654 = pneg %p76
        %p655 = pneg %p100
        %p656 = pneg %p97
        %p657 = pneg %p121
        %p658 = pneg %p118
        %p659 = pneg %p142
        %p660 = pneg %p139
        %p661 = pneg %p163
        %p662 = pneg %p160
        %p663 = pneg %p184
        %p664 = pneg %p181
        %p665 = pneg %p205
        %p666 = pneg %p202
        %p667 = pneg %p226
        %p668 = pneg %p223
        %p669 = pneg %p247
        %p670 = pneg %p244
        %p671 = pneg %p268
        %p672 = pneg %p265
        %p673 = pneg %p289
        %p674 = pneg %p286
        %p675 = pneg %p310
        %p676 = pneg %p307
        %p677 = pneg %p331
        %p678 = pneg %p328
        %p679 = pneg %p352
        %p680 = pneg %p349
        %p681 = pneg %p373
        %p682 = pneg %p370
        %p683 = pneg %p394
        %p684 = pneg %p391
        %p685 = pneg %p415
        %p686 = pneg %p412
        %p687 = pneg %p436
        %p688 = pneg %p433
        %p689 = pneg %p457
        %p690 = pneg %p454
        %p691 = pneg %p478
        %p692 = pneg %p475
        %p693 = pneg %p499
        %p694 = pneg %p496
        %p695 = pneg %p520
        %p696 = pneg %p517
        %p697 = pneg %p546
        %p698 = pneg %p543
        %s699 = sand.u32 %s533, 1
        %s700 = scalar_lea.sflag [#allocation4], %s699
        %s701 = sand.u32 %s533, 1
        %s702 = scalar_lea.vmem [#allocation3], %s701
        %p703 = scmp.lt.s32.totalorder %s37, 1
        %s704 = scalar_select %p703, %s37, 1
        %s705 = smul.addr %s704, 2
        %s706 = smul.addr %s705, 8
        %s707 = scalar_lea.vmem %s0, %s706
        %v708 = vld [vmem:[%s707] sm:$0xff]
        %v709 = vld [vmem:[%s707 + $0x8] sm:$0xff]
        %v710 = vld [vmem:[%s1] sm:$0xff]
        %v711 = vld [vmem:[%s1 + $0x8] sm:$0xff]
        %v712 = vld [vmem:[%s1 + $0x10] sm:$0xff]
        %v713 = vld [vmem:[%s1 + $0x18] sm:$0xff]
        %v714 = vld [vmem:[%s1 + $0x20] sm:$0xff]
        %v715 = vld [vmem:[%s1 + $0x28] sm:$0xff]
        %v716 = vld [vmem:[%s1 + $0x30] sm:$0xff]
        %v717 = vld [vmem:[%s1 + $0x38] sm:$0xff]
        %v718 = vld [vmem:[%s1 + $0x40] sm:$0xff]
        %v719 = vld [vmem:[%s1 + $0x48] sm:$0xff]
        %v720 = vld [vmem:[%s1 + $0x50] sm:$0xff]
        %v721 = vld [vmem:[%s1 + $0x58] sm:$0xff]
        %v722 = vld [vmem:[%s1 + $0x60] sm:$0xff]
        %v723 = vld [vmem:[%s1 + $0x68] sm:$0xff]
        %v724 = vld [vmem:[%s1 + $0x70] sm:$0xff]
        %v725 = vld [vmem:[%s1 + $0x78] sm:$0xff]
        %v726 = vld [vmem:[%s1 + $0x80] sm:$0xff]
        %v727 = vld [vmem:[%s1 + $0x88] sm:$0xff]
        %v728 = vld [vmem:[%s1 + $0x90] sm:$0xff]
        %v729 = vld [vmem:[%s1 + $0x98] sm:$0xff]
        %v730 = vld [vmem:[%s1 + $0xa0] sm:$0xff]
        %v731 = vld [vmem:[%s1 + $0xa8] sm:$0xff]
        %v732 = vld [vmem:[%s1 + $0xb0] sm:$0xff]
        %v733 = vld [vmem:[%s1 + $0xb8] sm:$0xff]
        %v734 = vld [vmem:[%s1 + $0xc0] sm:$0xff]
        %v735 = vld [vmem:[%s1 + $0xc8] sm:$0xff]
        %v736 = vld [vmem:[%s1 + $0xd0] sm:$0xff]
        %v737 = vld [vmem:[%s1 + $0xd8] sm:$0xff]
        %v738 = vld [vmem:[%s1 + $0xe0] sm:$0xff]
        %v739 = vld [vmem:[%s1 + $0xe8] sm:$0xff]
        %v740 = vld [vmem:[%s1 + $0xf0] sm:$0xff]
        %v741 = vld [vmem:[%s1 + $0xf8] sm:$0xff]
        %v742 = vld [vmem:[%s1 + $0x100] sm:$0xff]
        %v743 = vld [vmem:[%s1 + $0x108] sm:$0xff]
        %v744 = vld [vmem:[%s1 + $0x110] sm:$0xff]
        %v745 = vld [vmem:[%s1 + $0x118] sm:$0xff]
        %v746 = vld [vmem:[%s1 + $0x120] sm:$0xff]
        %v747 = vld [vmem:[%s1 + $0x128] sm:$0xff]
        %v748 = vld [vmem:[%s1 + $0x130] sm:$0xff]
        %v749 = vld [vmem:[%s1 + $0x138] sm:$0xff]
        %v750 = vld [vmem:[%s1 + $0x140] sm:$0xff]
        %v751 = vld [vmem:[%s1 + $0x148] sm:$0xff]
        %v752 = vld [vmem:[%s1 + $0x150] sm:$0xff]
        %v753 = vld [vmem:[%s1 + $0x158] sm:$0xff]
        %v754 = vld [vmem:[%s1 + $0x160] sm:$0xff]
        %v755 = vld [vmem:[%s1 + $0x168] sm:$0xff]
        %v756 = vld [vmem:[%s1 + $0x170] sm:$0xff]
        %v757 = vld [vmem:[%s1 + $0x178] sm:$0xff]
        %v758 = vld [vmem:[%s2] sm:$0x1]
        %759 = vst [vmem:[#allocation2 + $0x7] sm:$0x1] 0.0
        %760 = vst [vmem:[#allocation2 + $0x8] sm:$0xff] %v708
        %761 = vst [vmem:[#allocation2 + $0x10] sm:$0xff] %v709
        %762 = vst [vmem:[#allocation2 + $0x18] sm:$0x1] 0.0
        %v763 = vld [vmem:[#allocation2 + $0x7] sm:$0xff]
        %v764 = vld [vmem:[#allocation2 + $0xf] sm:$0xff]
        %v765 = vld [vmem:[#allocation2 + $0x9] sm:$0xff]
        %v766 = vld [vmem:[#allocation2 + $0x11] sm:$0xff]
        %v768 = vlaneseq
        %v769 = vshrl.u32 %v768, 7
        %v770 = vsub.s32 0, %v769
        %v771 = vrot.slane %v758, %v770
        %773 = vmatprep.subr.mxu0 0.0
        %774 = vmatpush1.msra.mxu0 %v710
        %775 = vmatprep.subr.mxu0 0.0
        %776 = vmatpush1.msra.mxu0 %v711
        %777 = vmatprep.subr.mxu0 0.0
        %778 = vmatpush1.msra.mxu0 %v712
        %779 = vmatprep.subr.mxu0 0.0
        %780 = vmatpush1.msra.mxu0 %v713
        %781 = vmatprep.subr.mxu0 0.0
        %782 = vmatpush1.msra.mxu0 %v714
        %783 = vmatprep.subr.mxu0 0.0
        %784 = vmatpush1.msra.mxu0 %v715
        %785 = vmatprep.subr.mxu0 0.0
        %786 = vmatpush1.msra.mxu0 %v716
        %787 = vmatprep.subr.mxu0 0.0
        %788 = vmatpush1.msra.mxu0 %v717
        %789 = vmatprep.subr.mxu0 0.0
        %790 = vmatpush1.msra.mxu0 %v718
        %791 = vmatprep.subr.mxu0 0.0
        %792 = vmatpush1.msra.mxu0 %v719
        %793 = vmatprep.subr.mxu0 0.0
        %794 = vmatpush1.msra.mxu0 %v720
        %795 = vmatprep.subr.mxu0 0.0
        %796 = vmatpush1.msra.mxu0 %v721
        %797 = vmatprep.subr.mxu0 0.0
        %798 = vmatpush1.msra.mxu0 %v722
        %799 = vmatprep.subr.mxu0 0.0
        %800 = vmatpush1.msra.mxu0 %v723
        %801 = vmatprep.subr.mxu0 0.0
        %802 = vmatpush1.msra.mxu0 %v724
        %803 = vmatprep.subr.mxu0 0.0
        %804 = vmatpush1.msra.mxu0 %v725
        %805 = vmatprep.subr.mxu0 0.0
        %806 = vmatpush1.msra.mxu0 %v726
        %807 = vmatprep.subr.mxu0 0.0
        %808 = vmatpush1.msra.mxu0 %v727
        %809 = vmatprep.subr.mxu0 0.0
        %810 = vmatpush1.msra.mxu0 %v728
        %811 = vmatprep.subr.mxu0 0.0
        %812 = vmatpush1.msra.mxu0 %v729
        %813 = vmatprep.subr.mxu0 0.0
        %814 = vmatpush1.msra.mxu0 %v730
        %815 = vmatprep.subr.mxu0 0.0
        %816 = vmatpush1.msra.mxu0 %v731
        %817 = vmatprep.subr.mxu0 0.0
        %818 = vmatpush1.msra.mxu0 %v732
        %819 = vmatprep.subr.mxu0 0.0
        %820 = vmatpush1.msra.mxu0 %v733
        %821 = vmatprep.subr.mxu0 0.0
        %822 = vmatpush1.msra.mxu0 %v734
        %823 = vmatprep.subr.mxu0 0.0
        %824 = vmatpush1.msra.mxu0 %v735
        %825 = vmatprep.subr.mxu0 0.0
        %826 = vmatpush1.msra.mxu0 %v736
        %827 = vmatprep.subr.mxu0 0.0
        %828 = vmatpush1.msra.mxu0 %v737
        %829 = vmatprep.subr.mxu0 0.0
        %830 = vmatpush1.msra.mxu0 %v738
        %831 = vmatprep.subr.mxu0 0.0
        %832 = vmatpush1.msra.mxu0 %v739
        %833 = vmatprep.subr.mxu0 0.0
        %834 = vmatpush1.msra.mxu0 %v740
        %835 = vmatprep.subr.mxu0 0.0
        %836 = vmatpush1.msra.mxu0 %v741
        %837 = vmatprep.mubr.f32.mxu0 %v708
        %838 = vmatmul.mubr.f32.gmra.mrb[0].mxu0 %v763
        %v839 = vpop.f32.mrb[0].mxu0
        %v840 = vadd.f32 %v771, %v839
        %v841 = vpop.f32.mrb[0].mxu0
        %842 = vmatprep.mubr.f32.mxu0 %v709
        %843 = vmatmul.mubr.f32.gmra.mrb[0].mxu0 %v764
        %v844 = vpop.f32.mrb[0].mxu0
        %v845 = vadd.f32 %v771, %v844
        %v846 = vpop.f32.mrb[0].mxu0
        %847 = vdwg.mxu0
        %848 = vmatprep.subr.mxu0 0.0
        %849 = vmatpush1.msra.mxu0 %v742
        %850 = vmatprep.subr.mxu0 0.0
        %851 = vmatpush1.msra.mxu0 %v743
        %852 = vmatprep.subr.mxu0 0.0
        %853 = vmatpush1.msra.mxu0 %v744
        %854 = vmatprep.subr.mxu0 0.0
        %855 = vmatpush1.msra.mxu0 %v745
        %856 = vmatprep.subr.mxu0 0.0
        %857 = vmatpush1.msra.mxu0 %v746
        %858 = vmatprep.subr.mxu0 0.0
        %859 = vmatpush1.msra.mxu0 %v747
        %860 = vmatprep.subr.mxu0 0.0
        %861 = vmatpush1.msra.mxu0 %v748
        %862 = vmatprep.subr.mxu0 0.0
        %863 = vmatpush1.msra.mxu0 %v749
        %864 = vmatprep.subr.mxu0 0.0
        %865 = vmatpush1.msra.mxu0 %v750
        %866 = vmatprep.subr.mxu0 0.0
        %867 = vmatpush1.msra.mxu0 %v751
        %868 = vmatprep.subr.mxu0 0.0
        %869 = vmatpush1.msra.mxu0 %v752
        %870 = vmatprep.subr.mxu0 0.0
        %871 = vmatpush1.msra.mxu0 %v753
        %872 = vmatprep.subr.mxu0 0.0
        %873 = vmatpush1.msra.mxu0 %v754
        %874 = vmatprep.subr.mxu0 0.0
        %875 = vmatpush1.msra.mxu0 %v755
        %876 = vmatprep.subr.mxu0 0.0
        %877 = vmatpush1.msra.mxu0 %v756
        %878 = vmatprep.subr.mxu0 0.0
        %879 = vmatpush1.msra.mxu0 %v757
        %880 = vmatprep.subr.mxu0 0.0
        %881 = vmatpush1.msra.mxu0 0.0
        %882 = vmatprep.subr.mxu0 0.0
        %883 = vmatpush1.msra.mxu0 0.0
        %884 = vmatprep.subr.mxu0 0.0
        %885 = vmatpush1.msra.mxu0 0.0
        %886 = vmatprep.subr.mxu0 0.0
        %887 = vmatpush1.msra.mxu0 0.0
        %888 = vmatprep.subr.mxu0 0.0
        %889 = vmatpush1.msra.mxu0 0.0
        %890 = vmatprep.subr.mxu0 0.0
        %891 = vmatpush1.msra.mxu0 0.0
        %892 = vmatprep.subr.mxu0 0.0
        %893 = vmatpush1.msra.mxu0 0.0
        %894 = vmatprep.subr.mxu0 0.0
        %895 = vmatpush1.msra.mxu0 0.0
        %896 = vmatprep.subr.mxu0 0.0
        %897 = vmatpush1.msra.mxu0 0.0
        %898 = vmatprep.subr.mxu0 0.0
        %899 = vmatpush1.msra.mxu0 0.0
        %900 = vmatprep.subr.mxu0 0.0
        %901 = vmatpush1.msra.mxu0 0.0
        %902 = vmatprep.subr.mxu0 0.0
        %903 = vmatpush1.msra.mxu0 0.0
        %904 = vmatprep.subr.mxu0 0.0
        %905 = vmatpush1.msra.mxu0 0.0
        %906 = vmatprep.subr.mxu0 0.0
        %907 = vmatpush1.msra.mxu0 0.0
        %908 = vmatprep.subr.mxu0 0.0
        %909 = vmatpush1.msra.mxu0 0.0
        %910 = vmatprep.subr.mxu0 0.0
        %911 = vmatpush1.msra.mxu0 0.0
        %912 = vmatprep.mubr.f32.mxu0 0.0
        %913 = vmatmul.mubr.f32.gmra.mrb[0].mxu0 %v765
        %v914 = vpop.f32.mrb[0].mxu0
        %v915 = vadd.f32 %v840, %v914
        %v916 = vpop.f32.mrb[0].mxu0
        %917 = vmatprep.mubr.f32.mxu0 0.0
        %918 = vmatmul.mubr.f32.gmra.mrb[0].mxu0 %v766
        %v919 = vpop.f32.mrb[0].mxu0
        %v920 = vadd.f32 %v845, %v919
        %v921 = vpop.f32.mrb[0].mxu0
        %922 = vdwg.mxu0
        %v923 = vmax.f32 %v915, 0.0
        %v924 = vmax.f32 %v920, 0.0
        %v925 = vld [vmem:[%s3] sm:$0x1]
        %v927 = vlaneseq
        %v928 = vshrl.u32 %v927, 7
        %v929 = vsub.s32 0, %v928
        %v930 = vrot.slane %v925, %v929
        %v932 = vmul.f32 %v923, %v930
        %v933 = vmul.f32 %v924, %v930
        %v934 = vld [vmem:[%s4] sm:$0x1]
        %v936 = vlaneseq
        %v937 = vshrl.u32 %v936, 7
        %v938 = vsub.s32 0, %v937
        %v939 = vrot.slane %v934, %v938
        %v941 = vadd.f32 %v932, %v939
        %v942 = vadd.f32 %v933, %v939
        %v943 = vmax.f32 %v941, 0.0
        %v944 = vmax.f32 %v942, 0.0
        %v945 = vld [vmem:[%s5] sm:$0xff]
        %v946 = vld [vmem:[%s5 + $0x8] sm:$0xff]
        %v947 = vld [vmem:[%s5 + $0x10] sm:$0xff]
        %v948 = vld [vmem:[%s5 + $0x18] sm:$0xff]
        %v949 = vld [vmem:[%s5 + $0x20] sm:$0xff]
        %v950 = vld [vmem:[%s5 + $0x28] sm:$0xff]
        %v951 = vld [vmem:[%s5 + $0x30] sm:$0xff]
        %v952 = vld [vmem:[%s5 + $0x38] sm:$0xff]
        %v953 = vld [vmem:[%s5 + $0x40] sm:$0xff]
        %v954 = vld [vmem:[%s5 + $0x48] sm:$0xff]
        %v955 = vld [vmem:[%s5 + $0x50] sm:$0xff]
        %v956 = vld [vmem:[%s5 + $0x58] sm:$0xff]
        %v957 = vld [vmem:[%s5 + $0x60] sm:$0xff]
        %v958 = vld [vmem:[%s5 + $0x68] sm:$0xff]
        %v959 = vld [vmem:[%s5 + $0x70] sm:$0xff]
        %v960 = vld [vmem:[%s5 + $0x78] sm:$0xff]
        %v961 = vld [vmem:[%s5 + $0x80] sm:$0xff]
        %v962 = vld [vmem:[%s5 + $0x88] sm:$0xff]
        %v963 = vld [vmem:[%s5 + $0x90] sm:$0xff]
        %v964 = vld [vmem:[%s5 + $0x98] sm:$0xff]
        %v965 = vld [vmem:[%s5 + $0xa0] sm:$0xff]
        %v966 = vld [vmem:[%s5 + $0xa8] sm:$0xff]
        %v967 = vld [vmem:[%s5 + $0xb0] sm:$0xff]
        %v968 = vld [vmem:[%s5 + $0xb8] sm:$0xff]
        %v969 = vld [vmem:[%s5 + $0xc0] sm:$0xff]
        %v970 = vld [vmem:[%s5 + $0xc8] sm:$0xff]
        %v971 = vld [vmem:[%s5 + $0xd0] sm:$0xff]
        %v972 = vld [vmem:[%s5 + $0xd8] sm:$0xff]
        %v973 = vld [vmem:[%s5 + $0xe0] sm:$0xff]
        %v974 = vld [vmem:[%s5 + $0xe8] sm:$0xff]
        %v975 = vld [vmem:[%s5 + $0xf0] sm:$0xff]
        %v976 = vld [vmem:[%s5 + $0xf8] sm:$0xff]
        %v977 = vld [vmem:[%s5 + $0x100] sm:$0xff]
        %v978 = vld [vmem:[%s5 + $0x108] sm:$0xff]
        %v979 = vld [vmem:[%s5 + $0x110] sm:$0xff]
        %v980 = vld [vmem:[%s5 + $0x118] sm:$0xff]
        %v981 = vld [vmem:[%s5 + $0x120] sm:$0xff]
        %v982 = vld [vmem:[%s5 + $0x128] sm:$0xff]
        %v983 = vld [vmem:[%s5 + $0x130] sm:$0xff]
        %v984 = vld [vmem:[%s5 + $0x138] sm:$0xff]
        %v985 = vld [vmem:[%s5 + $0x140] sm:$0xff]
        %v986 = vld [vmem:[%s5 + $0x148] sm:$0xff]
        %v987 = vld [vmem:[%s5 + $0x150] sm:$0xff]
        %v988 = vld [vmem:[%s5 + $0x158] sm:$0xff]
        %v989 = vld [vmem:[%s5 + $0x160] sm:$0xff]
        %v990 = vld [vmem:[%s5 + $0x168] sm:$0xff]
        %v991 = vld [vmem:[%s5 + $0x170] sm:$0xff]
        %v992 = vld [vmem:[%s5 + $0x178] sm:$0xff]
        %v993 = vld [vmem:[%s6] sm:$0x1]
        %994 = vst [vmem:[#allocation2 + $0x7] sm:$0x1] 0.0
        %995 = vst [vmem:[#allocation2 + $0x8] sm:$0xff] %v943
        %996 = vst [vmem:[#allocation2 + $0x10] sm:$0xff] %v944
        %997 = vst [vmem:[#allocation2 + $0x18] sm:$0x1] 0.0
        %v998 = vld [vmem:[#allocation2 + $0x7] sm:$0xff]
        %v999 = vld [vmem:[#allocation2 + $0xf] sm:$0xff]
        %v1000 = vld [vmem:[#allocation2 + $0x9] sm:$0xff]
        %v1001 = vld [vmem:[#allocation2 + $0x11] sm:$0xff]
        %v1003 = vlaneseq
        %v1004 = vshrl.u32 %v1003, 7
        %v1005 = vsub.s32 0, %v1004
        %v1006 = vrot.slane %v993, %v1005
        %1008 = vmatprep.subr.mxu0 0.0
        %1009 = vmatpush1.msra.mxu0 %v945
        %1010 = vmatprep.subr.mxu0 0.0
        %1011 = vmatpush1.msra.mxu0 %v946
        %1012 = vmatprep.subr.mxu0 0.0
        %1013 = vmatpush1.msra.mxu0 %v947
        %1014 = vmatprep.subr.mxu0 0.0
        %1015 = vmatpush1.msra.mxu0 %v948
        %1016 = vmatprep.subr.mxu0 0.0
        %1017 = vmatpush1.msra.mxu0 %v949
        %1018 = vmatprep.subr.mxu0 0.0
        %1019 = vmatpush1.msra.mxu0 %v950
        %1020 = vmatprep.subr.mxu0 0.0
        %1021 = vmatpush1.msra.mxu0 %v951
        %1022 = vmatprep.subr.mxu0 0.0
        %1023 = vmatpush1.msra.mxu0 %v952
        %1024 = vmatprep.subr.mxu0 0.0
        %1025 = vmatpush1.msra.mxu0 %v953
        %1026 = vmatprep.subr.mxu0 0.0
        %1027 = vmatpush1.msra.mxu0 %v954
        %1028 = vmatprep.subr.mxu0 0.0
        %1029 = vmatpush1.msra.mxu0 %v955
        %1030 = vmatprep.subr.mxu0 0.0
        %1031 = vmatpush1.msra.mxu0 %v956
        %1032 = vmatprep.subr.mxu0 0.0
        %1033 = vmatpush1.msra.mxu0 %v957
        %1034 = vmatprep.subr.mxu0 0.0
        %1035 = vmatpush1.msra.mxu0 %v958
        %1036 = vmatprep.subr.mxu0 0.0
        %1037 = vmatpush1.msra.mxu0 %v959
        %1038 = vmatprep.subr.mxu0 0.0
        %1039 = vmatpush1.msra.mxu0 %v960
        %1040 = vmatprep.subr.mxu0 0.0
        %1041 = vmatpush1.msra.mxu0 %v961
        %1042 = vmatprep.subr.mxu0 0.0
        %1043 = vmatpush1.msra.mxu0 %v962
        %1044 = vmatprep.subr.mxu0 0.0
        %1045 = vmatpush1.msra.mxu0 %v963
        %1046 = vmatprep.subr.mxu0 0.0
        %1047 = vmatpush1.msra.mxu0 %v964
        %1048 = vmatprep.subr.mxu0 0.0
        %1049 = vmatpush1.msra.mxu0 %v965
        %1050 = vmatprep.subr.mxu0 0.0
        %1051 = vmatpush1.msra.mxu0 %v966
        %1052 = vmatprep.subr.mxu0 0.0
        %1053 = vmatpush1.msra.mxu0 %v967
        %1054 = vmatprep.subr.mxu0 0.0
        %1055 = vmatpush1.msra.mxu0 %v968
        %1056 = vmatprep.subr.mxu0 0.0
        %1057 = vmatpush1.msra.mxu0 %v969
        %1058 = vmatprep.subr.mxu0 0.0
        %1059 = vmatpush1.msra.mxu0 %v970
        %1060 = vmatprep.subr.mxu0 0.0
        %1061 = vmatpush1.msra.mxu0 %v971
        %1062 = vmatprep.subr.mxu0 0.0
        %1063 = vmatpush1.msra.mxu0 %v972
        %1064 = vmatprep.subr.mxu0 0.0
        %1065 = vmatpush1.msra.mxu0 %v973
        %1066 = vmatprep.subr.mxu0 0.0
        %1067 = vmatpush1.msra.mxu0 %v974
        %1068 = vmatprep.subr.mxu0 0.0
        %1069 = vmatpush1.msra.mxu0 %v975
        %1070 = vmatprep.subr.mxu0 0.0
        %1071 = vmatpush1.msra.mxu0 %v976
        %1072 = vmatprep.mubr.f32.mxu0 %v943
        %1073 = vmatmul.mubr.f32.gmra.mrb[0].mxu0 %v998
        %v1074 = vpop.f32.mrb[0].mxu0
        %v1075 = vadd.f32 %v1006, %v1074
        %v1076 = vpop.f32.mrb[0].mxu0
        %1077 = vmatprep.mubr.f32.mxu0 %v944
        %1078 = vmatmul.mubr.f32.gmra.mrb[0].mxu0 %v999
        %v1079 = vpop.f32.mrb[0].mxu0
        %v1080 = vadd.f32 %v1006, %v1079
        %v1081 = vpop.f32.mrb[0].mxu0
        %1082 = vdwg.mxu0
        %1083 = vmatprep.subr.mxu0 0.0
        %1084 = vmatpush1.msra.mxu0 %v977
        %1085 = vmatprep.subr.mxu0 0.0
        %1086 = vmatpush1.msra.mxu0 %v978
        %1087 = vmatprep.subr.mxu0 0.0
        %1088 = vmatpush1.msra.mxu0 %v979
        %1089 = vmatprep.subr.mxu0 0.0
        %1090 = vmatpush1.msra.mxu0 %v980
        %1091 = vmatprep.subr.mxu0 0.0
        %1092 = vmatpush1.msra.mxu0 %v981
        %1093 = vmatprep.subr.mxu0 0.0
        %1094 = vmatpush1.msra.mxu0 %v982
        %1095 = vmatprep.subr.mxu0 0.0
        %1096 = vmatpush1.msra.mxu0 %v983
        %1097 = vmatprep.subr.mxu0 0.0
        %1098 = vmatpush1.msra.mxu0 %v984
        %1099 = vmatprep.subr.mxu0 0.0
        %1100 = vmatpush1.msra.mxu0 %v985
        %1101 = vmatprep.subr.mxu0 0.0
        %1102 = vmatpush1.msra.mxu0 %v986
        %1103 = vmatprep.subr.mxu0 0.0
        %1104 = vmatpush1.msra.mxu0 %v987
        %1105 = vmatprep.subr.mxu0 0.0
        %1106 = vmatpush1.msra.mxu0 %v988
        %1107 = vmatprep.subr.mxu0 0.0
        %1108 = vmatpush1.msra.mxu0 %v989
        %1109 = vmatprep.subr.mxu0 0.0
        %1110 = vmatpush1.msra.mxu0 %v990
        %1111 = vmatprep.subr.mxu0 0.0
        %1112 = vmatpush1.msra.mxu0 %v991
        %1113 = vmatprep.subr.mxu0 0.0
        %1114 = vmatpush1.msra.mxu0 %v992
        %1115 = vmatprep.subr.mxu0 0.0
        %1116 = vmatpush1.msra.mxu0 0.0
        %1117 = vmatprep.subr.mxu0 0.0
        %1118 = vmatpush1.msra.mxu0 0.0
        %1119 = vmatprep.subr.mxu0 0.0
        %1120 = vmatpush1.msra.mxu0 0.0
        %1121 = vmatprep.subr.mxu0 0.0
        %1122 = vmatpush1.msra.mxu0 0.0
        %1123 = vmatprep.subr.mxu0 0.0
        %1124 = vmatpush1.msra.mxu0 0.0
        %1125 = vmatprep.subr.mxu0 0.0
        %1126 = vmatpush1.msra.mxu0 0.0
        %1127 = vmatprep.subr.mxu0 0.0
        %1128 = vmatpush1.msra.mxu0 0.0
        %1129 = vmatprep.subr.mxu0 0.0
        %1130 = vmatpush1.msra.mxu0 0.0
        %1131 = vmatprep.subr.mxu0 0.0
        %1132 = vmatpush1.msra.mxu0 0.0
        %1133 = vmatprep.subr.mxu0 0.0
        %1134 = vmatpush1.msra.mxu0 0.0
        %1135 = vmatprep.subr.mxu0 0.0
        %1136 = vmatpush1.msra.mxu0 0.0
        %1137 = vmatprep.subr.mxu0 0.0
        %1138 = vmatpush1.msra.mxu0 0.0
        %1139 = vmatprep.subr.mxu0 0.0
        %1140 = vmatpush1.msra.mxu0 0.0
        %1141 = vmatprep.subr.mxu0 0.0
        %1142 = vmatpush1.msra.mxu0 0.0
        %1143 = vmatprep.subr.mxu0 0.0
        %1144 = vmatpush1.msra.mxu0 0.0
        %1145 = vmatprep.subr.mxu0 0.0
        %1146 = vmatpush1.msra.mxu0 0.0
        %1147 = vmatprep.mubr.f32.mxu0 0.0
        %1148 = vmatmul.mubr.f32.gmra.mrb[0].mxu0 %v1000
        %v1149 = vpop.f32.mrb[0].mxu0
        %v1150 = vadd.f32 %v1075, %v1149
        %v1151 = vpop.f32.mrb[0].mxu0
        %1152 = vmatprep.mubr.f32.mxu0 0.0
        %1153 = vmatmul.mubr.f32.gmra.mrb[0].mxu0 %v1001
        %v1154 = vpop.f32.mrb[0].mxu0
        %v1155 = vadd.f32 %v1080, %v1154
        %v1156 = vpop.f32.mrb[0].mxu0
        %1157 = vdwg.mxu0
        %v1158 = vld [vmem:[%s7] sm:$0x1]
        %v1160 = vlaneseq
        %v1161 = vshrl.u32 %v1160, 7
        %v1162 = vsub.s32 0, %v1161
        %v1163 = vrot.slane %v1158, %v1162
        %v1165 = vmul.f32 %v1150, %v1163
        %v1166 = vmul.f32 %v1155, %v1163
        %v1167 = vld [vmem:[%s8] sm:$0x1]
        %v1169 = vlaneseq
        %v1170 = vshrl.u32 %v1169, 7
        %v1171 = vsub.s32 0, %v1170
        %v1172 = vrot.slane %v1167, %v1171
        %v1174 = vadd.f32 %v1165, %v1172
        %v1175 = vadd.f32 %v1166, %v1172
        %v1176 = vmax.f32 %v1174, 0.0
        %v1177 = vmax.f32 %v1175, 0.0
        %v1178 = vld [vmem:[%s9] sm:$0xff]
        %v1179 = vld [vmem:[%s9 + $0x8] sm:$0xff]
        %v1180 = vld [vmem:[%s9 + $0x10] sm:$0xff]
        %v1181 = vld [vmem:[%s9 + $0x18] sm:$0xff]
        %v1182 = vld [vmem:[%s9 + $0x20] sm:$0xff]
        %v1183 = vld [vmem:[%s9 + $0x28] sm:$0xff]
        %v1184 = vld [vmem:[%s9 + $0x30] sm:$0xff]
        %v1185 = vld [vmem:[%s9 + $0x38] sm:$0xff]
        %v1186 = vld [vmem:[%s9 + $0x40] sm:$0xff]
        %v1187 = vld [vmem:[%s9 + $0x48] sm:$0xff]
        %v1188 = vld [vmem:[%s9 + $0x50] sm:$0xff]
        %v1189 = vld [vmem:[%s9 + $0x58] sm:$0xff]
        %v1190 = vld [vmem:[%s9 + $0x60] sm:$0xff]
        %v1191 = vld [vmem:[%s9 + $0x68] sm:$0xff]
        %v1192 = vld [vmem:[%s9 + $0x70] sm:$0xff]
        %v1193 = vld [vmem:[%s9 + $0x78] sm:$0xff]
        %v1194 = vld [vmem:[%s9 + $0x80] sm:$0xff]
        %v1195 = vld [vmem:[%s9 + $0x88] sm:$0xff]
        %v1196 = vld [vmem:[%s9 + $0x90] sm:$0xff]
        %v1197 = vld [vmem:[%s9 + $0x98] sm:$0xff]
        %v1198 = vld [vmem:[%s9 + $0xa0] sm:$0xff]
        %v1199 = vld [vmem:[%s9 + $0xa8] sm:$0xff]
        %v1200 = vld [vmem:[%s9 + $0xb0] sm:$0xff]
        %v1201 = vld [vmem:[%s9 + $0xb8] sm:$0xff]
        %v1202 = vld [vmem:[%s9 + $0xc0] sm:$0xff]
        %v1203 = vld [vmem:[%s9 + $0xc8] sm:$0xff]
        %v1204 = vld [vmem:[%s9 + $0xd0] sm:$0xff]
        %v1205 = vld [vmem:[%s9 + $0xd8] sm:$0xff]
        %v1206 = vld [vmem:[%s9 + $0xe0] sm:$0xff]
        %v1207 = vld [vmem:[%s9 + $0xe8] sm:$0xff]
        %v1208 = vld [vmem:[%s9 + $0xf0] sm:$0xff]
        %v1209 = vld [vmem:[%s9 + $0xf8] sm:$0xff]
        %v1210 = vld [vmem:[%s9 + $0x100] sm:$0xff]
        %v1211 = vld [vmem:[%s9 + $0x108] sm:$0xff]
        %v1212 = vld [vmem:[%s9 + $0x110] sm:$0xff]
        %v1213 = vld [vmem:[%s9 + $0x118] sm:$0xff]
        %v1214 = vld [vmem:[%s9 + $0x120] sm:$0xff]
        %v1215 = vld [vmem:[%s9 + $0x128] sm:$0xff]
        %v1216 = vld [vmem:[%s9 + $0x130] sm:$0xff]
        %v1217 = vld [vmem:[%s9 + $0x138] sm:$0xff]
        %v1218 = vld [vmem:[%s9 + $0x140] sm:$0xff]
        %v1219 = vld [vmem:[%s9 + $0x148] sm:$0xff]
        %v1220 = vld [vmem:[%s9 + $0x150] sm:$0xff]
        %v1221 = vld [vmem:[%s9 + $0x158] sm:$0xff]
        %v1222 = vld [vmem:[%s9 + $0x160] sm:$0xff]
        %v1223 = vld [vmem:[%s9 + $0x168] sm:$0xff]
        %v1224 = vld [vmem:[%s9 + $0x170] sm:$0xff]
        %v1225 = vld [vmem:[%s9 + $0x178] sm:$0xff]
        %v1226 = vld [vmem:[%s10] sm:$0x1]
        %1227 = vst [vmem:[#allocation2 + $0x7] sm:$0x1] 0.0
        %1228 = vst [vmem:[#allocation2 + $0x8] sm:$0xff] %v1176
        %1229 = vst [vmem:[#allocation2 + $0x10] sm:$0xff] %v1177
        %1230 = vst [vmem:[#allocation2 + $0x18] sm:$0x1] 0.0
        %v1231 = vld [vmem:[#allocation2 + $0x7] sm:$0xff]
        %v1232 = vld [vmem:[#allocation2 + $0xf] sm:$0xff]
        %v1233 = vld [vmem:[#allocation2 + $0x9] sm:$0xff]
        %v1234 = vld [vmem:[#allocation2 + $0x11] sm:$0xff]
        %v1236 = vlaneseq
        %v1237 = vshrl.u32 %v1236, 7
        %v1238 = vsub.s32 0, %v1237
        %v1239 = vrot.slane %v1226, %v1238
        %1241 = vmatprep.subr.mxu0 0.0
        %1242 = vmatpush1.msra.mxu0 %v1178
        %1243 = vmatprep.subr.mxu0 0.0
        %1244 = vmatpush1.msra.mxu0 %v1179
        %1245 = vmatprep.subr.mxu0 0.0
        %1246 = vmatpush1.msra.mxu0 %v1180
        %1247 = vmatprep.subr.mxu0 0.0
        %1248 = vmatpush1.msra.mxu0 %v1181
        %1249 = vmatprep.subr.mxu0 0.0
        %1250 = vmatpush1.msra.mxu0 %v1182
        %1251 = vmatprep.subr.mxu0 0.0
        %1252 = vmatpush1.msra.mxu0 %v1183
        %1253 = vmatprep.subr.mxu0 0.0
        %1254 = vmatpush1.msra.mxu0 %v1184
        %1255 = vmatprep.subr.mxu0 0.0
        %1256 = vmatpush1.msra.mxu0 %v1185
        %1257 = vmatprep.subr.mxu0 0.0
        %1258 = vmatpush1.msra.mxu0 %v1186
        %1259 = vmatprep.subr.mxu0 0.0
        %1260 = vmatpush1.msra.mxu0 %v1187
        %1261 = vmatprep.subr.mxu0 0.0
        %1262 = vmatpush1.msra.mxu0 %v1188
        %1263 = vmatprep.subr.mxu0 0.0
        %1264 = vmatpush1.msra.mxu0 %v1189
        %1265 = vmatprep.subr.mxu0 0.0
        %1266 = vmatpush1.msra.mxu0 %v1190
        %1267 = vmatprep.subr.mxu0 0.0
        %1268 = vmatpush1.msra.mxu0 %v1191
        %1269 = vmatprep.subr.mxu0 0.0
        %1270 = vmatpush1.msra.mxu0 %v1192
        %1271 = vmatprep.subr.mxu0 0.0
        %1272 = vmatpush1.msra.mxu0 %v1193
        %1273 = vmatprep.subr.mxu0 0.0
        %1274 = vmatpush1.msra.mxu0 %v1194
        %1275 = vmatprep.subr.mxu0 0.0
        %1276 = vmatpush1.msra.mxu0 %v1195
        %1277 = vmatprep.subr.mxu0 0.0
        %1278 = vmatpush1.msra.mxu0 %v1196
        %1279 = vmatprep.subr.mxu0 0.0
        %1280 = vmatpush1.msra.mxu0 %v1197
        %1281 = vmatprep.subr.mxu0 0.0
        %1282 = vmatpush1.msra.mxu0 %v1198
        %1283 = vmatprep.subr.mxu0 0.0
        %1284 = vmatpush1.msra.mxu0 %v1199
        %1285 = vmatprep.subr.mxu0 0.0
        %1286 = vmatpush1.msra.mxu0 %v1200
        %1287 = vmatprep.subr.mxu0 0.0
        %1288 = vmatpush1.msra.mxu0 %v1201
        %1289 = vmatprep.subr.mxu0 0.0
        %1290 = vmatpush1.msra.mxu0 %v1202
        %1291 = vmatprep.subr.mxu0 0.0
        %1292 = vmatpush1.msra.mxu0 %v1203
        %1293 = vmatprep.subr.mxu0 0.0
        %1294 = vmatpush1.msra.mxu0 %v1204
        %1295 = vmatprep.subr.mxu0 0.0
        %1296 = vmatpush1.msra.mxu0 %v1205
        %1297 = vmatprep.subr.mxu0 0.0
        %1298 = vmatpush1.msra.mxu0 %v1206
        %1299 = vmatprep.subr.mxu0 0.0
        %1300 = vmatpush1.msra.mxu0 %v1207
        %1301 = vmatprep.subr.mxu0 0.0
        %1302 = vmatpush1.msra.mxu0 %v1208
        %1303 = vmatprep.subr.mxu0 0.0
        %1304 = vmatpush1.msra.mxu0 %v1209
        %1305 = vmatprep.mubr.f32.mxu0 %v1176
        %1306 = vmatmul.mubr.f32.gmra.mrb[0].mxu0 %v1231
        %v1307 = vpop.f32.mrb[0].mxu0
        %v1308 = vadd.f32 %v1239, %v1307
        %v1309 = vpop.f32.mrb[0].mxu0
        %1310 = vmatprep.mubr.f32.mxu0 %v1177
        %1311 = vmatmul.mubr.f32.gmra.mrb[0].mxu0 %v1232
        %v1312 = vpop.f32.mrb[0].mxu0
        %v1313 = vadd.f32 %v1239, %v1312
        %v1314 = vpop.f32.mrb[0].mxu0
        %1315 = vdwg.mxu0
        %1316 = vmatprep.subr.mxu0 0.0
        %1317 = vmatpush1.msra.mxu0 %v1210
        %1318 = vmatprep.subr.mxu0 0.0
        %1319 = vmatpush1.msra.mxu0 %v1211
        %1320 = vmatprep.subr.mxu0 0.0
        %1321 = vmatpush1.msra.mxu0 %v1212
        %1322 = vmatprep.subr.mxu0 0.0
        %1323 = vmatpush1.msra.mxu0 %v1213
        %1324 = vmatprep.subr.mxu0 0.0
        %1325 = vmatpush1.msra.mxu0 %v1214
        %1326 = vmatprep.subr.mxu0 0.0
        %1327 = vmatpush1.msra.mxu0 %v1215
        %1328 = vmatprep.subr.mxu0 0.0
        %1329 = vmatpush1.msra.mxu0 %v1216
        %1330 = vmatprep.subr.mxu0 0.0
        %1331 = vmatpush1.msra.mxu0 %v1217
        %1332 = vmatprep.subr.mxu0 0.0
        %1333 = vmatpush1.msra.mxu0 %v1218
        %1334 = vmatprep.subr.mxu0 0.0
        %1335 = vmatpush1.msra.mxu0 %v1219
        %1336 = vmatprep.subr.mxu0 0.0
        %1337 = vmatpush1.msra.mxu0 %v1220
        %1338 = vmatprep.subr.mxu0 0.0
        %1339 = vmatpush1.msra.mxu0 %v1221
        %1340 = vmatprep.subr.mxu0 0.0
        %1341 = vmatpush1.msra.mxu0 %v1222
        %1342 = vmatprep.subr.mxu0 0.0
        %1343 = vmatpush1.msra.mxu0 %v1223
        %1344 = vmatprep.subr.mxu0 0.0
        %1345 = vmatpush1.msra.mxu0 %v1224
        %1346 = vmatprep.subr.mxu0 0.0
        %1347 = vmatpush1.msra.mxu0 %v1225
        %1348 = vmatprep.subr.mxu0 0.0
        %1349 = vmatpush1.msra.mxu0 0.0
        %1350 = vmatprep.subr.mxu0 0.0
        %1351 = vmatpush1.msra.mxu0 0.0
        %1352 = vmatprep.subr.mxu0 0.0
        %1353 = vmatpush1.msra.mxu0 0.0
        %1354 = vmatprep.subr.mxu0 0.0
        %1355 = vmatpush1.msra.mxu0 0.0
        %1356 = vmatprep.subr.mxu0 0.0
        %1357 = vmatpush1.msra.mxu0 0.0
        %1358 = vmatprep.subr.mxu0 0.0
        %1359 = vmatpush1.msra.mxu0 0.0
        %1360 = vmatprep.subr.mxu0 0.0
        %1361 = vmatpush1.msra.mxu0 0.0
        %1362 = vmatprep.subr.mxu0 0.0
        %1363 = vmatpush1.msra.mxu0 0.0
        %1364 = vmatprep.subr.mxu0 0.0
        %1365 = vmatpush1.msra.mxu0 0.0
        %1366 = vmatprep.subr.mxu0 0.0
        %1367 = vmatpush1.msra.mxu0 0.0
        %1368 = vmatprep.subr.mxu0 0.0
        %1369 = vmatpush1.msra.mxu0 0.0
        %1370 = vmatprep.subr.mxu0 0.0
        %1371 = vmatpush1.msra.mxu0 0.0
        %1372 = vmatprep.subr.mxu0 0.0
        %1373 = vmatpush1.msra.mxu0 0.0
        %1374 = vmatprep.subr.mxu0 0.0
        %1375 = vmatpush1.msra.mxu0 0.0
        %1376 = vmatprep.subr.mxu0 0.0
        %1377 = vmatpush1.msra.mxu0 0.0
        %1378 = vmatprep.subr.mxu0 0.0
        %1379 = vmatpush1.msra.mxu0 0.0
        %1380 = vmatprep.mubr.f32.mxu0 0.0
        %1381 = vmatmul.mubr.f32.gmra.mrb[0].mxu0 %v1233
        %v1382 = vpop.f32.mrb[0].mxu0
        %v1383 = vadd.f32 %v1308, %v1382
        %v1384 = vpop.f32.mrb[0].mxu0
        %1385 = vmatprep.mubr.f32.mxu0 0.0
        %1386 = vmatmul.mubr.f32.gmra.mrb[0].mxu0 %v1234
        %v1387 = vpop.f32.mrb[0].mxu0
        %v1388 = vadd.f32 %v1313, %v1387
        %v1389 = vpop.f32.mrb[0].mxu0
        %1390 = vdwg.mxu0
        %1391 = vst [vmem:[#allocation2] sm:$0xff] %v1383
        %1392 = vst [vmem:[#allocation2 + $0x8] sm:$0xff] %v1388
        %1393 = vst [vmem:[#allocation2 + $0x10] sm:$0x1] 0.0
        %v1394 = vld [vmem:[#allocation2] ss:$2 sm:$0xff]
        %s1395 = scalar_lea.vmem [#allocation2], 1
        %v1396 = vld [vmem:[%s1395] ss:$2 sm:$0xff]
        %s1397 = scalar_lea.vmem [#allocation2], 2
        %v1398 = vld [vmem:[%s1397] ss:$2 sm:$0xff]
        %v1399 = vmax.f32 %v1394, %v1396
        %v1400 = vmax.f32 %v1399, %v1398
        %v1401 = vld [vmem:[%s11] sm:$0x1]
        %v1403 = vlaneseq
        %v1404 = vshrl.u32 %v1403, 7
        %v1405 = vsub.s32 0, %v1404
        %v1406 = vrot.slane %v1401, %v1405
        %v1408 = vmul.f32 %v1400, %v1406
        %v1409 = vld [vmem:[%s12] sm:$0x1]
        %v1411 = vlaneseq
        %v1412 = vshrl.u32 %v1411, 7
        %v1413 = vsub.s32 0, %v1412
        %v1414 = vrot.slane %v1409, %v1413
        %v1416 = vadd.f32 %v1408, %v1414
        %v1417 = vmax.f32 %v1416, 0.0
        %v1418 = vld [vmem:[%s13] sm:$0xff]
        %v1419 = vld [vmem:[%s13 + $0x8] sm:$0xff]
        %v1420 = vld [vmem:[%s13 + $0x10] sm:$0xff]
        %v1421 = vld [vmem:[%s13 + $0x18] sm:$0xff]
        %v1422 = vld [vmem:[%s13 + $0x20] sm:$0xff]
        %v1423 = vld [vmem:[%s13 + $0x28] sm:$0xff]
        %v1424 = vld [vmem:[%s13 + $0x30] sm:$0xff]
        %v1425 = vld [vmem:[%s13 + $0x38] sm:$0xff]
        %v1426 = vld [vmem:[%s13 + $0x40] sm:$0xff]
        %v1427 = vld [vmem:[%s13 + $0x48] sm:$0xff]
        %v1428 = vld [vmem:[%s13 + $0x50] sm:$0xff]
        %v1429 = vld [vmem:[%s13 + $0x58] sm:$0xff]
        %v1430 = vld [vmem:[%s13 + $0x60] sm:$0xff]
        %v1431 = vld [vmem:[%s13 + $0x68] sm:$0xff]
        %v1432 = vld [vmem:[%s13 + $0x70] sm:$0xff]
        %v1433 = vld [vmem:[%s13 + $0x78] sm:$0xff]
        %v1434 = vld [vmem:[%s13 + $0x80] sm:$0xff]
        %v1435 = vld [vmem:[%s13 + $0x88] sm:$0xff]
        %v1436 = vld [vmem:[%s13 + $0x90] sm:$0xff]
        %v1437 = vld [vmem:[%s13 + $0x98] sm:$0xff]
        %v1438 = vld [vmem:[%s13 + $0xa0] sm:$0xff]
        %v1439 = vld [vmem:[%s13 + $0xa8] sm:$0xff]
        %v1440 = vld [vmem:[%s13 + $0xb0] sm:$0xff]
        %v1441 = vld [vmem:[%s13 + $0xb8] sm:$0xff]
        %v1442 = vld [vmem:[%s13 + $0xc0] sm:$0xff]
        %v1443 = vld [vmem:[%s13 + $0xc8] sm:$0xff]
        %v1444 = vld [vmem:[%s13 + $0xd0] sm:$0xff]
        %v1445 = vld [vmem:[%s13 + $0xd8] sm:$0xff]
        %v1446 = vld [vmem:[%s13 + $0xe0] sm:$0xff]
        %v1447 = vld [vmem:[%s13 + $0xe8] sm:$0xff]
        %v1448 = vld [vmem:[%s13 + $0xf0] sm:$0xff]
        %v1449 = vld [vmem:[%s13 + $0xf8] sm:$0xff]
        %v1450 = vld [vmem:[%s13 + $0x100] sm:$0xff]
        %v1451 = vld [vmem:[%s13 + $0x108] sm:$0xff]
        %v1452 = vld [vmem:[%s13 + $0x110] sm:$0xff]
        %v1453 = vld [vmem:[%s13 + $0x118] sm:$0xff]
        %v1454 = vld [vmem:[%s13 + $0x120] sm:$0xff]
        %v1455 = vld [vmem:[%s13 + $0x128] sm:$0xff]
        %v1456 = vld [vmem:[%s13 + $0x130] sm:$0xff]
        %v1457 = vld [vmem:[%s13 + $0x138] sm:$0xff]
        %v1458 = vld [vmem:[%s13 + $0x140] sm:$0xff]
        %v1459 = vld [vmem:[%s13 + $0x148] sm:$0xff]
        %v1460 = vld [vmem:[%s13 + $0x150] sm:$0xff]
        %v1461 = vld [vmem:[%s13 + $0x158] sm:$0xff]
        %v1462 = vld [vmem:[%s13 + $0x160] sm:$0xff]
        %v1463 = vld [vmem:[%s13 + $0x168] sm:$0xff]
        %v1464 = vld [vmem:[%s13 + $0x170] sm:$0xff]
        %v1465 = vld [vmem:[%s13 + $0x178] sm:$0xff]
        %v1466 = vld [vmem:[%s14] sm:$0x1]
        %1467 = vst [vmem:[#allocation2 + $0x7] sm:$0x1] 0.0
        %1468 = vst [vmem:[#allocation2 + $0x8] sm:$0xff] %v1417
        %1469 = vst [vmem:[#allocation2 + $0x10] sm:$0x1] 0.0
        %v1470 = vld [vmem:[#allocation2 + $0x7] sm:$0xff]
        %v1471 = vld [vmem:[#allocation2 + $0x9] sm:$0xff]
        %v1473 = vlaneseq
        %v1474 = vshrl.u32 %v1473, 7
        %v1475 = vsub.s32 0, %v1474
        %v1476 = vrot.slane %v1466, %v1475
        %1478 = vmatprep.subr.mxu0 0.0
        %1479 = vmatpush1.msra.mxu0 %v1418
        %1480 = vmatprep.subr.mxu0 0.0
        %1481 = vmatpush1.msra.mxu0 %v1419
        %1482 = vmatprep.subr.mxu0 0.0
        %1483 = vmatpush1.msra.mxu0 %v1420
        %1484 = vmatprep.subr.mxu0 0.0
        %1485 = vmatpush1.msra.mxu0 %v1421
        %1486 = vmatprep.subr.mxu0 0.0
        %1487 = vmatpush1.msra.mxu0 %v1422
        %1488 = vmatprep.subr.mxu0 0.0
        %1489 = vmatpush1.msra.mxu0 %v1423
        %1490 = vmatprep.subr.mxu0 0.0
        %1491 = vmatpush1.msra.mxu0 %v1424
        %1492 = vmatprep.subr.mxu0 0.0
        %1493 = vmatpush1.msra.mxu0 %v1425
        %1494 = vmatprep.subr.mxu0 0.0
        %1495 = vmatpush1.msra.mxu0 %v1426
        %1496 = vmatprep.subr.mxu0 0.0
        %1497 = vmatpush1.msra.mxu0 %v1427
        %1498 = vmatprep.subr.mxu0 0.0
        %1499 = vmatpush1.msra.mxu0 %v1428
        %1500 = vmatprep.subr.mxu0 0.0
        %1501 = vmatpush1.msra.mxu0 %v1429
        %1502 = vmatprep.subr.mxu0 0.0
        %1503 = vmatpush1.msra.mxu0 %v1430
        %1504 = vmatprep.subr.mxu0 0.0
        %1505 = vmatpush1.msra.mxu0 %v1431
        %1506 = vmatprep.subr.mxu0 0.0
        %1507 = vmatpush1.msra.mxu0 %v1432
        %1508 = vmatprep.subr.mxu0 0.0
        %1509 = vmatpush1.msra.mxu0 %v1433
        %1510 = vmatprep.subr.mxu0 0.0
        %1511 = vmatpush1.msra.mxu0 %v1434
        %1512 = vmatprep.subr.mxu0 0.0
        %1513 = vmatpush1.msra.mxu0 %v1435
        %1514 = vmatprep.subr.mxu0 0.0
        %1515 = vmatpush1.msra.mxu0 %v1436
        %1516 = vmatprep.subr.mxu0 0.0
        %1517 = vmatpush1.msra.mxu0 %v1437
        %1518 = vmatprep.subr.mxu0 0.0
        %1519 = vmatpush1.msra.mxu0 %v1438
        %1520 = vmatprep.subr.mxu0 0.0
        %1521 = vmatpush1.msra.mxu0 %v1439
        %1522 = vmatprep.subr.mxu0 0.0
        %1523 = vmatpush1.msra.mxu0 %v1440
        %1524 = vmatprep.subr.mxu0 0.0
        %1525 = vmatpush1.msra.mxu0 %v1441
        %1526 = vmatprep.subr.mxu0 0.0
        %1527 = vmatpush1.msra.mxu0 %v1442
        %1528 = vmatprep.subr.mxu0 0.0
        %1529 = vmatpush1.msra.mxu0 %v1443
        %1530 = vmatprep.subr.mxu0 0.0
        %1531 = vmatpush1.msra.mxu0 %v1444
        %1532 = vmatprep.subr.mxu0 0.0
        %1533 = vmatpush1.msra.mxu0 %v1445
        %1534 = vmatprep.subr.mxu0 0.0
        %1535 = vmatpush1.msra.mxu0 %v1446
        %1536 = vmatprep.subr.mxu0 0.0
        %1537 = vmatpush1.msra.mxu0 %v1447
        %1538 = vmatprep.subr.mxu0 0.0
        %1539 = vmatpush1.msra.mxu0 %v1448
        %1540 = vmatprep.subr.mxu0 0.0
        %1541 = vmatpush1.msra.mxu0 %v1449
        %1542 = vmatprep.mubr.f32.mxu0 %v1417
        %1543 = vmatmul.mubr.f32.gmra.mrb[0].mxu0 %v1470
        %v1544 = vpop.f32.mrb[0].mxu0
        %v1545 = vadd.f32 %v1476, %v1544
        %v1546 = vpop.f32.mrb[0].mxu0
        %1547 = vdwg.mxu0
        %1548 = vmatprep.subr.mxu0 0.0
        %1549 = vmatpush1.msra.mxu0 %v1450
        %1550 = vmatprep.subr.mxu0 0.0
        %1551 = vmatpush1.msra.mxu0 %v1451
        %1552 = vmatprep.subr.mxu0 0.0
        %1553 = vmatpush1.msra.mxu0 %v1452
        %1554 = vmatprep.subr.mxu0 0.0
        %1555 = vmatpush1.msra.mxu0 %v1453
        %1556 = vmatprep.subr.mxu0 0.0
        %1557 = vmatpush1.msra.mxu0 %v1454
        %1558 = vmatprep.subr.mxu0 0.0
        %1559 = vmatpush1.msra.mxu0 %v1455
        %1560 = vmatprep.subr.mxu0 0.0
        %1561 = vmatpush1.msra.mxu0 %v1456
        %1562 = vmatprep.subr.mxu0 0.0
        %1563 = vmatpush1.msra.mxu0 %v1457
        %1564 = vmatprep.subr.mxu0 0.0
        %1565 = vmatpush1.msra.mxu0 %v1458
        %1566 = vmatprep.subr.mxu0 0.0
        %1567 = vmatpush1.msra.mxu0 %v1459
        %1568 = vmatprep.subr.mxu0 0.0
        %1569 = vmatpush1.msra.mxu0 %v1460
        %1570 = vmatprep.subr.mxu0 0.0
        %1571 = vmatpush1.msra.mxu0 %v1461
        %1572 = vmatprep.subr.mxu0 0.0
        %1573 = vmatpush1.msra.mxu0 %v1462
        %1574 = vmatprep.subr.mxu0 0.0
        %1575 = vmatpush1.msra.mxu0 %v1463
        %1576 = vmatprep.subr.mxu0 0.0
        %1577 = vmatpush1.msra.mxu0 %v1464
        %1578 = vmatprep.subr.mxu0 0.0
        %1579 = vmatpush1.msra.mxu0 %v1465
        %1580 = vmatprep.subr.mxu0 0.0
        %1581 = vmatpush1.msra.mxu0 0.0
        %1582 = vmatprep.subr.mxu0 0.0
        %1583 = vmatpush1.msra.mxu0 0.0
        %1584 = vmatprep.subr.mxu0 0.0
        %1585 = vmatpush1.msra.mxu0 0.0
        %1586 = vmatprep.subr.mxu0 0.0
        %1587 = vmatpush1.msra.mxu0 0.0
        %1588 = vmatprep.subr.mxu0 0.0
        %1589 = vmatpush1.msra.mxu0 0.0
        %1590 = vmatprep.subr.mxu0 0.0
        %1591 = vmatpush1.msra.mxu0 0.0
        %1592 = vmatprep.subr.mxu0 0.0
        %1593 = vmatpush1.msra.mxu0 0.0
        %1594 = vmatprep.subr.mxu0 0.0
        %1595 = vmatpush1.msra.mxu0 0.0
        %1596 = vmatprep.subr.mxu0 0.0
        %1597 = vmatpush1.msra.mxu0 0.0
        %1598 = vmatprep.subr.mxu0 0.0
        %1599 = vmatpush1.msra.mxu0 0.0
        %1600 = vmatprep.subr.mxu0 0.0
        %1601 = vmatpush1.msra.mxu0 0.0
        %1602 = vmatprep.subr.mxu0 0.0
        %1603 = vmatpush1.msra.mxu0 0.0
        %1604 = vmatprep.subr.mxu0 0.0
        %1605 = vmatpush1.msra.mxu0 0.0
        %1606 = vmatprep.subr.mxu0 0.0
        %1607 = vmatpush1.msra.mxu0 0.0
        %1608 = vmatprep.subr.mxu0 0.0
        %1609 = vmatpush1.msra.mxu0 0.0
        %1610 = vmatprep.subr.mxu0 0.0
        %1611 = vmatpush1.msra.mxu0 0.0
        %1612 = vmatprep.mubr.f32.mxu0 0.0
        %1613 = vmatmul.mubr.f32.gmra.mrb[0].mxu0 %v1471
        %v1614 = vpop.f32.mrb[0].mxu0
        %v1615 = vadd.f32 %v1545, %v1614
        %v1616 = vpop.f32.mrb[0].mxu0
        %1617 = vdwg.mxu0
        %v1618 = vld [vmem:[%s15] sm:$0x1]
        %v1620 = vlaneseq
        %v1621 = vshrl.u32 %v1620, 7
        %v1622 = vsub.s32 0, %v1621
        %v1623 = vrot.slane %v1618, %v1622
        %v1625 = vmul.f32 %v1615, %v1623
        %v1626 = vld [vmem:[%s16] sm:$0x1]
        %v1628 = vlaneseq
        %v1629 = vshrl.u32 %v1628, 7
        %v1630 = vsub.s32 0, %v1629
        %v1631 = vrot.slane %v1626, %v1630
        %v1633 = vadd.f32 %v1625, %v1631
        %v1634 = vmax.f32 %v1633, 0.0
        %v1635 = vld [vmem:[%s17] sm:$0xff]
        %v1636 = vld [vmem:[%s17 + $0x8] sm:$0xff]
        %v1637 = vld [vmem:[%s17 + $0x10] sm:$0xff]
        %v1638 = vld [vmem:[%s17 + $0x18] sm:$0xff]
        %v1639 = vld [vmem:[%s17 + $0x20] sm:$0xff]
        %v1640 = vld [vmem:[%s17 + $0x28] sm:$0xff]
        %v1641 = vld [vmem:[%s17 + $0x30] sm:$0xff]
        %v1642 = vld [vmem:[%s17 + $0x38] sm:$0xff]
        %v1643 = vld [vmem:[%s17 + $0x40] sm:$0xff]
        %v1644 = vld [vmem:[%s17 + $0x48] sm:$0xff]
        %v1645 = vld [vmem:[%s17 + $0x50] sm:$0xff]
        %v1646 = vld [vmem:[%s17 + $0x58] sm:$0xff]
        %v1647 = vld [vmem:[%s17 + $0x60] sm:$0xff]
        %v1648 = vld [vmem:[%s17 + $0x68] sm:$0xff]
        %v1649 = vld [vmem:[%s17 + $0x70] sm:$0xff]
        %v1650 = vld [vmem:[%s17 + $0x78] sm:$0xff]
        %v1651 = vld [vmem:[%s17 + $0x80] sm:$0xff]
        %v1652 = vld [vmem:[%s17 + $0x88] sm:$0xff]
        %v1653 = vld [vmem:[%s17 + $0x90] sm:$0xff]
        %v1654 = vld [vmem:[%s17 + $0x98] sm:$0xff]
        %v1655 = vld [vmem:[%s17 + $0xa0] sm:$0xff]
        %v1656 = vld [vmem:[%s17 + $0xa8] sm:$0xff]
        %v1657 = vld [vmem:[%s17 + $0xb0] sm:$0xff]
        %v1658 = vld [vmem:[%s17 + $0xb8] sm:$0xff]
        %v1659 = vld [vmem:[%s17 + $0xc0] sm:$0xff]
        %v1660 = vld [vmem:[%s17 + $0xc8] sm:$0xff]
        %v1661 = vld [vmem:[%s17 + $0xd0] sm:$0xff]
        %v1662 = vld [vmem:[%s17 + $0xd8] sm:$0xff]
        %v1663 = vld [vmem:[%s17 + $0xe0] sm:$0xff]
        %v1664 = vld [vmem:[%s17 + $0xe8] sm:$0xff]
        %v1665 = vld [vmem:[%s17 + $0xf0] sm:$0xff]
        %v1666 = vld [vmem:[%s17 + $0xf8] sm:$0xff]
        %v1667 = vld [vmem:[%s17 + $0x100] sm:$0xff]
        %v1668 = vld [vmem:[%s17 + $0x108] sm:$0xff]
        %v1669 = vld [vmem:[%s17 + $0x110] sm:$0xff]
        %v1670 = vld [vmem:[%s17 + $0x118] sm:$0xff]
        %v1671 = vld [vmem:[%s17 + $0x120] sm:$0xff]
        %v1672 = vld [vmem:[%s17 + $0x128] sm:$0xff]
        %v1673 = vld [vmem:[%s17 + $0x130] sm:$0xff]
        %v1674 = vld [vmem:[%s17 + $0x138] sm:$0xff]
        %v1675 = vld [vmem:[%s17 + $0x140] sm:$0xff]
        %v1676 = vld [vmem:[%s17 + $0x148] sm:$0xff]
        %v1677 = vld [vmem:[%s17 + $0x150] sm:$0xff]
        %v1678 = vld [vmem:[%s17 + $0x158] sm:$0xff]
        %v1679 = vld [vmem:[%s17 + $0x160] sm:$0xff]
        %v1680 = vld [vmem:[%s17 + $0x168] sm:$0xff]
        %v1681 = vld [vmem:[%s17 + $0x170] sm:$0xff]
        %v1682 = vld [vmem:[%s17 + $0x178] sm:$0xff]
        %v1683 = vld [vmem:[%s18] sm:$0x1]
        %1684 = vst [vmem:[#allocation2 + $0x7] sm:$0x1] 0.0
        %1685 = vst [vmem:[#allocation2 + $0x8] sm:$0xff] %v1634
        %1686 = vst [vmem:[#allocation2 + $0x10] sm:$0x1] 0.0
        %v1687 = vld [vmem:[#allocation2 + $0x7] sm:$0xff]
        %v1688 = vld [vmem:[#allocation2 + $0x9] sm:$0xff]
        %v1690 = vlaneseq
        %v1691 = vshrl.u32 %v1690, 7
        %v1692 = vsub.s32 0, %v1691
        %v1693 = vrot.slane %v1683, %v1692
        %1695 = vmatprep.subr.mxu0 0.0
        %1696 = vmatpush1.msra.mxu0 %v1635
        %1697 = vmatprep.subr.mxu0 0.0
        %1698 = vmatpush1.msra.mxu0 %v1636
        %1699 = vmatprep.subr.mxu0 0.0
        %1700 = vmatpush1.msra.mxu0 %v1637
        %1701 = vmatprep.subr.mxu0 0.0
        %1702 = vmatpush1.msra.mxu0 %v1638
        %1703 = vmatprep.subr.mxu0 0.0
        %1704 = vmatpush1.msra.mxu0 %v1639
        %1705 = vmatprep.subr.mxu0 0.0
        %1706 = vmatpush1.msra.mxu0 %v1640
        %1707 = vmatprep.subr.mxu0 0.0
        %1708 = vmatpush1.msra.mxu0 %v1641
        %1709 = vmatprep.subr.mxu0 0.0
        %1710 = vmatpush1.msra.mxu0 %v1642
        %1711 = vmatprep.subr.mxu0 0.0
        %1712 = vmatpush1.msra.mxu0 %v1643
        %1713 = vmatprep.subr.mxu0 0.0
        %1714 = vmatpush1.msra.mxu0 %v1644
        %1715 = vmatprep.subr.mxu0 0.0
        %1716 = vmatpush1.msra.mxu0 %v1645
        %1717 = vmatprep.subr.mxu0 0.0
        %1718 = vmatpush1.msra.mxu0 %v1646
        %1719 = vmatprep.subr.mxu0 0.0
        %1720 = vmatpush1.msra.mxu0 %v1647
        %1721 = vmatprep.subr.mxu0 0.0
        %1722 = vmatpush1.msra.mxu0 %v1648
        %1723 = vmatprep.subr.mxu0 0.0
        %1724 = vmatpush1.msra.mxu0 %v1649
        %1725 = vmatprep.subr.mxu0 0.0
        %1726 = vmatpush1.msra.mxu0 %v1650
        %1727 = vmatprep.subr.mxu0 0.0
        %1728 = vmatpush1.msra.mxu0 %v1651
        %1729 = vmatprep.subr.mxu0 0.0
        %1730 = vmatpush1.msra.mxu0 %v1652
        %1731 = vmatprep.subr.mxu0 0.0
        %1732 = vmatpush1.msra.mxu0 %v1653
        %1733 = vmatprep.subr.mxu0 0.0
        %1734 = vmatpush1.msra.mxu0 %v1654
        %1735 = vmatprep.subr.mxu0 0.0
        %1736 = vmatpush1.msra.mxu0 %v1655
        %1737 = vmatprep.subr.mxu0 0.0
        %1738 = vmatpush1.msra.mxu0 %v1656
        %1739 = vmatprep.subr.mxu0 0.0
        %1740 = vmatpush1.msra.mxu0 %v1657
        %1741 = vmatprep.subr.mxu0 0.0
        %1742 = vmatpush1.msra.mxu0 %v1658
        %1743 = vmatprep.subr.mxu0 0.0
        %1744 = vmatpush1.msra.mxu0 %v1659
        %1745 = vmatprep.subr.mxu0 0.0
        %1746 = vmatpush1.msra.mxu0 %v1660
        %1747 = vmatprep.subr.mxu0 0.0
        %1748 = vmatpush1.msra.mxu0 %v1661
        %1749 = vmatprep.subr.mxu0 0.0
        %1750 = vmatpush1.msra.mxu0 %v1662
        %1751 = vmatprep.subr.mxu0 0.0
        %1752 = vmatpush1.msra.mxu0 %v1663
        %1753 = vmatprep.subr.mxu0 0.0
        %1754 = vmatpush1.msra.mxu0 %v1664
        %1755 = vmatprep.subr.mxu0 0.0
        %1756 = vmatpush1.msra.mxu0 %v1665
        %1757 = vmatprep.subr.mxu0 0.0
        %1758 = vmatpush1.msra.mxu0 %v1666
        %1759 = vmatprep.mubr.f32.mxu0 %v1634
        %1760 = vmatmul.mubr.f32.gmra.mrb[0].mxu0 %v1687
        %v1761 = vpop.f32.mrb[0].mxu0
        %v1762 = vadd.f32 %v1693, %v1761
        %v1763 = vpop.f32.mrb[0].mxu0
        %1764 = vdwg.mxu0
        %1765 = vmatprep.subr.mxu0 0.0
        %1766 = vmatpush1.msra.mxu0 %v1667
        %1767 = vmatprep.subr.mxu0 0.0
        %1768 = vmatpush1.msra.mxu0 %v1668
        %1769 = vmatprep.subr.mxu0 0.0
        %1770 = vmatpush1.msra.mxu0 %v1669
        %1771 = vmatprep.subr.mxu0 0.0
        %1772 = vmatpush1.msra.mxu0 %v1670
        %1773 = vmatprep.subr.mxu0 0.0
        %1774 = vmatpush1.msra.mxu0 %v1671
        %1775 = vmatprep.subr.mxu0 0.0
        %1776 = vmatpush1.msra.mxu0 %v1672
        %1777 = vmatprep.subr.mxu0 0.0
        %1778 = vmatpush1.msra.mxu0 %v1673
        %1779 = vmatprep.subr.mxu0 0.0
        %1780 = vmatpush1.msra.mxu0 %v1674
        %1781 = vmatprep.subr.mxu0 0.0
        %1782 = vmatpush1.msra.mxu0 %v1675
        %1783 = vmatprep.subr.mxu0 0.0
        %1784 = vmatpush1.msra.mxu0 %v1676
        %1785 = vmatprep.subr.mxu0 0.0
        %1786 = vmatpush1.msra.mxu0 %v1677
        %1787 = vmatprep.subr.mxu0 0.0
        %1788 = vmatpush1.msra.mxu0 %v1678
        %1789 = vmatprep.subr.mxu0 0.0
        %1790 = vmatpush1.msra.mxu0 %v1679
        %1791 = vmatprep.subr.mxu0 0.0
        %1792 = vmatpush1.msra.mxu0 %v1680
        %1793 = vmatprep.subr.mxu0 0.0
        %1794 = vmatpush1.msra.mxu0 %v1681
        %1795 = vmatprep.subr.mxu0 0.0
        %1796 = vmatpush1.msra.mxu0 %v1682
        %1797 = vmatprep.subr.mxu0 0.0
        %1798 = vmatpush1.msra.mxu0 0.0
        %1799 = vmatprep.subr.mxu0 0.0
        %1800 = vmatpush1.msra.mxu0 0.0
        %1801 = vmatprep.subr.mxu0 0.0
        %1802 = vmatpush1.msra.mxu0 0.0
        %1803 = vmatprep.subr.mxu0 0.0
        %1804 = vmatpush1.msra.mxu0 0.0
        %1805 = vmatprep.subr.mxu0 0.0
        %1806 = vmatpush1.msra.mxu0 0.0
        %1807 = vmatprep.subr.mxu0 0.0
        %1808 = vmatpush1.msra.mxu0 0.0
        %1809 = vmatprep.subr.mxu0 0.0
        %1810 = vmatpush1.msra.mxu0 0.0
        %1811 = vmatprep.subr.mxu0 0.0
        %1812 = vmatpush1.msra.mxu0 0.0
        %1813 = vmatprep.subr.mxu0 0.0
        %1814 = vmatpush1.msra.mxu0 0.0
        %1815 = vmatprep.subr.mxu0 0.0
        %1816 = vmatpush1.msra.mxu0 0.0
        %1817 = vmatprep.subr.mxu0 0.0
        %1818 = vmatpush1.msra.mxu0 0.0
        %1819 = vmatprep.subr.mxu0 0.0
        %1820 = vmatpush1.msra.mxu0 0.0
        %1821 = vmatprep.subr.mxu0 0.0
        %1822 = vmatpush1.msra.mxu0 0.0
        %1823 = vmatprep.subr.mxu0 0.0
        %1824 = vmatpush1.msra.mxu0 0.0
        %1825 = vmatprep.subr.mxu0 0.0
        %1826 = vmatpush1.msra.mxu0 0.0
        %1827 = vmatprep.subr.mxu0 0.0
        %1828 = vmatpush1.msra.mxu0 0.0
        %1829 = vmatprep.mubr.f32.mxu0 0.0
        %1830 = vmatmul.mubr.f32.gmra.mrb[0].mxu0 %v1688
        %v1831 = vpop.f32.mrb[0].mxu0
        %v1832 = vadd.f32 %v1762, %v1831
        %v1833 = vpop.f32.mrb[0].mxu0
        %1834 = vdwg.mxu0
        %v1835 = vadd.f32 %v1832, %v1400
        %1836 = vst [vmem:[#allocation2] sm:$0xff] %v1835
        %1837 = vst [vmem:[#allocation2 + $0x8] sm:$0x1] 0.0
        %v1838 = vld [vmem:[#allocation2] ss:$2 sm:$0xf]
        %v1839 = vld [vmem:[%s1395] ss:$2 sm:$0xf]
        %v1840 = vld [vmem:[%s1397] ss:$2 sm:$0xf]
        %v1841 = vmax.f32 %v1838, %v1839
        %v1842 = vmax.f32 %v1841, %v1840
        %s1843 = scalar_lea.vmem %s11, 1
        %v1844 = vld [vmem:[%s1843] sm:$0x1]
        %v1846 = vlaneseq
        %v1847 = vshrl.u32 %v1846, 7
        %v1848 = vsub.s32 0, %v1847
        %v1849 = vrot.slane %v1844, %v1848
        %v1851 = vmul.f32 %v1842, %v1849
        %s1852 = scalar_lea.vmem %s12, 1
        %v1853 = vld [vmem:[%s1852] sm:$0x1]
        %v1855 = vlaneseq
        %v1856 = vshrl.u32 %v1855, 7
        %v1857 = vsub.s32 0, %v1856
        %v1858 = vrot.slane %v1853, %v1857
        %v1860 = vadd.f32 %v1851, %v1858
        %v1861 = vmax.f32 %v1860, 0.0
        %s1862 = scalar_lea.vmem %s13, 384
        %v1863 = vld [vmem:[%s1862] sm:$0xff]
        %v1864 = vld [vmem:[%s1862 + $0x8] sm:$0xff]
        %v1865 = vld [vmem:[%s1862 + $0x10] sm:$0xff]
        %v1866 = vld [vmem:[%s1862 + $0x18] sm:$0xff]
        %v1867 = vld [vmem:[%s1862 + $0x20] sm:$0xff]
        %v1868 = vld [vmem:[%s1862 + $0x28] sm:$0xff]
        %v1869 = vld [vmem:[%s1862 + $0x30] sm:$0xff]
        %v1870 = vld [vmem:[%s1862 + $0x38] sm:$0xff]
        %v1871 = vld [vmem:[%s1862 + $0x40] sm:$0xff]
        %v1872 = vld [vmem:[%s1862 + $0x48] sm:$0xff]
        %v1873 = vld [vmem:[%s1862 + $0x50] sm:$0xff]
        %v1874 = vld [vmem:[%s1862 + $0x58] sm:$0xff]
        %v1875 = vld [vmem:[%s1862 + $0x60] sm:$0xff]
        %v1876 = vld [vmem:[%s1862 + $0x68] sm:$0xff]
        %v1877 = vld [vmem:[%s1862 + $0x70] sm:$0xff]
        %v1878 = vld [vmem:[%s1862 + $0x78] sm:$0xff]
        %v1879 = vld [vmem:[%s1862 + $0x80] sm:$0xff]
        %v1880 = vld [vmem:[%s1862 + $0x88] sm:$0xff]
        %v1881 = vld [vmem:[%s1862 + $0x90] sm:$0xff]
        %v1882 = vld [vmem:[%s1862 + $0x98] sm:$0xff]
        %v1883 = vld [vmem:[%s1862 + $0xa0] sm:$0xff]
        %v1884 = vld [vmem:[%s1862 + $0xa8] sm:$0xff]
        %v1885 = vld [vmem:[%s1862 + $0xb0] sm:$0xff]
        %v1886 = vld [vmem:[%s1862 + $0xb8] sm:$0xff]
        %v1887 = vld [vmem:[%s1862 + $0xc0] sm:$0xff]
        %v1888 = vld [vmem:[%s1862 + $0xc8] sm:$0xff]
        %v1889 = vld [vmem:[%s1862 + $0xd0] sm:$0xff]
        %v1890 = vld [vmem:[%s1862 + $0xd8] sm:$0xff]
        %v1891 = vld [vmem:[%s1862 + $0xe0] sm:$0xff]
        %v1892 = vld [vmem:[%s1862 + $0xe8] sm:$0xff]
        %v1893 = vld [vmem:[%s1862 + $0xf0] sm:$0xff]
        %v1894 = vld [vmem:[%s1862 + $0xf8] sm:$0xff]
        %v1895 = vld [vmem:[%s1862 + $0x100] sm:$0xff]
        %v1896 = vld [vmem:[%s1862 + $0x108] sm:$0xff]
        %v1897 = vld [vmem:[%s1862 + $0x110] sm:$0xff]
        %v1898 = vld [vmem:[%s1862 + $0x118] sm:$0xff]
        %v1899 = vld [vmem:[%s1862 + $0x120] sm:$0xff]
        %v1900 = vld [vmem:[%s1862 + $0x128] sm:$0xff]
        %v1901 = vld [vmem:[%s1862 + $0x130] sm:$0xff]
        %v1902 = vld [vmem:[%s1862 + $0x138] sm:$0xff]
        %v1903 = vld [vmem:[%s1862 + $0x140] sm:$0xff]
        %v1904 = vld [vmem:[%s1862 + $0x148] sm:$0xff]
        %v1905 = vld [vmem:[%s1862 + $0x150] sm:$0xff]
        %v1906 = vld [vmem:[%s1862 + $0x158] sm:$0xff]
        %v1907 = vld [vmem:[%s1862 + $0x160] sm:$0xff]
        %v1908 = vld [vmem:[%s1862 + $0x168] sm:$0xff]
        %v1909 = vld [vmem:[%s1862 + $0x170] sm:$0xff]
        %v1910 = vld [vmem:[%s1862 + $0x178] sm:$0xff]
        %s1911 = scalar_lea.vmem %s14, 1
        %v1912 = vld [vmem:[%s1911] sm:$0x1]
        %1913 = vst [vmem:[#allocation2 + $0x7] sm:$0x1] 0.0
        %1914 = vst [vmem:[#allocation2 + $0x8] sm:$0xf] %v1861
        %1915 = vst [vmem:[#allocation2 + $0xc] sm:$0x1] 0.0
        %v1916 = vld [vmem:[#allocation2 + $0x7] sm:$0xf]
        %v1917 = vld [vmem:[#allocation2 + $0x9] sm:$0xf]
        %v1919 = vlaneseq
        %v1920 = vshrl.u32 %v1919, 7
        %v1921 = vsub.s32 0, %v1920
        %v1922 = vrot.slane %v1912, %v1921
        %1924 = vmatprep.subr.mxu0 0.0
        %1925 = vmatpush1.msra.mxu0 %v1863
        %1926 = vmatprep.subr.mxu0 0.0
        %1927 = vmatpush1.msra.mxu0 %v1864
        %1928 = vmatprep.subr.mxu0 0.0
        %1929 = vmatpush1.msra.mxu0 %v1865
        %1930 = vmatprep.subr.mxu0 0.0
        %1931 = vmatpush1.msra.mxu0 %v1866
        %1932 = vmatprep.subr.mxu0 0.0
        %1933 = vmatpush1.msra.mxu0 %v1867
        %1934 = vmatprep.subr.mxu0 0.0
        %1935 = vmatpush1.msra.mxu0 %v1868
        %1936 = vmatprep.subr.mxu0 0.0
        %1937 = vmatpush1.msra.mxu0 %v1869
        %1938 = vmatprep.subr.mxu0 0.0
        %1939 = vmatpush1.msra.mxu0 %v1870
        %1940 = vmatprep.subr.mxu0 0.0
        %1941 = vmatpush1.msra.mxu0 %v1871
        %1942 = vmatprep.subr.mxu0 0.0
        %1943 = vmatpush1.msra.mxu0 %v1872
        %1944 = vmatprep.subr.mxu0 0.0
        %1945 = vmatpush1.msra.mxu0 %v1873
        %1946 = vmatprep.subr.mxu0 0.0
        %1947 = vmatpush1.msra.mxu0 %v1874
        %1948 = vmatprep.subr.mxu0 0.0
        %1949 = vmatpush1.msra.mxu0 %v1875
        %1950 = vmatprep.subr.mxu0 0.0
        %1951 = vmatpush1.msra.mxu0 %v1876
        %1952 = vmatprep.subr.mxu0 0.0
        %1953 = vmatpush1.msra.mxu0 %v1877
        %1954 = vmatprep.subr.mxu0 0.0
        %1955 = vmatpush1.msra.mxu0 %v1878
        %1956 = vmatprep.subr.mxu0 0.0
        %1957 = vmatpush1.msra.mxu0 %v1879
        %1958 = vmatprep.subr.mxu0 0.0
        %1959 = vmatpush1.msra.mxu0 %v1880
        %1960 = vmatprep.subr.mxu0 0.0
        %1961 = vmatpush1.msra.mxu0 %v1881
        %1962 = vmatprep.subr.mxu0 0.0
        %1963 = vmatpush1.msra.mxu0 %v1882
        %1964 = vmatprep.subr.mxu0 0.0
        %1965 = vmatpush1.msra.mxu0 %v1883
        %1966 = vmatprep.subr.mxu0 0.0
        %1967 = vmatpush1.msra.mxu0 %v1884
        %1968 = vmatprep.subr.mxu0 0.0
        %1969 = vmatpush1.msra.mxu0 %v1885
        %1970 = vmatprep.subr.mxu0 0.0
        %1971 = vmatpush1.msra.mxu0 %v1886
        %1972 = vmatprep.subr.mxu0 0.0
        %1973 = vmatpush1.msra.mxu0 %v1887
        %1974 = vmatprep.subr.mxu0 0.0
        %1975 = vmatpush1.msra.mxu0 %v1888
        %1976 = vmatprep.subr.mxu0 0.0
        %1977 = vmatpush1.msra.mxu0 %v1889
        %1978 = vmatprep.subr.mxu0 0.0
        %1979 = vmatpush1.msra.mxu0 %v1890
        %1980 = vmatprep.subr.mxu0 0.0
        %1981 = vmatpush1.msra.mxu0 %v1891
        %1982 = vmatprep.subr.mxu0 0.0
        %1983 = vmatpush1.msra.mxu0 %v1892
        %1984 = vmatprep.subr.mxu0 0.0
        %1985 = vmatpush1.msra.mxu0 %v1893
        %1986 = vmatprep.subr.mxu0 0.0
        %1987 = vmatpush1.msra.mxu0 %v1894
        %1988 = vmatprep.mubr.f32.mxu0 %v1861
        %1989 = vmatmul.mubr.f32.gmra.mrb[0].mxu0 %v1916
        %v1990 = vpop.f32.mrb[0].mxu0
        %v1991 = vadd.f32 %v1922, %v1990
        %v1992 = vpop.f32.mrb[0].mxu0
        %1993 = vdwg.mxu0
        %1994 = vmatprep.subr.mxu0 0.0
        %1995 = vmatpush1.msra.mxu0 %v1895
        %1996 = vmatprep.subr.mxu0 0.0
        %1997 = vmatpush1.msra.mxu0 %v1896
        %1998 = vmatprep.subr.mxu0 0.0
        %1999 = vmatpush1.msra.mxu0 %v1897
        %2000 = vmatprep.subr.mxu0 0.0
        %2001 = vmatpush1.msra.mxu0 %v1898
        %2002 = vmatprep.subr.mxu0 0.0
        %2003 = vmatpush1.msra.mxu0 %v1899
        %2004 = vmatprep.subr.mxu0 0.0
        %2005 = vmatpush1.msra.mxu0 %v1900
        %2006 = vmatprep.subr.mxu0 0.0
        %2007 = vmatpush1.msra.mxu0 %v1901
        %2008 = vmatprep.subr.mxu0 0.0
        %2009 = vmatpush1.msra.mxu0 %v1902
        %2010 = vmatprep.subr.mxu0 0.0
        %2011 = vmatpush1.msra.mxu0 %v1903
        %2012 = vmatprep.subr.mxu0 0.0
        %2013 = vmatpush1.msra.mxu0 %v1904
        %2014 = vmatprep.subr.mxu0 0.0
        %2015 = vmatpush1.msra.mxu0 %v1905
        %2016 = vmatprep.subr.mxu0 0.0
        %2017 = vmatpush1.msra.mxu0 %v1906
        %2018 = vmatprep.subr.mxu0 0.0
        %2019 = vmatpush1.msra.mxu0 %v1907
        %2020 = vmatprep.subr.mxu0 0.0
        %2021 = vmatpush1.msra.mxu0 %v1908
        %2022 = vmatprep.subr.mxu0 0.0
        %2023 = vmatpush1.msra.mxu0 %v1909
        %2024 = vmatprep.subr.mxu0 0.0
        %2025 = vmatpush1.msra.mxu0 %v1910
        %2026 = vmatprep.subr.mxu0 0.0
        %2027 = vmatpush1.msra.mxu0 0.0
        %2028 = vmatprep.subr.mxu0 0.0
        %2029 = vmatpush1.msra.mxu0 0.0
        %2030 = vmatprep.subr.mxu0 0.0
        %2031 = vmatpush1.msra.mxu0 0.0
        %2032 = vmatprep.subr.mxu0 0.0
        %2033 = vmatpush1.msra.mxu0 0.0
        %2034 = vmatprep.subr.mxu0 0.0
        %2035 = vmatpush1.msra.mxu0 0.0
        %2036 = vmatprep.subr.mxu0 0.0
        %2037 = vmatpush1.msra.mxu0 0.0
        %2038 = vmatprep.subr.mxu0 0.0
        %2039 = vmatpush1.msra.mxu0 0.0
        %2040 = vmatprep.subr.mxu0 0.0
        %2041 = vmatpush1.msra.mxu0 0.0
        %2042 = vmatprep.subr.mxu0 0.0
        %2043 = vmatpush1.msra.mxu0 0.0
        %2044 = vmatprep.subr.mxu0 0.0
        %2045 = vmatpush1.msra.mxu0 0.0
        %2046 = vmatprep.subr.mxu0 0.0
        %2047 = vmatpush1.msra.mxu0 0.0
        %2048 = vmatprep.subr.mxu0 0.0
        %2049 = vmatpush1.msra.mxu0 0.0
        %2050 = vmatprep.subr.mxu0 0.0
        %2051 = vmatpush1.msra.mxu0 0.0
        %2052 = vmatprep.subr.mxu0 0.0
        %2053 = vmatpush1.msra.mxu0 0.0
        %2054 = vmatprep.subr.mxu0 0.0
        %2055 = vmatpush1.msra.mxu0 0.0
        %2056 = vmatprep.subr.mxu0 0.0
        %2057 = vmatpush1.msra.mxu0 0.0
        %2058 = vmatprep.mubr.f32.mxu0 0.0
        %2059 = vmatmul.mubr.f32.gmra.mrb[0].mxu0 %v1917
        %v2060 = vpop.f32.mrb[0].mxu0
        %v2061 = vadd.f32 %v1991, %v2060
        %v2062 = vpop.f32.mrb[0].mxu0
        %2063 = vdwg.mxu0
        %s2064 = scalar_lea.vmem %s15, 1
        %v2065 = vld [vmem:[%s2064] sm:$0x1]
        %v2067 = vlaneseq
        %v2068 = vshrl.u32 %v2067, 7
        %v2069 = vsub.s32 0, %v2068
        %v2070 = vrot.slane %v2065, %v2069
        %v2072 = vmul.f32 %v2061, %v2070
        %s2073 = scalar_lea.vmem %s16, 1
        %v2074 = vld [vmem:[%s2073] sm:$0x1]
        %v2076 = vlaneseq
        %v2077 = vshrl.u32 %v2076, 7
        %v2078 = vsub.s32 0, %v2077
        %v2079 = vrot.slane %v2074, %v2078
        %v2081 = vadd.f32 %v2072, %v2079
        %v2082 = vmax.f32 %v2081, 0.0
        %s2083 = scalar_lea.vmem %s17, 384
        %v2084 = vld [vmem:[%s2083] sm:$0xff]
        %v2085 = vld [vmem:[%s2083 + $0x8] sm:$0xff]
        %v2086 = vld [vmem:[%s2083 + $0x10] sm:$0xff]
        %v2087 = vld [vmem:[%s2083 + $0x18] sm:$0xff]
        %v2088 = vld [vmem:[%s2083 + $0x20] sm:$0xff]
        %v2089 = vld [vmem:[%s2083 + $0x28] sm:$0xff]
        %v2090 = vld [vmem:[%s2083 + $0x30] sm:$0xff]
        %v2091 = vld [vmem:[%s2083 + $0x38] sm:$0xff]
        %v2092 = vld [vmem:[%s2083 + $0x40] sm:$0xff]
        %v2093 = vld [vmem:[%s2083 + $0x48] sm:$0xff]
        %v2094 = vld [vmem:[%s2083 + $0x50] sm:$0xff]
        %v2095 = vld [vmem:[%s2083 + $0x58] sm:$0xff]
        %v2096 = vld [vmem:[%s2083 + $0x60] sm:$0xff]
        %v2097 = vld [vmem:[%s2083 + $0x68] sm:$0xff]
        %v2098 = vld [vmem:[%s2083 + $0x70] sm:$0xff]
        %v2099 = vld [vmem:[%s2083 + $0x78] sm:$0xff]
        %v2100 = vld [vmem:[%s2083 + $0x80] sm:$0xff]
        %v2101 = vld [vmem:[%s2083 + $0x88] sm:$0xff]
        %v2102 = vld [vmem:[%s2083 + $0x90] sm:$0xff]
        %v2103 = vld [vmem:[%s2083 + $0x98] sm:$0xff]
        %v2104 = vld [vmem:[%s2083 + $0xa0] sm:$0xff]
        %v2105 = vld [vmem:[%s2083 + $0xa8] sm:$0xff]
        %v2106 = vld [vmem:[%s2083 + $0xb0] sm:$0xff]
        %v2107 = vld [vmem:[%s2083 + $0xb8] sm:$0xff]
        %v2108 = vld [vmem:[%s2083 + $0xc0] sm:$0xff]
        %v2109 = vld [vmem:[%s2083 + $0xc8] sm:$0xff]
        %v2110 = vld [vmem:[%s2083 + $0xd0] sm:$0xff]
        %v2111 = vld [vmem:[%s2083 + $0xd8] sm:$0xff]
        %v2112 = vld [vmem:[%s2083 + $0xe0] sm:$0xff]
        %v2113 = vld [vmem:[%s2083 + $0xe8] sm:$0xff]
        %v2114 = vld [vmem:[%s2083 + $0xf0] sm:$0xff]
        %v2115 = vld [vmem:[%s2083 + $0xf8] sm:$0xff]
        %v2116 = vld [vmem:[%s2083 + $0x100] sm:$0xff]
        %v2117 = vld [vmem:[%s2083 + $0x108] sm:$0xff]
        %v2118 = vld [vmem:[%s2083 + $0x110] sm:$0xff]
        %v2119 = vld [vmem:[%s2083 + $0x118] sm:$0xff]
        %v2120 = vld [vmem:[%s2083 + $0x120] sm:$0xff]
        %v2121 = vld [vmem:[%s2083 + $0x128] sm:$0xff]
        %v2122 = vld [vmem:[%s2083 + $0x130] sm:$0xff]
        %v2123 = vld [vmem:[%s2083 + $0x138] sm:$0xff]
        %v2124 = vld [vmem:[%s2083 + $0x140] sm:$0xff]
        %v2125 = vld [vmem:[%s2083 + $0x148] sm:$0xff]
        %v2126 = vld [vmem:[%s2083 + $0x150] sm:$0xff]
        %v2127 = vld [vmem:[%s2083 + $0x158] sm:$0xff]
        %v2128 = vld [vmem:[%s2083 + $0x160] sm:$0xff]
        %v2129 = vld [vmem:[%s2083 + $0x168] sm:$0xff]
        %v2130 = vld [vmem:[%s2083 + $0x170] sm:$0xff]
        %v2131 = vld [vmem:[%s2083 + $0x178] sm:$0xff]
        %s2132 = scalar_lea.vmem %s18, 1
        %v2133 = vld [vmem:[%s2132] sm:$0x1]
        %2134 = vst [vmem:[#allocation2 + $0x7] sm:$0x1] 0.0
        %2135 = vst [vmem:[#allocation2 + $0x8] sm:$0xf] %v2082
        %2136 = vst [vmem:[#allocation2 + $0xc] sm:$0x1] 0.0
        %v2137 = vld [vmem:[#allocation2 + $0x7] sm:$0xf]
        %v2138 = vld [vmem:[#allocation2 + $0x9] sm:$0xf]
        %v2140 = vlaneseq
        %v2141 = vshrl.u32 %v2140, 7
        %v2142 = vsub.s32 0, %v2141
        %v2143 = vrot.slane %v2133, %v2142
        %2145 = vmatprep.subr.mxu0 0.0
        %2146 = vmatpush1.msra.mxu0 %v2084
        %2147 = vmatprep.subr.mxu0 0.0
        %2148 = vmatpush1.msra.mxu0 %v2085
        %2149 = vmatprep.subr.mxu0 0.0
        %2150 = vmatpush1.msra.mxu0 %v2086
        %2151 = vmatprep.subr.mxu0 0.0
        %2152 = vmatpush1.msra.mxu0 %v2087
        %2153 = vmatprep.subr.mxu0 0.0
        %2154 = vmatpush1.msra.mxu0 %v2088
        %2155 = vmatprep.subr.mxu0 0.0
        %2156 = vmatpush1.msra.mxu0 %v2089
        %2157 = vmatprep.subr.mxu0 0.0
        %2158 = vmatpush1.msra.mxu0 %v2090
        %2159 = vmatprep.subr.mxu0 0.0
        %2160 = vmatpush1.msra.mxu0 %v2091
        %2161 = vmatprep.subr.mxu0 0.0
        %2162 = vmatpush1.msra.mxu0 %v2092
        %2163 = vmatprep.subr.mxu0 0.0
        %2164 = vmatpush1.msra.mxu0 %v2093
        %2165 = vmatprep.subr.mxu0 0.0
        %2166 = vmatpush1.msra.mxu0 %v2094
        %2167 = vmatprep.subr.mxu0 0.0
        %2168 = vmatpush1.msra.mxu0 %v2095
        %2169 = vmatprep.subr.mxu0 0.0
        %2170 = vmatpush1.msra.mxu0 %v2096
        %2171 = vmatprep.subr.mxu0 0.0
        %2172 = vmatpush1.msra.mxu0 %v2097
        %2173 = vmatprep.subr.mxu0 0.0
        %2174 = vmatpush1.msra.mxu0 %v2098
        %2175 = vmatprep.subr.mxu0 0.0
        %2176 = vmatpush1.msra.mxu0 %v2099
        %2177 = vmatprep.subr.mxu0 0.0
        %2178 = vmatpush1.msra.mxu0 %v2100
        %2179 = vmatprep.subr.mxu0 0.0
        %2180 = vmatpush1.msra.mxu0 %v2101
        %2181 = vmatprep.subr.mxu0 0.0
        %2182 = vmatpush1.msra.mxu0 %v2102
        %2183 = vmatprep.subr.mxu0 0.0
        %2184 = vmatpush1.msra.mxu0 %v2103
        %2185 = vmatprep.subr.mxu0 0.0
        %2186 = vmatpush1.msra.mxu0 %v2104
        %2187 = vmatprep.subr.mxu0 0.0
        %2188 = vmatpush1.msra.mxu0 %v2105
        %2189 = vmatprep.subr.mxu0 0.0
        %2190 = vmatpush1.msra.mxu0 %v2106
        %2191 = vmatprep.subr.mxu0 0.0
        %2192 = vmatpush1.msra.mxu0 %v2107
        %2193 = vmatprep.subr.mxu0 0.0
        %2194 = vmatpush1.msra.mxu0 %v2108
        %2195 = vmatprep.subr.mxu0 0.0
        %2196 = vmatpush1.msra.mxu0 %v2109
        %2197 = vmatprep.subr.mxu0 0.0
        %2198 = vmatpush1.msra.mxu0 %v2110
        %2199 = vmatprep.subr.mxu0 0.0
        %2200 = vmatpush1.msra.mxu0 %v2111
        %2201 = vmatprep.subr.mxu0 0.0
        %2202 = vmatpush1.msra.mxu0 %v2112
        %2203 = vmatprep.subr.mxu0 0.0
        %2204 = vmatpush1.msra.mxu0 %v2113
        %2205 = vmatprep.subr.mxu0 0.0
        %2206 = vmatpush1.msra.mxu0 %v2114
        %2207 = vmatprep.subr.mxu0 0.0
        %2208 = vmatpush1.msra.mxu0 %v2115
        %2209 = vmatprep.mubr.f32.mxu0 %v2082
        %2210 = vmatmul.mubr.f32.gmra.mrb[0].mxu0 %v2137
        %v2211 = vpop.f32.mrb[0].mxu0
        %v2212 = vadd.f32 %v2143, %v2211
        %v2213 = vpop.f32.mrb[0].mxu0
        %2214 = vdwg.mxu0
        %2215 = vmatprep.subr.mxu0 0.0
        %2216 = vmatpush1.msra.mxu0 %v2116
        %2217 = vmatprep.subr.mxu0 0.0
        %2218 = vmatpush1.msra.mxu0 %v2117
        %2219 = vmatprep.subr.mxu0 0.0
        %2220 = vmatpush1.msra.mxu0 %v2118
        %2221 = vmatprep.subr.mxu0 0.0
        %2222 = vmatpush1.msra.mxu0 %v2119
        %2223 = vmatprep.subr.mxu0 0.0
        %2224 = vmatpush1.msra.mxu0 %v2120
        %2225 = vmatprep.subr.mxu0 0.0
        %2226 = vmatpush1.msra.mxu0 %v2121
        %2227 = vmatprep.subr.mxu0 0.0
        %2228 = vmatpush1.msra.mxu0 %v2122
        %2229 = vmatprep.subr.mxu0 0.0
        %2230 = vmatpush1.msra.mxu0 %v2123
        %2231 = vmatprep.subr.mxu0 0.0
        %2232 = vmatpush1.msra.mxu0 %v2124
        %2233 = vmatprep.subr.mxu0 0.0
        %2234 = vmatpush1.msra.mxu0 %v2125
        %2235 = vmatprep.subr.mxu0 0.0
        %2236 = vmatpush1.msra.mxu0 %v2126
        %2237 = vmatprep.subr.mxu0 0.0
        %2238 = vmatpush1.msra.mxu0 %v2127
        %2239 = vmatprep.subr.mxu0 0.0
        %2240 = vmatpush1.msra.mxu0 %v2128
        %2241 = vmatprep.subr.mxu0 0.0
        %2242 = vmatpush1.msra.mxu0 %v2129
        %2243 = vmatprep.subr.mxu0 0.0
        %2244 = vmatpush1.msra.mxu0 %v2130
        %2245 = vmatprep.subr.mxu0 0.0
        %2246 = vmatpush1.msra.mxu0 %v2131
        %2247 = vmatprep.subr.mxu0 0.0
        %2248 = vmatpush1.msra.mxu0 0.0
        %2249 = vmatprep.subr.mxu0 0.0
        %2250 = vmatpush1.msra.mxu0 0.0
        %2251 = vmatprep.subr.mxu0 0.0
        %2252 = vmatpush1.msra.mxu0 0.0
        %2253 = vmatprep.subr.mxu0 0.0
        %2254 = vmatpush1.msra.mxu0 0.0
        %2255 = vmatprep.subr.mxu0 0.0
        %2256 = vmatpush1.msra.mxu0 0.0
        %2257 = vmatprep.subr.mxu0 0.0
        %2258 = vmatpush1.msra.mxu0 0.0
        %2259 = vmatprep.subr.mxu0 0.0
        %2260 = vmatpush1.msra.mxu0 0.0
        %2261 = vmatprep.subr.mxu0 0.0
        %2262 = vmatpush1.msra.mxu0 0.0
        %2263 = vmatprep.subr.mxu0 0.0
        %2264 = vmatpush1.msra.mxu0 0.0
        %2265 = vmatprep.subr.mxu0 0.0
        %2266 = vmatpush1.msra.mxu0 0.0
        %2267 = vmatprep.subr.mxu0 0.0
        %2268 = vmatpush1.msra.mxu0 0.0
        %2269 = vmatprep.subr.mxu0 0.0
        %2270 = vmatpush1.msra.mxu0 0.0
        %2271 = vmatprep.subr.mxu0 0.0
        %2272 = vmatpush1.msra.mxu0 0.0
        %2273 = vmatprep.subr.mxu0 0.0
        %2274 = vmatpush1.msra.mxu0 0.0
        %2275 = vmatprep.subr.mxu0 0.0
        %2276 = vmatpush1.msra.mxu0 0.0
        %2277 = vmatprep.subr.mxu0 0.0
        %2278 = vmatpush1.msra.mxu0 0.0
        %2279 = vmatprep.mubr.f32.mxu0 0.0
        %2280 = vmatmul.mubr.f32.gmra.mrb[0].mxu0 %v2138
        %v2281 = vpop.f32.mrb[0].mxu0
        %v2282 = vadd.f32 %v2212, %v2281
        %v2283 = vpop.f32.mrb[0].mxu0
        %2284 = vdwg.mxu0
        %v2285 = vadd.f32 %v2282, %v1842
        %2286 = vst [vmem:[#allocation2] sm:$0xf] %v2285
        %2287 = vst [vmem:[#allocation2 + $0x4] sm:$0x1] 0.0
        %v2288 = vld [vmem:[#allocation2] ss:$2 sm:$0x3]
        %v2289 = vld [vmem:[%s1395] ss:$2 sm:$0x3]
        %v2290 = vld [vmem:[%s1397] ss:$2 sm:$0x3]
        %v2291 = vmax.f32 %v2288, %v2289
        %v2292 = vmax.f32 %v2291, %v2290
        %s2293 = scalar_lea.vmem %s11, 2
        %v2294 = vld [vmem:[%s2293] sm:$0x1]
        %v2296 = vlaneseq
        %v2297 = vshrl.u32 %v2296, 7
        %v2298 = vsub.s32 0, %v2297
        %v2299 = vrot.slane %v2294, %v2298
        %v2301 = vmul.f32 %v2292, %v2299
        %s2302 = scalar_lea.vmem %s12, 2
        %v2303 = vld [vmem:[%s2302] sm:$0x1]
        %v2305 = vlaneseq
        %v2306 = vshrl.u32 %v2305, 7
        %v2307 = vsub.s32 0, %v2306
        %v2308 = vrot.slane %v2303, %v2307
        %v2310 = vadd.f32 %v2301, %v2308
        %v2311 = vmax.f32 %v2310, 0.0
        %s2312 = scalar_lea.vmem %s13, 768
        %v2313 = vld [vmem:[%s2312] sm:$0xff]
        %v2314 = vld [vmem:[%s2312 + $0x8] sm:$0xff]
        %v2315 = vld [vmem:[%s2312 + $0x10] sm:$0xff]
        %v2316 = vld [vmem:[%s2312 + $0x18] sm:$0xff]
        %v2317 = vld [vmem:[%s2312 + $0x20] sm:$0xff]
        %v2318 = vld [vmem:[%s2312 + $0x28] sm:$0xff]
        %v2319 = vld [vmem:[%s2312 + $0x30] sm:$0xff]
        %v2320 = vld [vmem:[%s2312 + $0x38] sm:$0xff]
        %v2321 = vld [vmem:[%s2312 + $0x40] sm:$0xff]
        %v2322 = vld [vmem:[%s2312 + $0x48] sm:$0xff]
        %v2323 = vld [vmem:[%s2312 + $0x50] sm:$0xff]
        %v2324 = vld [vmem:[%s2312 + $0x58] sm:$0xff]
        %v2325 = vld [vmem:[%s2312 + $0x60] sm:$0xff]
        %v2326 = vld [vmem:[%s2312 + $0x68] sm:$0xff]
        %v2327 = vld [vmem:[%s2312 + $0x70] sm:$0xff]
        %v2328 = vld [vmem:[%s2312 + $0x78] sm:$0xff]
        %v2329 = vld [vmem:[%s2312 + $0x80] sm:$0xff]
        %v2330 = vld [vmem:[%s2312 + $0x88] sm:$0xff]
        %v2331 = vld [vmem:[%s2312 + $0x90] sm:$0xff]
        %v2332 = vld [vmem:[%s2312 + $0x98] sm:$0xff]
        %v2333 = vld [vmem:[%s2312 + $0xa0] sm:$0xff]
        %v2334 = vld [vmem:[%s2312 + $0xa8] sm:$0xff]
        %v2335 = vld [vmem:[%s2312 + $0xb0] sm:$0xff]
        %v2336 = vld [vmem:[%s2312 + $0xb8] sm:$0xff]
        %v2337 = vld [vmem:[%s2312 + $0xc0] sm:$0xff]
        %v2338 = vld [vmem:[%s2312 + $0xc8] sm:$0xff]
        %v2339 = vld [vmem:[%s2312 + $0xd0] sm:$0xff]
        %v2340 = vld [vmem:[%s2312 + $0xd8] sm:$0xff]
        %v2341 = vld [vmem:[%s2312 + $0xe0] sm:$0xff]
        %v2342 = vld [vmem:[%s2312 + $0xe8] sm:$0xff]
        %v2343 = vld [vmem:[%s2312 + $0xf0] sm:$0xff]
        %v2344 = vld [vmem:[%s2312 + $0xf8] sm:$0xff]
        %v2345 = vld [vmem:[%s2312 + $0x100] sm:$0xff]
        %v2346 = vld [vmem:[%s2312 + $0x108] sm:$0xff]
        %v2347 = vld [vmem:[%s2312 + $0x110] sm:$0xff]
        %v2348 = vld [vmem:[%s2312 + $0x118] sm:$0xff]
        %v2349 = vld [vmem:[%s2312 + $0x120] sm:$0xff]
        %v2350 = vld [vmem:[%s2312 + $0x128] sm:$0xff]
        %v2351 = vld [vmem:[%s2312 + $0x130] sm:$0xff]
        %v2352 = vld [vmem:[%s2312 + $0x138] sm:$0xff]
        %v2353 = vld [vmem:[%s2312 + $0x140] sm:$0xff]
        %v2354 = vld [vmem:[%s2312 + $0x148] sm:$0xff]
        %v2355 = vld [vmem:[%s2312 + $0x150] sm:$0xff]
        %v2356 = vld [vmem:[%s2312 + $0x158] sm:$0xff]
        %v2357 = vld [vmem:[%s2312 + $0x160] sm:$0xff]
        %v2358 = vld [vmem:[%s2312 + $0x168] sm:$0xff]
        %v2359 = vld [vmem:[%s2312 + $0x170] sm:$0xff]
        %v2360 = vld [vmem:[%s2312 + $0x178] sm:$0xff]
        %s2361 = scalar_lea.vmem %s14, 2
        %v2362 = vld [vmem:[%s2361] sm:$0x1]
        %2363 = vst [vmem:[#allocation2 + $0x7] sm:$0x1] 0.0
        %2364 = vst [vmem:[#allocation2 + $0x8] sm:$0x3] %v2311
        %2365 = vst [vmem:[#allocation2 + $0xa] sm:$0x1] 0.0
        %v2366 = vld [vmem:[#allocation2 + $0x7] sm:$0x3]
        %v2367 = vld [vmem:[#allocation2 + $0x9] sm:$0x3]
        %v2369 = vlaneseq
        %v2370 = vshrl.u32 %v2369, 7
        %v2371 = vsub.s32 0, %v2370
        %v2372 = vrot.slane %v2362, %v2371
        %2374 = vmatprep.subr.mxu0 0.0
        %2375 = vmatpush1.msra.mxu0 %v2313
        %2376 = vmatprep.subr.mxu0 0.0
        %2377 = vmatpush1.msra.mxu0 %v2314
        %2378 = vmatprep.subr.mxu0 0.0
        %2379 = vmatpush1.msra.mxu0 %v2315
        %2380 = vmatprep.subr.mxu0 0.0
        %2381 = vmatpush1.msra.mxu0 %v2316
        %2382 = vmatprep.subr.mxu0 0.0
        %2383 = vmatpush1.msra.mxu0 %v2317
        %2384 = vmatprep.subr.mxu0 0.0
        %2385 = vmatpush1.msra.mxu0 %v2318
        %2386 = vmatprep.subr.mxu0 0.0
        %2387 = vmatpush1.msra.mxu0 %v2319
        %2388 = vmatprep.subr.mxu0 0.0
        %2389 = vmatpush1.msra.mxu0 %v2320
        %2390 = vmatprep.subr.mxu0 0.0
        %2391 = vmatpush1.msra.mxu0 %v2321
        %2392 = vmatprep.subr.mxu0 0.0
        %2393 = vmatpush1.msra.mxu0 %v2322
        %2394 = vmatprep.subr.mxu0 0.0
        %2395 = vmatpush1.msra.mxu0 %v2323
        %2396 = vmatprep.subr.mxu0 0.0
        %2397 = vmatpush1.msra.mxu0 %v2324
        %2398 = vmatprep.subr.mxu0 0.0
        %2399 = vmatpush1.msra.mxu0 %v2325
        %2400 = vmatprep.subr.mxu0 0.0
        %2401 = vmatpush1.msra.mxu0 %v2326
        %2402 = vmatprep.subr.mxu0 0.0
        %2403 = vmatpush1.msra.mxu0 %v2327
        %2404 = vmatprep.subr.mxu0 0.0
        %2405 = vmatpush1.msra.mxu0 %v2328
        %2406 = vmatprep.subr.mxu0 0.0
        %2407 = vmatpush1.msra.mxu0 %v2329
        %2408 = vmatprep.subr.mxu0 0.0
        %2409 = vmatpush1.msra.mxu0 %v2330
        %2410 = vmatprep.subr.mxu0 0.0
        %2411 = vmatpush1.msra.mxu0 %v2331
        %2412 = vmatprep.subr.mxu0 0.0
        %2413 = vmatpush1.msra.mxu0 %v2332
        %2414 = vmatprep.subr.mxu0 0.0
        %2415 = vmatpush1.msra.mxu0 %v2333
        %2416 = vmatprep.subr.mxu0 0.0
        %2417 = vmatpush1.msra.mxu0 %v2334
        %2418 = vmatprep.subr.mxu0 0.0
        %2419 = vmatpush1.msra.mxu0 %v2335
        %2420 = vmatprep.subr.mxu0 0.0
        %2421 = vmatpush1.msra.mxu0 %v2336
        %2422 = vmatprep.subr.mxu0 0.0
        %2423 = vmatpush1.msra.mxu0 %v2337
        %2424 = vmatprep.subr.mxu0 0.0
        %2425 = vmatpush1.msra.mxu0 %v2338
        %2426 = vmatprep.subr.mxu0 0.0
        %2427 = vmatpush1.msra.mxu0 %v2339
        %2428 = vmatprep.subr.mxu0 0.0
        %2429 = vmatpush1.msra.mxu0 %v2340
        %2430 = vmatprep.subr.mxu0 0.0
        %2431 = vmatpush1.msra.mxu0 %v2341
        %2432 = vmatprep.subr.mxu0 0.0
        %2433 = vmatpush1.msra.mxu0 %v2342
        %2434 = vmatprep.subr.mxu0 0.0
        %2435 = vmatpush1.msra.mxu0 %v2343
        %2436 = vmatprep.subr.mxu0 0.0
        %2437 = vmatpush1.msra.mxu0 %v2344
        %2438 = vmatprep.mubr.f32.mxu0 %v2311
        %2439 = vmatmul.mubr.f32.gmra.mrb[0].mxu0 %v2366
        %v2440 = vpop.f32.mrb[0].mxu0
        %v2441 = vadd.f32 %v2372, %v2440
        %v2442 = vpop.f32.mrb[0].mxu0
        %2443 = vdwg.mxu0
        %2444 = vmatprep.subr.mxu0 0.0
        %2445 = vmatpush1.msra.mxu0 %v2345
        %2446 = vmatprep.subr.mxu0 0.0
        %2447 = vmatpush1.msra.mxu0 %v2346
        %2448 = vmatprep.subr.mxu0 0.0
        %2449 = vmatpush1.msra.mxu0 %v2347
        %2450 = vmatprep.subr.mxu0 0.0
        %2451 = vmatpush1.msra.mxu0 %v2348
        %2452 = vmatprep.subr.mxu0 0.0
        %2453 = vmatpush1.msra.mxu0 %v2349
        %2454 = vmatprep.subr.mxu0 0.0
        %2455 = vmatpush1.msra.mxu0 %v2350
        %2456 = vmatprep.subr.mxu0 0.0
        %2457 = vmatpush1.msra.mxu0 %v2351
        %2458 = vmatprep.subr.mxu0 0.0
        %2459 = vmatpush1.msra.mxu0 %v2352
        %2460 = vmatprep.subr.mxu0 0.0
        %2461 = vmatpush1.msra.mxu0 %v2353
        %2462 = vmatprep.subr.mxu0 0.0
        %2463 = vmatpush1.msra.mxu0 %v2354
        %2464 = vmatprep.subr.mxu0 0.0
        %2465 = vmatpush1.msra.mxu0 %v2355
        %2466 = vmatprep.subr.mxu0 0.0
        %2467 = vmatpush1.msra.mxu0 %v2356
        %2468 = vmatprep.subr.mxu0 0.0
        %2469 = vmatpush1.msra.mxu0 %v2357
        %2470 = vmatprep.subr.mxu0 0.0
        %2471 = vmatpush1.msra.mxu0 %v2358
        %2472 = vmatprep.subr.mxu0 0.0
        %2473 = vmatpush1.msra.mxu0 %v2359
        %2474 = vmatprep.subr.mxu0 0.0
        %2475 = vmatpush1.msra.mxu0 %v2360
        %2476 = vmatprep.subr.mxu0 0.0
        %2477 = vmatpush1.msra.mxu0 0.0
        %2478 = vmatprep.subr.mxu0 0.0
        %2479 = vmatpush1.msra.mxu0 0.0
        %2480 = vmatprep.subr.mxu0 0.0
        %2481 = vmatpush1.msra.mxu0 0.0
        %2482 = vmatprep.subr.mxu0 0.0
        %2483 = vmatpush1.msra.mxu0 0.0
        %2484 = vmatprep.subr.mxu0 0.0
        %2485 = vmatpush1.msra.mxu0 0.0
        %2486 = vmatprep.subr.mxu0 0.0
        %2487 = vmatpush1.msra.mxu0 0.0
        %2488 = vmatprep.subr.mxu0 0.0
        %2489 = vmatpush1.msra.mxu0 0.0
        %2490 = vmatprep.subr.mxu0 0.0
        %2491 = vmatpush1.msra.mxu0 0.0
        %2492 = vmatprep.subr.mxu0 0.0
        %2493 = vmatpush1.msra.mxu0 0.0
        %2494 = vmatprep.subr.mxu0 0.0
        %2495 = vmatpush1.msra.mxu0 0.0
        %2496 = vmatprep.subr.mxu0 0.0
        %2497 = vmatpush1.msra.mxu0 0.0
        %2498 = vmatprep.subr.mxu0 0.0
        %2499 = vmatpush1.msra.mxu0 0.0
        %2500 = vmatprep.subr.mxu0 0.0
        %2501 = vmatpush1.msra.mxu0 0.0
        %2502 = vmatprep.subr.mxu0 0.0
        %2503 = vmatpush1.msra.mxu0 0.0
        %2504 = vmatprep.subr.mxu0 0.0
        %2505 = vmatpush1.msra.mxu0 0.0
        %2506 = vmatprep.subr.mxu0 0.0
        %2507 = vmatpush1.msra.mxu0 0.0
        %2508 = vmatprep.mubr.f32.mxu0 0.0
        %2509 = vmatmul.mubr.f32.gmra.mrb[0].mxu0 %v2367
        %v2510 = vpop.f32.mrb[0].mxu0
        %v2511 = vadd.f32 %v2441, %v2510
        %v2512 = vpop.f32.mrb[0].mxu0
        %2513 = vdwg.mxu0
        %s2514 = scalar_lea.vmem %s15, 2
        %v2515 = vld [vmem:[%s2514] sm:$0x1]
        %v2517 = vlaneseq
        %v2518 = vshrl.u32 %v2517, 7
        %v2519 = vsub.s32 0, %v2518
        %v2520 = vrot.slane %v2515, %v2519
        %v2522 = vmul.f32 %v2511, %v2520
        %s2523 = scalar_lea.vmem %s16, 2
        %v2524 = vld [vmem:[%s2523] sm:$0x1]
        %v2526 = vlaneseq
        %v2527 = vshrl.u32 %v2526, 7
        %v2528 = vsub.s32 0, %v2527
        %v2529 = vrot.slane %v2524, %v2528
        %v2531 = vadd.f32 %v2522, %v2529
        %v2532 = vmax.f32 %v2531, 0.0
        %s2533 = scalar_lea.vmem %s17, 768
        %v2534 = vld [vmem:[%s2533] sm:$0xff]
        %v2535 = vld [vmem:[%s2533 + $0x8] sm:$0xff]
        %v2536 = vld [vmem:[%s2533 + $0x10] sm:$0xff]
        %v2537 = vld [vmem:[%s2533 + $0x18] sm:$0xff]
        %v2538 = vld [vmem:[%s2533 + $0x20] sm:$0xff]
        %v2539 = vld [vmem:[%s2533 + $0x28] sm:$0xff]
        %v2540 = vld [vmem:[%s2533 + $0x30] sm:$0xff]
        %v2541 = vld [vmem:[%s2533 + $0x38] sm:$0xff]
        %v2542 = vld [vmem:[%s2533 + $0x40] sm:$0xff]
        %v2543 = vld [vmem:[%s2533 + $0x48] sm:$0xff]
        %v2544 = vld [vmem:[%s2533 + $0x50] sm:$0xff]
        %v2545 = vld [vmem:[%s2533 + $0x58] sm:$0xff]
        %v2546 = vld [vmem:[%s2533 + $0x60] sm:$0xff]
        %v2547 = vld [vmem:[%s2533 + $0x68] sm:$0xff]
        %v2548 = vld [vmem:[%s2533 + $0x70] sm:$0xff]
        %v2549 = vld [vmem:[%s2533 + $0x78] sm:$0xff]
        %v2550 = vld [vmem:[%s2533 + $0x80] sm:$0xff]
        %v2551 = vld [vmem:[%s2533 + $0x88] sm:$0xff]
        %v2552 = vld [vmem:[%s2533 + $0x90] sm:$0xff]
        %v2553 = vld [vmem:[%s2533 + $0x98] sm:$0xff]
        %v2554 = vld [vmem:[%s2533 + $0xa0] sm:$0xff]
        %v2555 = vld [vmem:[%s2533 + $0xa8] sm:$0xff]
        %v2556 = vld [vmem:[%s2533 + $0xb0] sm:$0xff]
        %v2557 = vld [vmem:[%s2533 + $0xb8] sm:$0xff]
        %v2558 = vld [vmem:[%s2533 + $0xc0] sm:$0xff]
        %v2559 = vld [vmem:[%s2533 + $0xc8] sm:$0xff]
        %v2560 = vld [vmem:[%s2533 + $0xd0] sm:$0xff]
        %v2561 = vld [vmem:[%s2533 + $0xd8] sm:$0xff]
        %v2562 = vld [vmem:[%s2533 + $0xe0] sm:$0xff]
        %v2563 = vld [vmem:[%s2533 + $0xe8] sm:$0xff]
        %v2564 = vld [vmem:[%s2533 + $0xf0] sm:$0xff]
        %v2565 = vld [vmem:[%s2533 + $0xf8] sm:$0xff]
        %v2566 = vld [vmem:[%s2533 + $0x100] sm:$0xff]
        %v2567 = vld [vmem:[%s2533 + $0x108] sm:$0xff]
        %v2568 = vld [vmem:[%s2533 + $0x110] sm:$0xff]
        %v2569 = vld [vmem:[%s2533 + $0x118] sm:$0xff]
        %v2570 = vld [vmem:[%s2533 + $0x120] sm:$0xff]
        %v2571 = vld [vmem:[%s2533 + $0x128] sm:$0xff]
        %v2572 = vld [vmem:[%s2533 + $0x130] sm:$0xff]
        %v2573 = vld [vmem:[%s2533 + $0x138] sm:$0xff]
        %v2574 = vld [vmem:[%s2533 + $0x140] sm:$0xff]
        %v2575 = vld [vmem:[%s2533 + $0x148] sm:$0xff]
        %v2576 = vld [vmem:[%s2533 + $0x150] sm:$0xff]
        %v2577 = vld [vmem:[%s2533 + $0x158] sm:$0xff]
        %v2578 = vld [vmem:[%s2533 + $0x160] sm:$0xff]
        %v2579 = vld [vmem:[%s2533 + $0x168] sm:$0xff]
        %v2580 = vld [vmem:[%s2533 + $0x170] sm:$0xff]
        %v2581 = vld [vmem:[%s2533 + $0x178] sm:$0xff]
        %s2582 = scalar_lea.vmem %s18, 2
        %v2583 = vld [vmem:[%s2582] sm:$0x1]
        %2584 = vst [vmem:[#allocation2 + $0x7] sm:$0x1] 0.0
        %2585 = vst [vmem:[#allocation2 + $0x8] sm:$0x3] %v2532
        %2586 = vst [vmem:[#allocation2 + $0xa] sm:$0x1] 0.0
        %v2587 = vld [vmem:[#allocation2 + $0x7] sm:$0x3]
        %v2588 = vld [vmem:[#allocation2 + $0x9] sm:$0x3]
        %v2590 = vlaneseq
        %v2591 = vshrl.u32 %v2590, 7
        %v2592 = vsub.s32 0, %v2591
        %v2593 = vrot.slane %v2583, %v2592
        %2595 = vmatprep.subr.mxu0 0.0
        %2596 = vmatpush1.msra.mxu0 %v2534
        %2597 = vmatprep.subr.mxu0 0.0
        %2598 = vmatpush1.msra.mxu0 %v2535
        %2599 = vmatprep.subr.mxu0 0.0
        %2600 = vmatpush1.msra.mxu0 %v2536
        %2601 = vmatprep.subr.mxu0 0.0
        %2602 = vmatpush1.msra.mxu0 %v2537
        %2603 = vmatprep.subr.mxu0 0.0
        %2604 = vmatpush1.msra.mxu0 %v2538
        %2605 = vmatprep.subr.mxu0 0.0
        %2606 = vmatpush1.msra.mxu0 %v2539
        %2607 = vmatprep.subr.mxu0 0.0
        %2608 = vmatpush1.msra.mxu0 %v2540
        %2609 = vmatprep.subr.mxu0 0.0
        %2610 = vmatpush1.msra.mxu0 %v2541
        %2611 = vmatprep.subr.mxu0 0.0
        %2612 = vmatpush1.msra.mxu0 %v2542
        %2613 = vmatprep.subr.mxu0 0.0
        %2614 = vmatpush1.msra.mxu0 %v2543
        %2615 = vmatprep.subr.mxu0 0.0
        %2616 = vmatpush1.msra.mxu0 %v2544
        %2617 = vmatprep.subr.mxu0 0.0
        %2618 = vmatpush1.msra.mxu0 %v2545
        %2619 = vmatprep.subr.mxu0 0.0
        %2620 = vmatpush1.msra.mxu0 %v2546
        %2621 = vmatprep.subr.mxu0 0.0
        %2622 = vmatpush1.msra.mxu0 %v2547
        %2623 = vmatprep.subr.mxu0 0.0
        %2624 = vmatpush1.msra.mxu0 %v2548
        %2625 = vmatprep.subr.mxu0 0.0
        %2626 = vmatpush1.msra.mxu0 %v2549
        %2627 = vmatprep.subr.mxu0 0.0
        %2628 = vmatpush1.msra.mxu0 %v2550
        %2629 = vmatprep.subr.mxu0 0.0
        %2630 = vmatpush1.msra.mxu0 %v2551
        %2631 = vmatprep.subr.mxu0 0.0
        %2632 = vmatpush1.msra.mxu0 %v2552
        %2633 = vmatprep.subr.mxu0 0.0
        %2634 = vmatpush1.msra.mxu0 %v2553
        %2635 = vmatprep.subr.mxu0 0.0
        %2636 = vmatpush1.msra.mxu0 %v2554
        %2637 = vmatprep.subr.mxu0 0.0
        %2638 = vmatpush1.msra.mxu0 %v2555
        %2639 = vmatprep.subr.mxu0 0.0
        %2640 = vmatpush1.msra.mxu0 %v2556
        %2641 = vmatprep.subr.mxu0 0.0
        %2642 = vmatpush1.msra.mxu0 %v2557
        %2643 = vmatprep.subr.mxu0 0.0
        %2644 = vmatpush1.msra.mxu0 %v2558
        %2645 = vmatprep.subr.mxu0 0.0
        %2646 = vmatpush1.msra.mxu0 %v2559
        %2647 = vmatprep.subr.mxu0 0.0
        %2648 = vmatpush1.msra.mxu0 %v2560
        %2649 = vmatprep.subr.mxu0 0.0
        %2650 = vmatpush1.msra.mxu0 %v2561
        %2651 = vmatprep.subr.mxu0 0.0
        %2652 = vmatpush1.msra.mxu0 %v2562
        %2653 = vmatprep.subr.mxu0 0.0
        %2654 = vmatpush1.msra.mxu0 %v2563
        %2655 = vmatprep.subr.mxu0 0.0
        %2656 = vmatpush1.msra.mxu0 %v2564
        %2657 = vmatprep.subr.mxu0 0.0
        %2658 = vmatpush1.msra.mxu0 %v2565
        %2659 = vmatprep.mubr.f32.mxu0 %v2532
        %2660 = vmatmul.mubr.f32.gmra.mrb[0].mxu0 %v2587
        %v2661 = vpop.f32.mrb[0].mxu0
        %v2662 = vadd.f32 %v2593, %v2661
        %v2663 = vpop.f32.mrb[0].mxu0
        %2664 = vdwg.mxu0
        %2665 = vmatprep.subr.mxu0 0.0
        %2666 = vmatpush1.msra.mxu0 %v2566
        %2667 = vmatprep.subr.mxu0 0.0
        %2668 = vmatpush1.msra.mxu0 %v2567
        %2669 = vmatprep.subr.mxu0 0.0
        %2670 = vmatpush1.msra.mxu0 %v2568
        %2671 = vmatprep.subr.mxu0 0.0
        %2672 = vmatpush1.msra.mxu0 %v2569
        %2673 = vmatprep.subr.mxu0 0.0
        %2674 = vmatpush1.msra.mxu0 %v2570
        %2675 = vmatprep.subr.mxu0 0.0
        %2676 = vmatpush1.msra.mxu0 %v2571
        %2677 = vmatprep.subr.mxu0 0.0
        %2678 = vmatpush1.msra.mxu0 %v2572
        %2679 = vmatprep.subr.mxu0 0.0
        %2680 = vmatpush1.msra.mxu0 %v2573
        %2681 = vmatprep.subr.mxu0 0.0
        %2682 = vmatpush1.msra.mxu0 %v2574
        %2683 = vmatprep.subr.mxu0 0.0
        %2684 = vmatpush1.msra.mxu0 %v2575
        %2685 = vmatprep.subr.mxu0 0.0
        %2686 = vmatpush1.msra.mxu0 %v2576
        %2687 = vmatprep.subr.mxu0 0.0
        %2688 = vmatpush1.msra.mxu0 %v2577
        %2689 = vmatprep.subr.mxu0 0.0
        %2690 = vmatpush1.msra.mxu0 %v2578
        %2691 = vmatprep.subr.mxu0 0.0
        %2692 = vmatpush1.msra.mxu0 %v2579
        %2693 = vmatprep.subr.mxu0 0.0
        %2694 = vmatpush1.msra.mxu0 %v2580
        %2695 = vmatprep.subr.mxu0 0.0
        %2696 = vmatpush1.msra.mxu0 %v2581
        %2697 = vmatprep.subr.mxu0 0.0
        %2698 = vmatpush1.msra.mxu0 0.0
        %2699 = vmatprep.subr.mxu0 0.0
        %2700 = vmatpush1.msra.mxu0 0.0
        %2701 = vmatprep.subr.mxu0 0.0
        %2702 = vmatpush1.msra.mxu0 0.0
        %2703 = vmatprep.subr.mxu0 0.0
        %2704 = vmatpush1.msra.mxu0 0.0
        %2705 = vmatprep.subr.mxu0 0.0
        %2706 = vmatpush1.msra.mxu0 0.0
        %2707 = vmatprep.subr.mxu0 0.0
        %2708 = vmatpush1.msra.mxu0 0.0
        %2709 = vmatprep.subr.mxu0 0.0
        %2710 = vmatpush1.msra.mxu0 0.0
        %2711 = vmatprep.subr.mxu0 0.0
        %2712 = vmatpush1.msra.mxu0 0.0
        %2713 = vmatprep.subr.mxu0 0.0
        %2714 = vmatpush1.msra.mxu0 0.0
        %2715 = vmatprep.subr.mxu0 0.0
        %2716 = vmatpush1.msra.mxu0 0.0
        %2717 = vmatprep.subr.mxu0 0.0
        %2718 = vmatpush1.msra.mxu0 0.0
        %2719 = vmatprep.subr.mxu0 0.0
        %2720 = vmatpush1.msra.mxu0 0.0
        %2721 = vmatprep.subr.mxu0 0.0
        %2722 = vmatpush1.msra.mxu0 0.0
        %2723 = vmatprep.subr.mxu0 0.0
        %2724 = vmatpush1.msra.mxu0 0.0
        %2725 = vmatprep.subr.mxu0 0.0
        %2726 = vmatpush1.msra.mxu0 0.0
        %2727 = vmatprep.subr.mxu0 0.0
        %2728 = vmatpush1.msra.mxu0 0.0
        %2729 = vmatprep.mubr.f32.mxu0 0.0
        %2730 = vmatmul.mubr.f32.gmra.mrb[0].mxu0 %v2588
        %v2731 = vpop.f32.mrb[0].mxu0
        %v2732 = vadd.f32 %v2662, %v2731
        %v2733 = vpop.f32.mrb[0].mxu0
        %2734 = vdwg.mxu0
        %v2735 = vadd.f32 %v2732, %v2292
        %v2736 = vld [vmem:[%s20] sm:$0x1]
        %v2737 = vld [vmem:[%s19] sm:$0xff]
        %v2738 = vld [vmem:[%s19 + $0x8] sm:$0xff]
        %v2739 = vld [vmem:[%s19 + $0x10] sm:$0xff]
        %v2740 = vld [vmem:[%s19 + $0x18] sm:$0xff]
        %v2741 = vld [vmem:[%s19 + $0x20] sm:$0xff]
        %v2742 = vld [vmem:[%s19 + $0x28] sm:$0xff]
        %v2743 = vld [vmem:[%s19 + $0x30] sm:$0xff]
        %v2744 = vld [vmem:[%s19 + $0x38] sm:$0xff]
        %v2745 = vld [vmem:[%s19 + $0x40] sm:$0xff]
        %v2746 = vld [vmem:[%s19 + $0x48] sm:$0xff]
        %v2747 = vld [vmem:[%s19 + $0x50] sm:$0xff]
        %v2748 = vld [vmem:[%s19 + $0x58] sm:$0xff]
        %v2749 = vld [vmem:[%s19 + $0x60] sm:$0xff]
        %v2750 = vld [vmem:[%s19 + $0x68] sm:$0xff]
        %v2751 = vld [vmem:[%s19 + $0x70] sm:$0xff]
        %v2752 = vld [vmem:[%s19 + $0x78] sm:$0xff]
        %2753 = vmatprep.subr.mxu0 0.0
        %2754 = vmatpush1.msra.mxu0 %v2737
        %2755 = vmatprep.subr.mxu0 0.0
        %2756 = vmatpush1.msra.mxu0 %v2738
        %2757 = vmatprep.subr.mxu0 0.0
        %2758 = vmatpush1.msra.mxu0 %v2739
        %2759 = vmatprep.subr.mxu0 0.0
        %2760 = vmatpush1.msra.mxu0 %v2740
        %2761 = vmatprep.subr.mxu0 0.0
        %2762 = vmatpush1.msra.mxu0 %v2741
        %2763 = vmatprep.subr.mxu0 0.0
        %2764 = vmatpush1.msra.mxu0 %v2742
        %2765 = vmatprep.subr.mxu0 0.0
        %2766 = vmatpush1.msra.mxu0 %v2743
        %2767 = vmatprep.subr.mxu0 0.0
        %2768 = vmatpush1.msra.mxu0 %v2744
        %2769 = vmatprep.subr.mxu0 0.0
        %2770 = vmatpush1.msra.mxu0 %v2745
        %2771 = vmatprep.subr.mxu0 0.0
        %2772 = vmatpush1.msra.mxu0 %v2746
        %2773 = vmatprep.subr.mxu0 0.0
        %2774 = vmatpush1.msra.mxu0 %v2747
        %2775 = vmatprep.subr.mxu0 0.0
        %2776 = vmatpush1.msra.mxu0 %v2748
        %2777 = vmatprep.subr.mxu0 0.0
        %2778 = vmatpush1.msra.mxu0 %v2749
        %2779 = vmatprep.subr.mxu0 0.0
        %2780 = vmatpush1.msra.mxu0 %v2750
        %2781 = vmatprep.subr.mxu0 0.0
        %2782 = vmatpush1.msra.mxu0 %v2751
        %2783 = vmatprep.subr.mxu0 0.0
        %2784 = vmatpush1.msra.mxu0 %v2752
        %2785 = vmatprep.subr.mxu0 0.0
        %2786 = vmatpush1.msra.mxu0 0.0
        %2787 = vmatprep.subr.mxu0 0.0
        %2788 = vmatpush1.msra.mxu0 0.0
        %2789 = vmatprep.subr.mxu0 0.0
        %2790 = vmatpush1.msra.mxu0 0.0
        %2791 = vmatprep.subr.mxu0 0.0
        %2792 = vmatpush1.msra.mxu0 0.0
        %2793 = vmatprep.subr.mxu0 0.0
        %2794 = vmatpush1.msra.mxu0 0.0
        %2795 = vmatprep.subr.mxu0 0.0
        %2796 = vmatpush1.msra.mxu0 0.0
        %2797 = vmatprep.subr.mxu0 0.0
        %2798 = vmatpush1.msra.mxu0 0.0
        %2799 = vmatprep.subr.mxu0 0.0
        %2800 = vmatpush1.msra.mxu0 0.0
        %2801 = vmatprep.subr.mxu0 0.0
        %2802 = vmatpush1.msra.mxu0 0.0
        %2803 = vmatprep.subr.mxu0 0.0
        %2804 = vmatpush1.msra.mxu0 0.0
        %2805 = vmatprep.subr.mxu0 0.0
        %2806 = vmatpush1.msra.mxu0 0.0
        %2807 = vmatprep.subr.mxu0 0.0
        %2808 = vmatpush1.msra.mxu0 0.0
        %2809 = vmatprep.subr.mxu0 0.0
        %2810 = vmatpush1.msra.mxu0 0.0
        %2811 = vmatprep.subr.mxu0 0.0
        %2812 = vmatpush1.msra.mxu0 0.0
        %2813 = vmatprep.subr.mxu0 0.0
        %2814 = vmatpush1.msra.mxu0 0.0
        %2815 = vmatprep.subr.mxu0 0.0
        %2816 = vmatpush1.msra.mxu0 0.0
        %2817 = vmatprep.mubr.f32.mxu0 0.0
        %2818 = vmatmul.mubr.f32.gmra.mrb[0].mxu0 %v2735
        %v2819 = vpop.f32.mrb[0].mxu0
        %v2820 = vadd.f32 0.0, %v2819
        %v2821 = vpop.f32.mrb[0].mxu0
        %2822 = vdwg.mxu0
        %v2823 = vadd.f32 %v2736, %v2820
        %s2824 = scalar_lea.vmem %s19, 128
        %v2825 = vld [vmem:[%s2824] sm:$0xff]
        %v2826 = vld [vmem:[%s2824 + $0x8] sm:$0xff]
        %v2827 = vld [vmem:[%s2824 + $0x10] sm:$0xff]
        %v2828 = vld [vmem:[%s2824 + $0x18] sm:$0xff]
        %v2829 = vld [vmem:[%s2824 + $0x20] sm:$0xff]
        %v2830 = vld [vmem:[%s2824 + $0x28] sm:$0xff]
        %v2831 = vld [vmem:[%s2824 + $0x30] sm:$0xff]
        %v2832 = vld [vmem:[%s2824 + $0x38] sm:$0xff]
        %v2833 = vld [vmem:[%s2824 + $0x40] sm:$0xff]
        %v2834 = vld [vmem:[%s2824 + $0x48] sm:$0xff]
        %v2835 = vld [vmem:[%s2824 + $0x50] sm:$0xff]
        %v2836 = vld [vmem:[%s2824 + $0x58] sm:$0xff]
        %v2837 = vld [vmem:[%s2824 + $0x60] sm:$0xff]
        %v2838 = vld [vmem:[%s2824 + $0x68] sm:$0xff]
        %v2839 = vld [vmem:[%s2824 + $0x70] sm:$0xff]
        %v2840 = vld [vmem:[%s2824 + $0x78] sm:$0xff]
        %v2842 = vrot.slane %v2735, 1
        %2844 = vmatprep.subr.mxu0 0.0
        %2845 = vmatpush1.msra.mxu0 %v2825
        %2846 = vmatprep.subr.mxu0 0.0
        %2847 = vmatpush1.msra.mxu0 %v2826
        %2848 = vmatprep.subr.mxu0 0.0
        %2849 = vmatpush1.msra.mxu0 %v2827
        %2850 = vmatprep.subr.mxu0 0.0
        %2851 = vmatpush1.msra.mxu0 %v2828
        %2852 = vmatprep.subr.mxu0 0.0
        %2853 = vmatpush1.msra.mxu0 %v2829
        %2854 = vmatprep.subr.mxu0 0.0
        %2855 = vmatpush1.msra.mxu0 %v2830
        %2856 = vmatprep.subr.mxu0 0.0
        %2857 = vmatpush1.msra.mxu0 %v2831
        %2858 = vmatprep.subr.mxu0 0.0
        %2859 = vmatpush1.msra.mxu0 %v2832
        %2860 = vmatprep.subr.mxu0 0.0
        %2861 = vmatpush1.msra.mxu0 %v2833
        %2862 = vmatprep.subr.mxu0 0.0
        %2863 = vmatpush1.msra.mxu0 %v2834
        %2864 = vmatprep.subr.mxu0 0.0
        %2865 = vmatpush1.msra.mxu0 %v2835
        %2866 = vmatprep.subr.mxu0 0.0
        %2867 = vmatpush1.msra.mxu0 %v2836
        %2868 = vmatprep.subr.mxu0 0.0
        %2869 = vmatpush1.msra.mxu0 %v2837
        %2870 = vmatprep.subr.mxu0 0.0
        %2871 = vmatpush1.msra.mxu0 %v2838
        %2872 = vmatprep.subr.mxu0 0.0
        %2873 = vmatpush1.msra.mxu0 %v2839
        %2874 = vmatprep.subr.mxu0 0.0
        %2875 = vmatpush1.msra.mxu0 %v2840
        %2876 = vmatprep.subr.mxu0 0.0
        %2877 = vmatpush1.msra.mxu0 0.0
        %2878 = vmatprep.subr.mxu0 0.0
        %2879 = vmatpush1.msra.mxu0 0.0
        %2880 = vmatprep.subr.mxu0 0.0
        %2881 = vmatpush1.msra.mxu0 0.0
        %2882 = vmatprep.subr.mxu0 0.0
        %2883 = vmatpush1.msra.mxu0 0.0
        %2884 = vmatprep.subr.mxu0 0.0
        %2885 = vmatpush1.msra.mxu0 0.0
        %2886 = vmatprep.subr.mxu0 0.0
        %2887 = vmatpush1.msra.mxu0 0.0
        %2888 = vmatprep.subr.mxu0 0.0
        %2889 = vmatpush1.msra.mxu0 0.0
        %2890 = vmatprep.subr.mxu0 0.0
        %2891 = vmatpush1.msra.mxu0 0.0
        %2892 = vmatprep.subr.mxu0 0.0
        %2893 = vmatpush1.msra.mxu0 0.0
        %2894 = vmatprep.subr.mxu0 0.0
        %2895 = vmatpush1.msra.mxu0 0.0
        %2896 = vmatprep.subr.mxu0 0.0
        %2897 = vmatpush1.msra.mxu0 0.0
        %2898 = vmatprep.subr.mxu0 0.0
        %2899 = vmatpush1.msra.mxu0 0.0
        %2900 = vmatprep.subr.mxu0 0.0
        %2901 = vmatpush1.msra.mxu0 0.0
        %2902 = vmatprep.subr.mxu0 0.0
        %2903 = vmatpush1.msra.mxu0 0.0
        %2904 = vmatprep.subr.mxu0 0.0
        %2905 = vmatpush1.msra.mxu0 0.0
        %2906 = vmatprep.subr.mxu0 0.0
        %2907 = vmatpush1.msra.mxu0 0.0
        %2908 = vmatprep.mubr.f32.mxu0 0.0
        %2909 = vmatmul.mubr.f32.gmra.mrb[0].mxu0 %v2842
        %v2910 = vpop.f32.mrb[0].mxu0
        %v2911 = vadd.f32 0.0, %v2910
        %v2912 = vpop.f32.mrb[0].mxu0
        %2913 = vdwg.mxu0
        %v2914 = vadd.f32 %v2823, %v2911
        %v2915 = vld [vmem:[%s21] sm:$0x1]
        %v2916 = vmul.f32 %v2914, %v2915
        %v2917 = vld [vmem:[%s22] sm:$0x1]
        %v2918 = vadd.f32 %v2916, %v2917
        %v2919 = vmax.f32 %v2918, 0.0
        %2920 = vst [vmem:[%s702] sm:$0x1] %v2919
        %s2921 = sand.u32 %s533, 1
        %s2922 = scalar_lea.sflag [#allocation4], %s2921
        %s2923 = sand.u32 %s533, 1
        %s2924 = scalar_lea.vmem [#allocation3], %s2923
        // Predicated region
        $region113: #{dpcnn_forward.1} parent=111 // pred_check
          %p2925 = pneg %p543
        $region114: #{dpcnn_forward.1} parent=111 // pred_check_branch
          %2927 = sbr.rel (%p2925) target = $region116
        $region115: #{dpcnn_forward.1} parent=111 // pred_region
          %s2929 = ssub.s32 16, 16
          %2930 = vsyncadd %s2922, %s2929
          %s2931 = smul.addr %s37, 16
          %s2932 = scalar_lea.hbm %s23, %s2931
          %s2934 = sshll.u32 %s2924, 4
          %s2935 = int_to_ptr.vmem [resolvable:$true] %s2934
          %2937 = dma.vmem_to_hbm [thread:$0]  %s2935, 16, %s2932, %s2922
        $region116: #{dpcnn_forward.1} parent=111 // pred_fallthru
          _
      $region112: #{dpcnn_forward.1} parent=5 // pred_fallthru
        _
      %p2938 = scmp.le.s32.totalorder 2, %s32
      // Predicated region
      $region117: #{dpcnn_forward.1} parent=5 // pred_check
        %p2939 = pneg %p2938
      $region118: #{dpcnn_forward.1} parent=5 // pred_check_branch
        %2941 = sbr.rel (%p2939) target = $region120
      $region119: #{dpcnn_forward.1} parent=5 // pred_region
        %s2942 = ssub.s32 %s32, 2
        // Predicated region
        $region121: #{dpcnn_forward.1} parent=119 // pred_check
          %p2943 = pneg %p549
        $region122: #{dpcnn_forward.1} parent=119 // pred_check_branch
          %2945 = sbr.rel (%p2943) target = $region124
        $region123: #{dpcnn_forward.1} parent=119 // pred_region
          %s2946 = sand.u32 %s534, 1
          %s2947 = scalar_lea.sflag [#allocation4], %s2946
          %s2948 = sand.u32 %s534, 1
          %s2949 = scalar_lea.vmem [#allocation3], %s2948
          %2950 = dma.done %s2947, 16
        $region124: #{dpcnn_forward.1} parent=119 // pred_fallthru
          _
      $region120: #{dpcnn_forward.1} parent=5 // pred_fallthru
        _
    $region6: #{dpcnn_forward.1} parent=1 // loop_footer
      %s36 = sadd.s32 1, %s32
    $region7: #{dpcnn_forward.1} parent=1 // loop_footer_branch
      %31 = sbr.rel target = $region3
    $region8: #{dpcnn_forward.1} parent=1 // loop_exit
      _
    %2951 = vsyncpa [#allocation4], 1
    %s2952 = scalar_lea.sflag [#allocation4], 1
    %2953 = vsyncpa %s2952, 1

</llo_original>
